<compile_context>
chip_gen: v6e
topology: v6e:2x2x1
jax: 0.10.0
libtpu: 0.0.40
codegen_flags: <defaults>
</compile_context>

<pallas_src>
import functools

import jax
import jax.numpy as jnp
from jax import lax
from jax.experimental import pallas as pl
from jax.experimental.pallas import tpu as pltpu

OUT_PAD = 128  # lane-dense padded width of the final Linear(H, 1) output


def _round_up(n, m):
    return (n + m - 1) // m * m


def _pack_in_weight(w, H, in_dim, in_pad, slot, order, G, dtype):
    """PyTorch weight (4H, in_dim), torch gate rows (i,f,g,o) -> (in_pad, G) in
    "x @ W" form; torch gate order[k] lands at columns [k*slot, k*slot + H)."""
    out = jnp.zeros((in_pad, G), jnp.float32)
    for k, gate in enumerate(order):
        blk = w[gate * H:(gate + 1) * H, :]              # (H, in_dim)
        out = out.at[:in_dim, k * slot:k * slot + H].set(blk.T)
    return out.astype(dtype)


def _pack_bias(b, H, slot, order, G):
    """(4H,) bias, torch gate order (i,f,g,o) -> (1, G) matching the W pack."""
    out = jnp.zeros((1, G), jnp.float32)
    for k, gate in enumerate(order):
        out = out.at[0, k * slot:k * slot + H].set(b[gate * H:(gate + 1) * H])
    return out


def make_lstm_kernel(num_layers, seq_len, t_chunk, n_chunks, b_blk,
                     H, S, G, slot, dense):
    """Kernel ref order:
       x (t_chunk, b_blk, I_p),
       w_ih0 (I_p, G), w_hh0 (S, G), b0 (1, G),
       [w_ih_l (S,G), w_hh_l (S,G), b_l (1,G)]  for l = 1..L-1,
       fc_w (S, OUT_PAD), fc_b (1, OUT_PAD),
       out (b_blk, OUT_PAD),
       scratch: gates (t_chunk*b_blk, G) f32,
                [seq (t_chunk*b_blk, S) weight-dtype]  if L > 1,
                state (2*L, b_blk, S) f32  (h, c per layer; persists over chunks)
    """
    unroll = True if t_chunk <= 8 else 4
    has_tail = (n_chunks * t_chunk != seq_len)

    def kernel(*refs):
        x_ref, w_ih0, w_hh0, b0 = refs[0:4]
        pos = 4
        upper = []
        for _ in range(num_layers - 1):
            upper.append(refs[pos:pos + 3])
            pos += 3
        fc_w_ref, fc_b_ref, out_ref = refs[pos], refs[pos + 1], refs[pos + 2]
        pos += 3
        gates_ref = refs[pos]
        pos += 1
        if num_layers > 1:
            seq_ref = refs[pos]
            pos += 1
        else:
            seq_ref = None
        state_ref = refs[pos]

        k = pl.program_id(1)  # time-chunk index (innermost, "arbitrary")

        @pl.when(k == 0)
        def _init_state():
            state_ref[...] = jnp.zeros_like(state_ref)

        if dense:
            # Gates packed densely [i|f|g|o|pad] in ONE 128-lane slab.
            # Lane mask selects the tanh gate; pltpu.roll (XLU) aligns f/g/o
            # with lane 0.  Lanes >= H carry bounded garbage which is
            # annihilated by the zero-padded weight rows in every matmul.
            lane = lax.broadcasted_iota(jnp.int32, (b_blk, G), 1)
            tanh_mask = (lane >= 2 * H) & (lane < 3 * H)   # hoisted out of loops

            def gate_fn(g, c):
                sig = 0.5 * jnp.tanh(0.5 * g) + 0.5        # single-EUP sigmoid
                act = jnp.where(tanh_mask, jnp.tanh(g), sig)
                f_al = pltpu.roll(act, G - H, 1)
                g_al = pltpu.roll(act, G - 2 * H, 1)
                o_al = pltpu.roll(act, G - 3 * H, 1)
                c_new = f_al * c + act * g_al              # act lanes [0,H) = i
                h_new = o_al * jnp.tanh(c_new)
                return h_new, c_new
        else:
            # Per-gate 128-aligned slots, order (i, f, o, g): one sigmoid slab
            # over the first 3 slots, one tanh slab over the last.
            def gate_fn(g, c):
                ifo = 0.5 * jnp.tanh(0.5 * g[:, :3 * slot]) + 0.5
                g_t = jnp.tanh(g[:, 3 * slot:])
                i_g = ifo[:, :slot]
                f_g = ifo[:, slot:2 * slot]
                o_g = ifo[:, 2 * slot:]
                c_new = f_g * c + i_g * g_t
                h_new = o_g * jnp.tanh(c_new)
                return h_new, c_new

        def run_layer(layer_idx, w_hh_ref, write_seq):
            def step(t, carry):
                h, c = carry
                start = pl.multiple_of(t * b_blk, b_blk)
                # Only the recurrent matmul is on the serial critical path.
                g = gates_ref[pl.ds(start, b_blk), :] + jnp.dot(
                    h.astype(w_hh_ref.dtype), w_hh_ref[...],
                    preferred_element_type=jnp.float32)
                h_new, c_new = gate_fn(g, c)
                if has_tail:
                    valid = (k * t_chunk + t) < seq_len
                    h_new = jnp.where(valid, h_new, h)
                    c_new = jnp.where(valid, c_new, c)
                if write_seq:  # skipped on the final layer
                    seq_ref[pl.ds(start, b_blk), :] = h_new.astype(seq_ref.dtype)
                return h_new, c_new

            h0 = state_ref[2 * layer_idx]
            c0 = state_ref[2 * layer_idx + 1]
            h, c = lax.fori_loop(0, t_chunk, step, (h0, c0), unroll=unroll)
            state_ref[2 * layer_idx] = h
            state_ref[2 * layer_idx + 1] = c
            return h

        # ---- layer 0: per-chunk input projection, off the serial path ----
        for t in range(t_chunk):
            gates_ref[t * b_blk:(t + 1) * b_blk, :] = (
                jnp.dot(x_ref[t], w_ih0[...],
                        preferred_element_type=jnp.float32) + b0[...])
        h = run_layer(0, w_hh0, write_seq=(num_layers > 1))

        # ---- layers 1..L-1: one chunk-wide projection, then recurrence ----
        for li, (w_ih_ref, w_hh_ref, b_ref) in enumerate(upper):
            gates_ref[...] = (
                jnp.dot(seq_ref[...], w_ih_ref[...],
                        preferred_element_type=jnp.float32) + b_ref[...])
            is_last = (li == num_layers - 2)
            h = run_layer(li + 1, w_hh_ref, write_seq=not is_last)

        # ---- final Linear(H, 1), only on the last chunk, lane-dense output ----
        @pl.when(k == n_chunks - 1)
        def _fc():
            out_ref[...] = (
                jnp.dot(h, fc_w_ref[...], preferred_element_type=jnp.float32)
                + fc_b_ref[...])

    return kernel


def _pick_block_batch(B):
    """Batch block: multiple of 8.  >= 2 blocks on 2-TensorCore chips (v7x),
    up to 256 in one block on single-TC chips (v5e/v6e) to shorten the serial
    batch-block loop."""
    b8 = _round_up(B, 8)
    try:
        kind = jax.devices()[0].device_kind.lower()
    except Exception:
        kind = ""
    one_tc = ("v5" in kind) or ("v6" in kind)
    cap = 256 if one_tc else 128
    if (not one_tc) and 16 <= b8 <= cap:
        return _round_up((b8 + 1) // 2, 8)    # guarantee >= 2 blocks for 2 TCs
    return min(b8, cap)


def init_params(key, input_size, hidden_size, num_layers):
    """Deterministic PyTorch-style init (uniform(-1/sqrt(H), 1/sqrt(H)))."""
    H = hidden_size
    stdv = 1.0 / jnp.sqrt(jnp.float32(H))
    params = {"layers": [], "fc": None}
    for l in range(num_layers):
        in_dim = input_size if l == 0 else H
        key, k1, k2, k3, k4 = jax.random.split(key, 5)
        w_ih = jax.random.uniform(k1, (4 * H, in_dim), jnp.float32, -stdv, stdv)
        w_hh = jax.random.uniform(k2, (4 * H, H), jnp.float32, -stdv, stdv)
        b_ih = jax.random.uniform(k3, (4 * H,), jnp.float32, -stdv, stdv)
        b_hh = jax.random.uniform(k4, (4 * H,), jnp.float32, -stdv, stdv)
        params["layers"].append((w_ih, w_hh, b_ih, b_hh))
    key, k1, k2 = jax.random.split(key, 3)
    fc_w = jax.random.uniform(k1, (1, H), jnp.float32, -stdv, stdv)
    fc_b = jax.random.uniform(k2, (1,), jnp.float32, -stdv, stdv)
    params["fc"] = (fc_w, fc_b)
    return params


@functools.partial(jax.jit, static_argnames=("hidden_size", "num_layers",
                                             "weight_dtype", "t_chunk"))
def lstm_forward(x, params, *, hidden_size, num_layers,
                 weight_dtype=jnp.float32, t_chunk=None):
    B, T, I = x.shape
    H = hidden_size
    f32 = jnp.float32

    # ---- gate layout ----
    dense = (4 * H <= 128)
    if dense:
        G, S, slot = 128, 128, H
        order = (0, 1, 2, 3)                       # i | f | g | o, packed dense
    else:
        slot = _round_up(H, 128)
        G, S = 4 * slot, slot
        order = (0, 1, 3, 2)                       # i, f, o, g in 128-lane slots

    # ---- tiling ----
    B_blk = _pick_block_batch(B)
    B_pad = _round_up(B, B_blk)
    n_blocks = B_pad // B_blk
    if t_chunk is None:
        t_chunk = min(32, T)
    t_chunk = max(1, min(int(t_chunk), T))
    n_chunks = pl.cdiv(T, t_chunk)
    T_pad = n_chunks * t_chunk
    I_p = _round_up(I, 8)

    # ---- input: (B, T, I) -> time-major padded (T_pad, B_pad, I_p) ----
    x_t = jnp.transpose(x, (1, 0, 2)).astype(weight_dtype)
    x_pad = jnp.zeros((T_pad, B_pad, I_p), weight_dtype).at[:T, :B, :I].set(x_t)

    layers = params["layers"]
    w_ih0, w_hh0, b_ih0, b_hh0 = layers[0]
    inputs = [
        x_pad,
        _pack_in_weight(w_ih0, H, I, I_p, slot, order, G, weight_dtype),
        _pack_in_weight(w_hh0, H, H, S, slot, order, G, weight_dtype),
        _pack_bias(b_ih0 + b_hh0, H, slot, order, G),
    ]
    in_specs = [
        pl.BlockSpec((t_chunk, B_blk, I_p), lambda b, k: (k, b, 0)),
        pl.BlockSpec((I_p, G), lambda b, k: (0, 0)),
        pl.BlockSpec((S, G), lambda b, k: (0, 0)),
        pl.BlockSpec((1, G), lambda b, k: (0, 0)),
    ]
    for l in range(1, num_layers):
        w_ih, w_hh, b_ih, b_hh = layers[l]
        inputs += [
            _pack_in_weight(w_ih, H, H, S, slot, order, G, weight_dtype),
            _pack_in_weight(w_hh, H, H, S, slot, order, G, weight_dtype),
            _pack_bias(b_ih + b_hh, H, slot, order, G),
        ]
        in_specs += [
            pl.BlockSpec((S, G), lambda b, k: (0, 0)),
            pl.BlockSpec((S, G), lambda b, k: (0, 0)),
            pl.BlockSpec((1, G), lambda b, k: (0, 0)),
        ]

    fc_w, fc_b = params["fc"]
    fc_w_p = jnp.zeros((S, OUT_PAD), f32).at[:H, 0].set(fc_w[0])
    fc_b_p = jnp.zeros((1, OUT_PAD), f32).at[0, 0].set(fc_b[0])
    inputs += [fc_w_p, fc_b_p]
    in_specs += [pl.BlockSpec((S, OUT_PAD), lambda b, k: (0, 0)),
                 pl.BlockSpec((1, OUT_PAD), lambda b, k: (0, 0))]

    scratch_shapes = [pltpu.VMEM((t_chunk * B_blk, G), f32)]  # chunk gate pre-acts
    if num_layers > 1:
        # previous layer's chunk outputs, stored in the matmul (weight) dtype
        scratch_shapes.append(pltpu.VMEM((t_chunk * B_blk, S), weight_dtype))
    scratch_shapes.append(pltpu.VMEM((2 * num_layers, B_blk, S), f32))  # h, c

    # Per-generation VMEM limit (v7x 64 MiB, v5e/v6e 128 MiB) minus headroom.
    try:
        cap = int(pltpu.get_tpu_info().vmem_capacity_bytes)
    except Exception:
        cap = 64 << 20
    vmem_limit = int(min(max(cap - (8 << 20), 32 << 20), 112 << 20))

    kernel = make_lstm_kernel(num_layers, T, t_chunk, n_chunks, B_blk,
                              H, S, G, slot, dense)

    out = pl.pallas_call(
        kernel,
        grid=(n_blocks, n_chunks),
        out_shape=jax.ShapeDtypeStruct((B_pad, OUT_PAD), f32),
        in_specs=in_specs,
        out_specs=pl.BlockSpec((B_blk, OUT_PAD), lambda b, k: (b, 0)),
        scratch_shapes=scratch_shapes,
        compiler_params=pltpu.CompilerParams(
            dimension_semantics=("parallel", "arbitrary"),
            vmem_limit_bytes=vmem_limit),
    )(*inputs)

    return out[:B, :1]


def lstm_reference(x, params, hidden_size, num_layers):
    """Pure-JAX reference matching torch.nn.LSTM(batch_first=True) + Linear."""
    B, T, _ = x.shape
    H = hidden_size
    inp = x.astype(jnp.float32)
    for l in range(num_layers):
        w_ih, w_hh, b_ih, b_hh = params["layers"][l]
        h = jnp.zeros((B, H), jnp.float32)
        c = jnp.zeros((B, H), jnp.float32)
        outs = []
        for t in range(T):
            gates = inp[:, t, :] @ w_ih.T + h @ w_hh.T + b_ih + b_hh
            i_g = jax.nn.sigmoid(gates[:, 0 * H:1 * H])
            f_g = jax.nn.sigmoid(gates[:, 1 * H:2 * H])
            g_g = jnp.tanh(gates[:, 2 * H:3 * H])
            o_g = jax.nn.sigmoid(gates[:, 3 * H:4 * H])
            c = f_g * c + i_g * g_g
            h = o_g * jnp.tanh(c)
            outs.append(h)
        inp = jnp.stack(outs, axis=1)
    fc_w, fc_b = params["fc"]
    return inp[:, -1, :] @ fc_w.T + fc_b


if __name__ == "__main__":
    I, H, L = 4, 32, 2
    key = jax.random.PRNGKey(0)
    key, xk, pk, xk2, pk2 = jax.random.split(key, 5)

    # ---- case 1: B=2, T=8 — single chunk, dense (one-slab) gate layout ----
    B, T = 2, 8
    x = jax.random.normal(xk, (B, T, I), jnp.float32)
    params = init_params(pk, I, H, L)
    ref = lstm_reference(x, params, H, L)
    out = jax.block_until_ready(
        lstm_forward(x, params, hidden_size=H, num_layers=L))
    assert out.shape == (B, 1), out.shape
    assert jnp.allclose(out, ref, atol=1e-3, rtol=1e-3), (out, ref)

    # ---- case 2: multi-chunk time axis with masked tail + padded batch ----
    B2, T2 = 3, 20
    x2 = jax.random.normal(xk2, (B2, T2, I), jnp.float32)
    ref2 = lstm_reference(x2, params, H, L)
    out2 = jax.block_until_ready(
        lstm_forward(x2, params, hidden_size=H, num_layers=L, t_chunk=8))
    assert out2.shape == (B2, 1), out2.shape
    assert jnp.allclose(out2, ref2, atol=1e-3, rtol=1e-3), (out2, ref2)

    # ---- case 3: bf16 weight fast path (256-wide MXU on v6e/v7x) ----
    out_bf16 = jax.block_until_ready(
        lstm_forward(x, params, hidden_size=H, num_layers=L,
                     weight_dtype=jnp.bfloat16))
    assert jnp.allclose(out_bf16, ref, atol=0.15, rtol=0.15), (out_bf16, ref)

    # ---- case 4: H=64 exercises the 128-aligned per-gate slot layout ----
    H2 = 64
    params2 = init_params(pk2, I, H2, L)
    ref3 = lstm_reference(x, params2, H2, L)
    out3 = jax.block_until_ready(
        lstm_forward(x, params2, hidden_size=H2, num_layers=L))
    assert jnp.allclose(out3, ref3, atol=1e-3, rtol=1e-3), (out3, ref3)

    print("KERNEL_OK")
</pallas_src>

<mosaic_0001>
module attributes {stable_mosaic.version = 11 : i64} {
  func.func @kernel(%arg0: i32, %arg1: i32, %arg2: memref<8x8x8xf32, #tpu.memory_space<vmem>>, %arg3: memref<8x128xf32, #tpu.memory_space<vmem>>, %arg4: memref<128x128xf32, #tpu.memory_space<vmem>>, %arg5: memref<1x128xf32, #tpu.memory_space<vmem>>, %arg6: memref<128x128xf32, #tpu.memory_space<vmem>>, %arg7: memref<128x128xf32, #tpu.memory_space<vmem>>, %arg8: memref<1x128xf32, #tpu.memory_space<vmem>>, %arg9: memref<128x128xf32, #tpu.memory_space<vmem>>, %arg10: memref<1x128xf32, #tpu.memory_space<vmem>>, %arg11: memref<8x128xf32, #tpu.memory_space<vmem>>, %arg12: memref<64x128xf32, #tpu.memory_space<vmem>>, %arg13: memref<64x128xf32, #tpu.memory_space<vmem>>, %arg14: memref<4x8x128xf32, #tpu.memory_space<vmem>>) attributes {dimension_semantics = [#tpu.dimension_semantics<parallel>, #tpu.dimension_semantics<arbitrary>], iteration_bounds = array<i64: 1, 1>, scalar_prefetch = 0 : i64, scratch_operands = 3 : i64, tpu.core_type = #tpu.core_type<tc>, window_params = [{transform_indices = @transform_0, window_bounds = array<i64: 8, 8, 8>}, {pipeline_mode = #tpu.pipeline_mode<synchronous>, transform_indices = @transform_1, window_bounds = array<i64: 8, 128>}, {pipeline_mode = #tpu.pipeline_mode<synchronous>, transform_indices = @transform_2, window_bounds = array<i64: 128, 128>}, {pipeline_mode = #tpu.pipeline_mode<synchronous>, transform_indices = @transform_3, window_bounds = array<i64: 1, 128>}, {pipeline_mode = #tpu.pipeline_mode<synchronous>, transform_indices = @transform_4, window_bounds = array<i64: 128, 128>}, {pipeline_mode = #tpu.pipeline_mode<synchronous>, transform_indices = @transform_5, window_bounds = array<i64: 128, 128>}, {pipeline_mode = #tpu.pipeline_mode<synchronous>, transform_indices = @transform_6, window_bounds = array<i64: 1, 128>}, {pipeline_mode = #tpu.pipeline_mode<synchronous>, transform_indices = @transform_7, window_bounds = array<i64: 128, 128>}, {pipeline_mode = #tpu.pipeline_mode<synchronous>, transform_indices = @transform_8, window_bounds = array<i64: 1, 128>}, {transform_indices = @transform_9, window_bounds = array<i64: 8, 128>}]} {
    %c0_i32 = arith.constant 0 : i32
    %0 = arith.cmpi eq, %arg1, %c0_i32 : i32
    %1 = arith.extui %0 : i1 to i32
    %c0_i32_0 = arith.constant 0 : i32
    %2 = arith.cmpi ne, %1, %c0_i32_0 : i32
    scf.if %2 {
      %cst_293 = arith.constant 0.000000e+00 : f32
      %503 = vector.broadcast %cst_293 : f32 to vector<4x8x128xf32>
      %c0_294 = arith.constant 0 : index
      %c0_295 = arith.constant 0 : index
      %c0_296 = arith.constant 0 : index
      %504 = vector.load %arg14[%c0_294, %c0_295, %c0_296] : memref<4x8x128xf32, #tpu.memory_space<vmem>>, vector<4x8x128xf32>
      tpu.vector_store %arg14[%c0_294, %c0_295, %c0_296], %503 {strides = array<i32>} : memref<4x8x128xf32, #tpu.memory_space<vmem>>, vector<4x8x128xf32>,
    } else {
    }
    %3 = tpu.iota {dimensions = array<i32: 1>} : vector<8x128xi32>
    %c64_i32 = arith.constant 64 : i32
    %4 = vector.broadcast %c64_i32 : i32 to vector<8x128xi32>
    %5 = arith.cmpi sge, %3, %4 : vector<8x128xi32>
    %c96_i32 = arith.constant 96 : i32
    %6 = vector.broadcast %c96_i32 : i32 to vector<8x128xi32>
    %7 = arith.cmpi slt, %3, %6 : vector<8x128xi32>
    %8 = arith.andi %5, %7 : vector<8x128xi1>
    %c0 = arith.constant 0 : index
    %c0_1 = arith.constant 0 : index
    %c0_2 = arith.constant 0 : index
    %9 = vector.load %arg2[%c0, %c0_1, %c0_2] : memref<8x8x8xf32, #tpu.memory_space<vmem>>, vector<1x8x8xf32>
    %10 = vector.shape_cast %9 : vector<1x8x8xf32> to vector<8x8xf32>
    %c0_3 = arith.constant 0 : index
    %c0_4 = arith.constant 0 : index
    %11 = vector.load %arg3[%c0_3, %c0_4] : memref<8x128xf32, #tpu.memory_space<vmem>>, vector<8x128xf32>
    %cst = arith.constant dense<0.000000e+00> : vector<8x128xf32>
    %12 = tpu.matmul %10, %11, %cst {dimension_numbers = #tpu.dot_dimension_numbers<[1], [0], [0], [1], [0, 0, 1, 1], [], []>} : vector<8x8xf32>, vector<8x128xf32>, vector<8x128xf32> -> vector<8x128xf32>
    %c0_5 = arith.constant 0 : index
    %c0_6 = arith.constant 0 : index
    %13 = vector.load %arg5[%c0_5, %c0_6] : memref<1x128xf32, #tpu.memory_space<vmem>>, vector<1x128xf32>
    %14 = vector.broadcast %13 : vector<1x128xf32> to vector<8x128xf32>
    %15 = arith.addf %12, %14 : vector<8x128xf32>
    %c0_7 = arith.constant 0 : index
    %c0_8 = arith.constant 0 : index
    %16 = vector.load %arg12[%c0_7, %c0_8] : memref<64x128xf32, #tpu.memory_space<vmem>>, vector<8x128xf32>
    tpu.vector_store %arg12[%c0_7, %c0_8], %15 {strides = array<i32>} : memref<64x128xf32, #tpu.memory_space<vmem>>, vector<8x128xf32>,
    %c1 = arith.constant 1 : index
    %c0_9 = arith.constant 0 : index
    %c0_10 = arith.constant 0 : index
    %17 = vector.load %arg2[%c1, %c0_9, %c0_10] : memref<8x8x8xf32, #tpu.memory_space<vmem>>, vector<1x8x8xf32>
    %18 = vector.shape_cast %17 : vector<1x8x8xf32> to vector<8x8xf32>
    %c0_11 = arith.constant 0 : index
    %c0_12 = arith.constant 0 : index
    %19 = vector.load %arg3[%c0_11, %c0_12] : memref<8x128xf32, #tpu.memory_space<vmem>>, vector<8x128xf32>
    %cst_13 = arith.constant dense<0.000000e+00> : vector<8x128xf32>
    %20 = tpu.matmul %18, %19, %cst_13 {dimension_numbers = #tpu.dot_dimension_numbers<[1], [0], [0], [1], [0, 0, 1, 1], [], []>} : vector<8x8xf32>, vector<8x128xf32>, vector<8x128xf32> -> vector<8x128xf32>
    %c0_14 = arith.constant 0 : index
    %c0_15 = arith.constant 0 : index
    %21 = vector.load %arg5[%c0_14, %c0_15] : memref<1x128xf32, #tpu.memory_space<vmem>>, vector<1x128xf32>
    %22 = vector.broadcast %21 : vector<1x128xf32> to vector<8x128xf32>
    %23 = arith.addf %20, %22 : vector<8x128xf32>
    %c8 = arith.constant 8 : index
    %c0_16 = arith.constant 0 : index
    %24 = vector.load %arg12[%c8, %c0_16] : memref<64x128xf32, #tpu.memory_space<vmem>>, vector<8x128xf32>
    tpu.vector_store %arg12[%c8, %c0_16], %23 {strides = array<i32>} : memref<64x128xf32, #tpu.memory_space<vmem>>, vector<8x128xf32>,
    %c2 = arith.constant 2 : index
    %c0_17 = arith.constant 0 : index
    %c0_18 = arith.constant 0 : index
    %25 = vector.load %arg2[%c2, %c0_17, %c0_18] : memref<8x8x8xf32, #tpu.memory_space<vmem>>, vector<1x8x8xf32>
    %26 = vector.shape_cast %25 : vector<1x8x8xf32> to vector<8x8xf32>
    %c0_19 = arith.constant 0 : index
    %c0_20 = arith.constant 0 : index
    %27 = vector.load %arg3[%c0_19, %c0_20] : memref<8x128xf32, #tpu.memory_space<vmem>>, vector<8x128xf32>
    %cst_21 = arith.constant dense<0.000000e+00> : vector<8x128xf32>
    %28 = tpu.matmul %26, %27, %cst_21 {dimension_numbers = #tpu.dot_dimension_numbers<[1], [0], [0], [1], [0, 0, 1, 1], [], []>} : vector<8x8xf32>, vector<8x128xf32>, vector<8x128xf32> -> vector<8x128xf32>
    %c0_22 = arith.constant 0 : index
    %c0_23 = arith.constant 0 : index
    %29 = vector.load %arg5[%c0_22, %c0_23] : memref<1x128xf32, #tpu.memory_space<vmem>>, vector<1x128xf32>
    %30 = vector.broadcast %29 : vector<1x128xf32> to vector<8x128xf32>
    %31 = arith.addf %28, %30 : vector<8x128xf32>
    %c16 = arith.constant 16 : index
    %c0_24 = arith.constant 0 : index
    %32 = vector.load %arg12[%c16, %c0_24] : memref<64x128xf32, #tpu.memory_space<vmem>>, vector<8x128xf32>
    tpu.vector_store %arg12[%c16, %c0_24], %31 {strides = array<i32>} : memref<64x128xf32, #tpu.memory_space<vmem>>, vector<8x128xf32>,
    %c3 = arith.constant 3 : index
    %c0_25 = arith.constant 0 : index
    %c0_26 = arith.constant 0 : index
    %33 = vector.load %arg2[%c3, %c0_25, %c0_26] : memref<8x8x8xf32, #tpu.memory_space<vmem>>, vector<1x8x8xf32>
    %34 = vector.shape_cast %33 : vector<1x8x8xf32> to vector<8x8xf32>
    %c0_27 = arith.constant 0 : index
    %c0_28 = arith.constant 0 : index
    %35 = vector.load %arg3[%c0_27, %c0_28] : memref<8x128xf32, #tpu.memory_space<vmem>>, vector<8x128xf32>
    %cst_29 = arith.constant dense<0.000000e+00> : vector<8x128xf32>
    %36 = tpu.matmul %34, %35, %cst_29 {dimension_numbers = #tpu.dot_dimension_numbers<[1], [0], [0], [1], [0, 0, 1, 1], [], []>} : vector<8x8xf32>, vector<8x128xf32>, vector<8x128xf32> -> vector<8x128xf32>
    %c0_30 = arith.constant 0 : index
    %c0_31 = arith.constant 0 : index
    %37 = vector.load %arg5[%c0_30, %c0_31] : memref<1x128xf32, #tpu.memory_space<vmem>>, vector<1x128xf32>
    %38 = vector.broadcast %37 : vector<1x128xf32> to vector<8x128xf32>
    %39 = arith.addf %36, %38 : vector<8x128xf32>
    %c24 = arith.constant 24 : index
    %c0_32 = arith.constant 0 : index
    %40 = vector.load %arg12[%c24, %c0_32] : memref<64x128xf32, #tpu.memory_space<vmem>>, vector<8x128xf32>
    tpu.vector_store %arg12[%c24, %c0_32], %39 {strides = array<i32>} : memref<64x128xf32, #tpu.memory_space<vmem>>, vector<8x128xf32>,
    %c4 = arith.constant 4 : index
    %c0_33 = arith.constant 0 : index
    %c0_34 = arith.constant 0 : index
    %41 = vector.load %arg2[%c4, %c0_33, %c0_34] : memref<8x8x8xf32, #tpu.memory_space<vmem>>, vector<1x8x8xf32>
    %42 = vector.shape_cast %41 : vector<1x8x8xf32> to vector<8x8xf32>
    %c0_35 = arith.constant 0 : index
    %c0_36 = arith.constant 0 : index
    %43 = vector.load %arg3[%c0_35, %c0_36] : memref<8x128xf32, #tpu.memory_space<vmem>>, vector<8x128xf32>
    %cst_37 = arith.constant dense<0.000000e+00> : vector<8x128xf32>
    %44 = tpu.matmul %42, %43, %cst_37 {dimension_numbers = #tpu.dot_dimension_numbers<[1], [0], [0], [1], [0, 0, 1, 1], [], []>} : vector<8x8xf32>, vector<8x128xf32>, vector<8x128xf32> -> vector<8x128xf32>
    %c0_38 = arith.constant 0 : index
    %c0_39 = arith.constant 0 : index
    %45 = vector.load %arg5[%c0_38, %c0_39] : memref<1x128xf32, #tpu.memory_space<vmem>>, vector<1x128xf32>
    %46 = vector.broadcast %45 : vector<1x128xf32> to vector<8x128xf32>
    %47 = arith.addf %44, %46 : vector<8x128xf32>
    %c32 = arith.constant 32 : index
    %c0_40 = arith.constant 0 : index
    %48 = vector.load %arg12[%c32, %c0_40] : memref<64x128xf32, #tpu.memory_space<vmem>>, vector<8x128xf32>
    tpu.vector_store %arg12[%c32, %c0_40], %47 {strides = array<i32>} : memref<64x128xf32, #tpu.memory_space<vmem>>, vector<8x128xf32>,
    %c5 = arith.constant 5 : index
    %c0_41 = arith.constant 0 : index
    %c0_42 = arith.constant 0 : index
    %49 = vector.load %arg2[%c5, %c0_41, %c0_42] : memref<8x8x8xf32, #tpu.memory_space<vmem>>, vector<1x8x8xf32>
    %50 = vector.shape_cast %49 : vector<1x8x8xf32> to vector<8x8xf32>
    %c0_43 = arith.constant 0 : index
    %c0_44 = arith.constant 0 : index
    %51 = vector.load %arg3[%c0_43, %c0_44] : memref<8x128xf32, #tpu.memory_space<vmem>>, vector<8x128xf32>
    %cst_45 = arith.constant dense<0.000000e+00> : vector<8x128xf32>
    %52 = tpu.matmul %50, %51, %cst_45 {dimension_numbers = #tpu.dot_dimension_numbers<[1], [0], [0], [1], [0, 0, 1, 1], [], []>} : vector<8x8xf32>, vector<8x128xf32>, vector<8x128xf32> -> vector<8x128xf32>
    %c0_46 = arith.constant 0 : index
    %c0_47 = arith.constant 0 : index
    %53 = vector.load %arg5[%c0_46, %c0_47] : memref<1x128xf32, #tpu.memory_space<vmem>>, vector<1x128xf32>
    %54 = vector.broadcast %53 : vector<1x128xf32> to vector<8x128xf32>
    %55 = arith.addf %52, %54 : vector<8x128xf32>
    %c40 = arith.constant 40 : index
    %c0_48 = arith.constant 0 : index
    %56 = vector.load %arg12[%c40, %c0_48] : memref<64x128xf32, #tpu.memory_space<vmem>>, vector<8x128xf32>
    tpu.vector_store %arg12[%c40, %c0_48], %55 {strides = array<i32>} : memref<64x128xf32, #tpu.memory_space<vmem>>, vector<8x128xf32>,
    %c6 = arith.constant 6 : index
    %c0_49 = arith.constant 0 : index
    %c0_50 = arith.constant 0 : index
    %57 = vector.load %arg2[%c6, %c0_49, %c0_50] : memref<8x8x8xf32, #tpu.memory_space<vmem>>, vector<1x8x8xf32>
    %58 = vector.shape_cast %57 : vector<1x8x8xf32> to vector<8x8xf32>
    %c0_51 = arith.constant 0 : index
    %c0_52 = arith.constant 0 : index
    %59 = vector.load %arg3[%c0_51, %c0_52] : memref<8x128xf32, #tpu.memory_space<vmem>>, vector<8x128xf32>
    %cst_53 = arith.constant dense<0.000000e+00> : vector<8x128xf32>
    %60 = tpu.matmul %58, %59, %cst_53 {dimension_numbers = #tpu.dot_dimension_numbers<[1], [0], [0], [1], [0, 0, 1, 1], [], []>} : vector<8x8xf32>, vector<8x128xf32>, vector<8x128xf32> -> vector<8x128xf32>
    %c0_54 = arith.constant 0 : index
    %c0_55 = arith.constant 0 : index
    %61 = vector.load %arg5[%c0_54, %c0_55] : memref<1x128xf32, #tpu.memory_space<vmem>>, vector<1x128xf32>
    %62 = vector.broadcast %61 : vector<1x128xf32> to vector<8x128xf32>
    %63 = arith.addf %60, %62 : vector<8x128xf32>
    %c48 = arith.constant 48 : index
    %c0_56 = arith.constant 0 : index
    %64 = vector.load %arg12[%c48, %c0_56] : memref<64x128xf32, #tpu.memory_space<vmem>>, vector<8x128xf32>
    tpu.vector_store %arg12[%c48, %c0_56], %63 {strides = array<i32>} : memref<64x128xf32, #tpu.memory_space<vmem>>, vector<8x128xf32>,
    %c7 = arith.constant 7 : index
    %c0_57 = arith.constant 0 : index
    %c0_58 = arith.constant 0 : index
    %65 = vector.load %arg2[%c7, %c0_57, %c0_58] : memref<8x8x8xf32, #tpu.memory_space<vmem>>, vector<1x8x8xf32>
    %66 = vector.shape_cast %65 : vector<1x8x8xf32> to vector<8x8xf32>
    %c0_59 = arith.constant 0 : index
    %c0_60 = arith.constant 0 : index
    %67 = vector.load %arg3[%c0_59, %c0_60] : memref<8x128xf32, #tpu.memory_space<vmem>>, vector<8x128xf32>
    %cst_61 = arith.constant dense<0.000000e+00> : vector<8x128xf32>
    %68 = tpu.matmul %66, %67, %cst_61 {dimension_numbers = #tpu.dot_dimension_numbers<[1], [0], [0], [1], [0, 0, 1, 1], [], []>} : vector<8x8xf32>, vector<8x128xf32>, vector<8x128xf32> -> vector<8x128xf32>
    %c0_62 = arith.constant 0 : index
    %c0_63 = arith.constant 0 : index
    %69 = vector.load %arg5[%c0_62, %c0_63] : memref<1x128xf32, #tpu.memory_space<vmem>>, vector<1x128xf32>
    %70 = vector.broadcast %69 : vector<1x128xf32> to vector<8x128xf32>
    %71 = arith.addf %68, %70 : vector<8x128xf32>
    %c56 = arith.constant 56 : index
    %c0_64 = arith.constant 0 : index
    %72 = vector.load %arg12[%c56, %c0_64] : memref<64x128xf32, #tpu.memory_space<vmem>>, vector<8x128xf32>
    tpu.vector_store %arg12[%c56, %c0_64], %71 {strides = array<i32>} : memref<64x128xf32, #tpu.memory_space<vmem>>, vector<8x128xf32>,
    %c0_65 = arith.constant 0 : index
    %c0_66 = arith.constant 0 : index
    %c0_67 = arith.constant 0 : index
    %73 = vector.load %arg14[%c0_65, %c0_66, %c0_67] : memref<4x8x128xf32, #tpu.memory_space<vmem>>, vector<1x8x128xf32>
    %74 = vector.shape_cast %73 : vector<1x8x128xf32> to vector<8x128xf32>
    %c1_68 = arith.constant 1 : index
    %c0_69 = arith.constant 0 : index
    %c0_70 = arith.constant 0 : index
    %75 = vector.load %arg14[%c1_68, %c0_69, %c0_70] : memref<4x8x128xf32, #tpu.memory_space<vmem>>, vector<1x8x128xf32>
    %76 = vector.shape_cast %75 : vector<1x8x128xf32> to vector<8x128xf32>
    %c0_i32_71 = arith.constant 0 : i32
    %c8_i32 = arith.constant 8 : i32
    %77 = arith.muli %c0_i32_71, %c8_i32 : i32
    %78 = tpu.assume_multiple %77, 8 : i32
    %79 = arith.index_cast %78 : i32 to index
    %c0_72 = arith.constant 0 : index
    %80 = vector.load %arg12[%79, %c0_72] : memref<64x128xf32, #tpu.memory_space<vmem>>, vector<8x128xf32>
    %c0_73 = arith.constant 0 : index
    %c0_74 = arith.constant 0 : index
    %81 = vector.load %arg4[%c0_73, %c0_74] : memref<128x128xf32, #tpu.memory_space<vmem>>, vector<128x128xf32>
    %cst_75 = arith.constant dense<0.000000e+00> : vector<8x128xf32>
    %82 = tpu.matmul %74, %81, %cst_75 {dimension_numbers = #tpu.dot_dimension_numbers<[1], [0], [0], [1], [0, 0, 1, 1], [], []>} : vector<8x128xf32>, vector<128x128xf32>, vector<8x128xf32> -> vector<8x128xf32>
    %83 = arith.addf %80, %82 : vector<8x128xf32>
    %cst_76 = arith.constant 5.000000e-01 : f32
    %84 = vector.broadcast %cst_76 : f32 to vector<8x128xf32>
    %85 = arith.mulf %84, %83 : vector<8x128xf32>
    %86 = math.tanh %85 : vector<8x128xf32>
    %cst_77 = arith.constant 5.000000e-01 : f32
    %87 = vector.broadcast %cst_77 : f32 to vector<8x128xf32>
    %88 = arith.mulf %87, %86 : vector<8x128xf32>
    %cst_78 = arith.constant 5.000000e-01 : f32
    %89 = vector.broadcast %cst_78 : f32 to vector<8x128xf32>
    %90 = arith.addf %88, %89 : vector<8x128xf32>
    %91 = math.tanh %83 : vector<8x128xf32>
    %92 = arith.select %8, %91, %90 : vector<8x128xi1>, vector<8x128xf32>
    %c96_i32_79 = arith.constant 96 : i32
    %93 = tpu.dynamic_rotate %92 by %c96_i32_79 dim 1 : vector<8x128xf32>, i32 -> vector<8x128xf32>
    %c64_i32_80 = arith.constant 64 : i32
    %94 = tpu.dynamic_rotate %92 by %c64_i32_80 dim 1 : vector<8x128xf32>, i32 -> vector<8x128xf32>
    %c32_i32 = arith.constant 32 : i32
    %95 = tpu.dynamic_rotate %92 by %c32_i32 dim 1 : vector<8x128xf32>, i32 -> vector<8x128xf32>
    %96 = arith.mulf %93, %76 : vector<8x128xf32>
    %97 = arith.mulf %92, %94 : vector<8x128xf32>
    %98 = arith.addf %96, %97 : vector<8x128xf32>
    %99 = math.tanh %98 : vector<8x128xf32>
    %100 = arith.mulf %95, %99 : vector<8x128xf32>
    %101 = arith.index_cast %78 : i32 to index
    %c0_81 = arith.constant 0 : index
    %102 = vector.load %arg13[%101, %c0_81] : memref<64x128xf32, #tpu.memory_space<vmem>>, vector<8x128xf32>
    tpu.vector_store %arg13[%101, %c0_81], %100 {strides = array<i32>} : memref<64x128xf32, #tpu.memory_space<vmem>>, vector<8x128xf32>,
    %c1_i32 = arith.constant 1 : i32
    %c8_i32_82 = arith.constant 8 : i32
    %103 = arith.muli %c1_i32, %c8_i32_82 : i32
    %104 = tpu.assume_multiple %103, 8 : i32
    %105 = arith.index_cast %104 : i32 to index
    %c0_83 = arith.constant 0 : index
    %106 = vector.load %arg12[%105, %c0_83] : memref<64x128xf32, #tpu.memory_space<vmem>>, vector<8x128xf32>
    %c0_84 = arith.constant 0 : index
    %c0_85 = arith.constant 0 : index
    %107 = vector.load %arg4[%c0_84, %c0_85] : memref<128x128xf32, #tpu.memory_space<vmem>>, vector<128x128xf32>
    %cst_86 = arith.constant dense<0.000000e+00> : vector<8x128xf32>
    %108 = tpu.matmul %100, %107, %cst_86 {dimension_numbers = #tpu.dot_dimension_numbers<[1], [0], [0], [1], [0, 0, 1, 1], [], []>} : vector<8x128xf32>, vector<128x128xf32>, vector<8x128xf32> -> vector<8x128xf32>
    %109 = arith.addf %106, %108 : vector<8x128xf32>
    %cst_87 = arith.constant 5.000000e-01 : f32
    %110 = vector.broadcast %cst_87 : f32 to vector<8x128xf32>
    %111 = arith.mulf %110, %109 : vector<8x128xf32>
    %112 = math.tanh %111 : vector<8x128xf32>
    %cst_88 = arith.constant 5.000000e-01 : f32
    %113 = vector.broadcast %cst_88 : f32 to vector<8x128xf32>
    %114 = arith.mulf %113, %112 : vector<8x128xf32>
    %cst_89 = arith.constant 5.000000e-01 : f32
    %115 = vector.broadcast %cst_89 : f32 to vector<8x128xf32>
    %116 = arith.addf %114, %115 : vector<8x128xf32>
    %117 = math.tanh %109 : vector<8x128xf32>
    %118 = arith.select %8, %117, %116 : vector<8x128xi1>, vector<8x128xf32>
    %c96_i32_90 = arith.constant 96 : i32
    %119 = tpu.dynamic_rotate %118 by %c96_i32_90 dim 1 : vector<8x128xf32>, i32 -> vector<8x128xf32>
    %c64_i32_91 = arith.constant 64 : i32
    %120 = tpu.dynamic_rotate %118 by %c64_i32_91 dim 1 : vector<8x128xf32>, i32 -> vector<8x128xf32>
    %c32_i32_92 = arith.constant 32 : i32
    %121 = tpu.dynamic_rotate %118 by %c32_i32_92 dim 1 : vector<8x128xf32>, i32 -> vector<8x128xf32>
    %122 = arith.mulf %119, %98 : vector<8x128xf32>
    %123 = arith.mulf %118, %120 : vector<8x128xf32>
    %124 = arith.addf %122, %123 : vector<8x128xf32>
    %125 = math.tanh %124 : vector<8x128xf32>
    %126 = arith.mulf %121, %125 : vector<8x128xf32>
    %127 = arith.index_cast %104 : i32 to index
    %c0_93 = arith.constant 0 : index
    %128 = vector.load %arg13[%127, %c0_93] : memref<64x128xf32, #tpu.memory_space<vmem>>, vector<8x128xf32>
    tpu.vector_store %arg13[%127, %c0_93], %126 {strides = array<i32>} : memref<64x128xf32, #tpu.memory_space<vmem>>, vector<8x128xf32>,
    %c2_i32 = arith.constant 2 : i32
    %c8_i32_94 = arith.constant 8 : i32
    %129 = arith.muli %c2_i32, %c8_i32_94 : i32
    %130 = tpu.assume_multiple %129, 8 : i32
    %131 = arith.index_cast %130 : i32 to index
    %c0_95 = arith.constant 0 : index
    %132 = vector.load %arg12[%131, %c0_95] : memref<64x128xf32, #tpu.memory_space<vmem>>, vector<8x128xf32>
    %c0_96 = arith.constant 0 : index
    %c0_97 = arith.constant 0 : index
    %133 = vector.load %arg4[%c0_96, %c0_97] : memref<128x128xf32, #tpu.memory_space<vmem>>, vector<128x128xf32>
    %cst_98 = arith.constant dense<0.000000e+00> : vector<8x128xf32>
    %134 = tpu.matmul %126, %133, %cst_98 {dimension_numbers = #tpu.dot_dimension_numbers<[1], [0], [0], [1], [0, 0, 1, 1], [], []>} : vector<8x128xf32>, vector<128x128xf32>, vector<8x128xf32> -> vector<8x128xf32>
    %135 = arith.addf %132, %134 : vector<8x128xf32>
    %cst_99 = arith.constant 5.000000e-01 : f32
    %136 = vector.broadcast %cst_99 : f32 to vector<8x128xf32>
    %137 = arith.mulf %136, %135 : vector<8x128xf32>
    %138 = math.tanh %137 : vector<8x128xf32>
    %cst_100 = arith.constant 5.000000e-01 : f32
    %139 = vector.broadcast %cst_100 : f32 to vector<8x128xf32>
    %140 = arith.mulf %139, %138 : vector<8x128xf32>
    %cst_101 = arith.constant 5.000000e-01 : f32
    %141 = vector.broadcast %cst_101 : f32 to vector<8x128xf32>
    %142 = arith.addf %140, %141 : vector<8x128xf32>
    %143 = math.tanh %135 : vector<8x128xf32>
    %144 = arith.select %8, %143, %142 : vector<8x128xi1>, vector<8x128xf32>
    %c96_i32_102 = arith.constant 96 : i32
    %145 = tpu.dynamic_rotate %144 by %c96_i32_102 dim 1 : vector<8x128xf32>, i32 -> vector<8x128xf32>
    %c64_i32_103 = arith.constant 64 : i32
    %146 = tpu.dynamic_rotate %144 by %c64_i32_103 dim 1 : vector<8x128xf32>, i32 -> vector<8x128xf32>
    %c32_i32_104 = arith.constant 32 : i32
    %147 = tpu.dynamic_rotate %144 by %c32_i32_104 dim 1 : vector<8x128xf32>, i32 -> vector<8x128xf32>
    %148 = arith.mulf %145, %124 : vector<8x128xf32>
    %149 = arith.mulf %144, %146 : vector<8x128xf32>
    %150 = arith.addf %148, %149 : vector<8x128xf32>
    %151 = math.tanh %150 : vector<8x128xf32>
    %152 = arith.mulf %147, %151 : vector<8x128xf32>
    %153 = arith.index_cast %130 : i32 to index
    %c0_105 = arith.constant 0 : index
    %154 = vector.load %arg13[%153, %c0_105] : memref<64x128xf32, #tpu.memory_space<vmem>>, vector<8x128xf32>
    tpu.vector_store %arg13[%153, %c0_105], %152 {strides = array<i32>} : memref<64x128xf32, #tpu.memory_space<vmem>>, vector<8x128xf32>,
    %c3_i32 = arith.constant 3 : i32
    %c8_i32_106 = arith.constant 8 : i32
    %155 = arith.muli %c3_i32, %c8_i32_106 : i32
    %156 = tpu.assume_multiple %155, 8 : i32
    %157 = arith.index_cast %156 : i32 to index
    %c0_107 = arith.constant 0 : index
    %158 = vector.load %arg12[%157, %c0_107] : memref<64x128xf32, #tpu.memory_space<vmem>>, vector<8x128xf32>
    %c0_108 = arith.constant 0 : index
    %c0_109 = arith.constant 0 : index
    %159 = vector.load %arg4[%c0_108, %c0_109] : memref<128x128xf32, #tpu.memory_space<vmem>>, vector<128x128xf32>
    %cst_110 = arith.constant dense<0.000000e+00> : vector<8x128xf32>
    %160 = tpu.matmul %152, %159, %cst_110 {dimension_numbers = #tpu.dot_dimension_numbers<[1], [0], [0], [1], [0, 0, 1, 1], [], []>} : vector<8x128xf32>, vector<128x128xf32>, vector<8x128xf32> -> vector<8x128xf32>
    %161 = arith.addf %158, %160 : vector<8x128xf32>
    %cst_111 = arith.constant 5.000000e-01 : f32
    %162 = vector.broadcast %cst_111 : f32 to vector<8x128xf32>
    %163 = arith.mulf %162, %161 : vector<8x128xf32>
    %164 = math.tanh %163 : vector<8x128xf32>
    %cst_112 = arith.constant 5.000000e-01 : f32
    %165 = vector.broadcast %cst_112 : f32 to vector<8x128xf32>
    %166 = arith.mulf %165, %164 : vector<8x128xf32>
    %cst_113 = arith.constant 5.000000e-01 : f32
    %167 = vector.broadcast %cst_113 : f32 to vector<8x128xf32>
    %168 = arith.addf %166, %167 : vector<8x128xf32>
    %169 = math.tanh %161 : vector<8x128xf32>
    %170 = arith.select %8, %169, %168 : vector<8x128xi1>, vector<8x128xf32>
    %c96_i32_114 = arith.constant 96 : i32
    %171 = tpu.dynamic_rotate %170 by %c96_i32_114 dim 1 : vector<8x128xf32>, i32 -> vector<8x128xf32>
    %c64_i32_115 = arith.constant 64 : i32
    %172 = tpu.dynamic_rotate %170 by %c64_i32_115 dim 1 : vector<8x128xf32>, i32 -> vector<8x128xf32>
    %c32_i32_116 = arith.constant 32 : i32
    %173 = tpu.dynamic_rotate %170 by %c32_i32_116 dim 1 : vector<8x128xf32>, i32 -> vector<8x128xf32>
    %174 = arith.mulf %171, %150 : vector<8x128xf32>
    %175 = arith.mulf %170, %172 : vector<8x128xf32>
    %176 = arith.addf %174, %175 : vector<8x128xf32>
    %177 = math.tanh %176 : vector<8x128xf32>
    %178 = arith.mulf %173, %177 : vector<8x128xf32>
    %179 = arith.index_cast %156 : i32 to index
    %c0_117 = arith.constant 0 : index
    %180 = vector.load %arg13[%179, %c0_117] : memref<64x128xf32, #tpu.memory_space<vmem>>, vector<8x128xf32>
    tpu.vector_store %arg13[%179, %c0_117], %178 {strides = array<i32>} : memref<64x128xf32, #tpu.memory_space<vmem>>, vector<8x128xf32>,
    %c4_i32 = arith.constant 4 : i32
    %c8_i32_118 = arith.constant 8 : i32
    %181 = arith.muli %c4_i32, %c8_i32_118 : i32
    %182 = tpu.assume_multiple %181, 8 : i32
    %183 = arith.index_cast %182 : i32 to index
    %c0_119 = arith.constant 0 : index
    %184 = vector.load %arg12[%183, %c0_119] : memref<64x128xf32, #tpu.memory_space<vmem>>, vector<8x128xf32>
    %c0_120 = arith.constant 0 : index
    %c0_121 = arith.constant 0 : index
    %185 = vector.load %arg4[%c0_120, %c0_121] : memref<128x128xf32, #tpu.memory_space<vmem>>, vector<128x128xf32>
    %cst_122 = arith.constant dense<0.000000e+00> : vector<8x128xf32>
    %186 = tpu.matmul %178, %185, %cst_122 {dimension_numbers = #tpu.dot_dimension_numbers<[1], [0], [0], [1], [0, 0, 1, 1], [], []>} : vector<8x128xf32>, vector<128x128xf32>, vector<8x128xf32> -> vector<8x128xf32>
    %187 = arith.addf %184, %186 : vector<8x128xf32>
    %cst_123 = arith.constant 5.000000e-01 : f32
    %188 = vector.broadcast %cst_123 : f32 to vector<8x128xf32>
    %189 = arith.mulf %188, %187 : vector<8x128xf32>
    %190 = math.tanh %189 : vector<8x128xf32>
    %cst_124 = arith.constant 5.000000e-01 : f32
    %191 = vector.broadcast %cst_124 : f32 to vector<8x128xf32>
    %192 = arith.mulf %191, %190 : vector<8x128xf32>
    %cst_125 = arith.constant 5.000000e-01 : f32
    %193 = vector.broadcast %cst_125 : f32 to vector<8x128xf32>
    %194 = arith.addf %192, %193 : vector<8x128xf32>
    %195 = math.tanh %187 : vector<8x128xf32>
    %196 = arith.select %8, %195, %194 : vector<8x128xi1>, vector<8x128xf32>
    %c96_i32_126 = arith.constant 96 : i32
    %197 = tpu.dynamic_rotate %196 by %c96_i32_126 dim 1 : vector<8x128xf32>, i32 -> vector<8x128xf32>
    %c64_i32_127 = arith.constant 64 : i32
    %198 = tpu.dynamic_rotate %196 by %c64_i32_127 dim 1 : vector<8x128xf32>, i32 -> vector<8x128xf32>
    %c32_i32_128 = arith.constant 32 : i32
    %199 = tpu.dynamic_rotate %196 by %c32_i32_128 dim 1 : vector<8x128xf32>, i32 -> vector<8x128xf32>
    %200 = arith.mulf %197, %176 : vector<8x128xf32>
    %201 = arith.mulf %196, %198 : vector<8x128xf32>
    %202 = arith.addf %200, %201 : vector<8x128xf32>
    %203 = math.tanh %202 : vector<8x128xf32>
    %204 = arith.mulf %199, %203 : vector<8x128xf32>
    %205 = arith.index_cast %182 : i32 to index
    %c0_129 = arith.constant 0 : index
    %206 = vector.load %arg13[%205, %c0_129] : memref<64x128xf32, #tpu.memory_space<vmem>>, vector<8x128xf32>
    tpu.vector_store %arg13[%205, %c0_129], %204 {strides = array<i32>} : memref<64x128xf32, #tpu.memory_space<vmem>>, vector<8x128xf32>,
    %c5_i32 = arith.constant 5 : i32
    %c8_i32_130 = arith.constant 8 : i32
    %207 = arith.muli %c5_i32, %c8_i32_130 : i32
    %208 = tpu.assume_multiple %207, 8 : i32
    %209 = arith.index_cast %208 : i32 to index
    %c0_131 = arith.constant 0 : index
    %210 = vector.load %arg12[%209, %c0_131] : memref<64x128xf32, #tpu.memory_space<vmem>>, vector<8x128xf32>
    %c0_132 = arith.constant 0 : index
    %c0_133 = arith.constant 0 : index
    %211 = vector.load %arg4[%c0_132, %c0_133] : memref<128x128xf32, #tpu.memory_space<vmem>>, vector<128x128xf32>
    %cst_134 = arith.constant dense<0.000000e+00> : vector<8x128xf32>
    %212 = tpu.matmul %204, %211, %cst_134 {dimension_numbers = #tpu.dot_dimension_numbers<[1], [0], [0], [1], [0, 0, 1, 1], [], []>} : vector<8x128xf32>, vector<128x128xf32>, vector<8x128xf32> -> vector<8x128xf32>
    %213 = arith.addf %210, %212 : vector<8x128xf32>
    %cst_135 = arith.constant 5.000000e-01 : f32
    %214 = vector.broadcast %cst_135 : f32 to vector<8x128xf32>
    %215 = arith.mulf %214, %213 : vector<8x128xf32>
    %216 = math.tanh %215 : vector<8x128xf32>
    %cst_136 = arith.constant 5.000000e-01 : f32
    %217 = vector.broadcast %cst_136 : f32 to vector<8x128xf32>
    %218 = arith.mulf %217, %216 : vector<8x128xf32>
    %cst_137 = arith.constant 5.000000e-01 : f32
    %219 = vector.broadcast %cst_137 : f32 to vector<8x128xf32>
    %220 = arith.addf %218, %219 : vector<8x128xf32>
    %221 = math.tanh %213 : vector<8x128xf32>
    %222 = arith.select %8, %221, %220 : vector<8x128xi1>, vector<8x128xf32>
    %c96_i32_138 = arith.constant 96 : i32
    %223 = tpu.dynamic_rotate %222 by %c96_i32_138 dim 1 : vector<8x128xf32>, i32 -> vector<8x128xf32>
    %c64_i32_139 = arith.constant 64 : i32
    %224 = tpu.dynamic_rotate %222 by %c64_i32_139 dim 1 : vector<8x128xf32>, i32 -> vector<8x128xf32>
    %c32_i32_140 = arith.constant 32 : i32
    %225 = tpu.dynamic_rotate %222 by %c32_i32_140 dim 1 : vector<8x128xf32>, i32 -> vector<8x128xf32>
    %226 = arith.mulf %223, %202 : vector<8x128xf32>
    %227 = arith.mulf %222, %224 : vector<8x128xf32>
    %228 = arith.addf %226, %227 : vector<8x128xf32>
    %229 = math.tanh %228 : vector<8x128xf32>
    %230 = arith.mulf %225, %229 : vector<8x128xf32>
    %231 = arith.index_cast %208 : i32 to index
    %c0_141 = arith.constant 0 : index
    %232 = vector.load %arg13[%231, %c0_141] : memref<64x128xf32, #tpu.memory_space<vmem>>, vector<8x128xf32>
    tpu.vector_store %arg13[%231, %c0_141], %230 {strides = array<i32>} : memref<64x128xf32, #tpu.memory_space<vmem>>, vector<8x128xf32>,
    %c6_i32 = arith.constant 6 : i32
    %c8_i32_142 = arith.constant 8 : i32
    %233 = arith.muli %c6_i32, %c8_i32_142 : i32
    %234 = tpu.assume_multiple %233, 8 : i32
    %235 = arith.index_cast %234 : i32 to index
    %c0_143 = arith.constant 0 : index
    %236 = vector.load %arg12[%235, %c0_143] : memref<64x128xf32, #tpu.memory_space<vmem>>, vector<8x128xf32>
    %c0_144 = arith.constant 0 : index
    %c0_145 = arith.constant 0 : index
    %237 = vector.load %arg4[%c0_144, %c0_145] : memref<128x128xf32, #tpu.memory_space<vmem>>, vector<128x128xf32>
    %cst_146 = arith.constant dense<0.000000e+00> : vector<8x128xf32>
    %238 = tpu.matmul %230, %237, %cst_146 {dimension_numbers = #tpu.dot_dimension_numbers<[1], [0], [0], [1], [0, 0, 1, 1], [], []>} : vector<8x128xf32>, vector<128x128xf32>, vector<8x128xf32> -> vector<8x128xf32>
    %239 = arith.addf %236, %238 : vector<8x128xf32>
    %cst_147 = arith.constant 5.000000e-01 : f32
    %240 = vector.broadcast %cst_147 : f32 to vector<8x128xf32>
    %241 = arith.mulf %240, %239 : vector<8x128xf32>
    %242 = math.tanh %241 : vector<8x128xf32>
    %cst_148 = arith.constant 5.000000e-01 : f32
    %243 = vector.broadcast %cst_148 : f32 to vector<8x128xf32>
    %244 = arith.mulf %243, %242 : vector<8x128xf32>
    %cst_149 = arith.constant 5.000000e-01 : f32
    %245 = vector.broadcast %cst_149 : f32 to vector<8x128xf32>
    %246 = arith.addf %244, %245 : vector<8x128xf32>
    %247 = math.tanh %239 : vector<8x128xf32>
    %248 = arith.select %8, %247, %246 : vector<8x128xi1>, vector<8x128xf32>
    %c96_i32_150 = arith.constant 96 : i32
    %249 = tpu.dynamic_rotate %248 by %c96_i32_150 dim 1 : vector<8x128xf32>, i32 -> vector<8x128xf32>
    %c64_i32_151 = arith.constant 64 : i32
    %250 = tpu.dynamic_rotate %248 by %c64_i32_151 dim 1 : vector<8x128xf32>, i32 -> vector<8x128xf32>
    %c32_i32_152 = arith.constant 32 : i32
    %251 = tpu.dynamic_rotate %248 by %c32_i32_152 dim 1 : vector<8x128xf32>, i32 -> vector<8x128xf32>
    %252 = arith.mulf %249, %228 : vector<8x128xf32>
    %253 = arith.mulf %248, %250 : vector<8x128xf32>
    %254 = arith.addf %252, %253 : vector<8x128xf32>
    %255 = math.tanh %254 : vector<8x128xf32>
    %256 = arith.mulf %251, %255 : vector<8x128xf32>
    %257 = arith.index_cast %234 : i32 to index
    %c0_153 = arith.constant 0 : index
    %258 = vector.load %arg13[%257, %c0_153] : memref<64x128xf32, #tpu.memory_space<vmem>>, vector<8x128xf32>
    tpu.vector_store %arg13[%257, %c0_153], %256 {strides = array<i32>} : memref<64x128xf32, #tpu.memory_space<vmem>>, vector<8x128xf32>,
    %c7_i32 = arith.constant 7 : i32
    %c8_i32_154 = arith.constant 8 : i32
    %259 = arith.muli %c7_i32, %c8_i32_154 : i32
    %260 = tpu.assume_multiple %259, 8 : i32
    %261 = arith.index_cast %260 : i32 to index
    %c0_155 = arith.constant 0 : index
    %262 = vector.load %arg12[%261, %c0_155] : memref<64x128xf32, #tpu.memory_space<vmem>>, vector<8x128xf32>
    %c0_156 = arith.constant 0 : index
    %c0_157 = arith.constant 0 : index
    %263 = vector.load %arg4[%c0_156, %c0_157] : memref<128x128xf32, #tpu.memory_space<vmem>>, vector<128x128xf32>
    %cst_158 = arith.constant dense<0.000000e+00> : vector<8x128xf32>
    %264 = tpu.matmul %256, %263, %cst_158 {dimension_numbers = #tpu.dot_dimension_numbers<[1], [0], [0], [1], [0, 0, 1, 1], [], []>} : vector<8x128xf32>, vector<128x128xf32>, vector<8x128xf32> -> vector<8x128xf32>
    %265 = arith.addf %262, %264 : vector<8x128xf32>
    %cst_159 = arith.constant 5.000000e-01 : f32
    %266 = vector.broadcast %cst_159 : f32 to vector<8x128xf32>
    %267 = arith.mulf %266, %265 : vector<8x128xf32>
    %268 = math.tanh %267 : vector<8x128xf32>
    %cst_160 = arith.constant 5.000000e-01 : f32
    %269 = vector.broadcast %cst_160 : f32 to vector<8x128xf32>
    %270 = arith.mulf %269, %268 : vector<8x128xf32>
    %cst_161 = arith.constant 5.000000e-01 : f32
    %271 = vector.broadcast %cst_161 : f32 to vector<8x128xf32>
    %272 = arith.addf %270, %271 : vector<8x128xf32>
    %273 = math.tanh %265 : vector<8x128xf32>
    %274 = arith.select %8, %273, %272 : vector<8x128xi1>, vector<8x128xf32>
    %c96_i32_162 = arith.constant 96 : i32
    %275 = tpu.dynamic_rotate %274 by %c96_i32_162 dim 1 : vector<8x128xf32>, i32 -> vector<8x128xf32>
    %c64_i32_163 = arith.constant 64 : i32
    %276 = tpu.dynamic_rotate %274 by %c64_i32_163 dim 1 : vector<8x128xf32>, i32 -> vector<8x128xf32>
    %c32_i32_164 = arith.constant 32 : i32
    %277 = tpu.dynamic_rotate %274 by %c32_i32_164 dim 1 : vector<8x128xf32>, i32 -> vector<8x128xf32>
    %278 = arith.mulf %275, %254 : vector<8x128xf32>
    %279 = arith.mulf %274, %276 : vector<8x128xf32>
    %280 = arith.addf %278, %279 : vector<8x128xf32>
    %281 = math.tanh %280 : vector<8x128xf32>
    %282 = arith.mulf %277, %281 : vector<8x128xf32>
    %283 = arith.index_cast %260 : i32 to index
    %c0_165 = arith.constant 0 : index
    %284 = vector.load %arg13[%283, %c0_165] : memref<64x128xf32, #tpu.memory_space<vmem>>, vector<8x128xf32>
    tpu.vector_store %arg13[%283, %c0_165], %282 {strides = array<i32>} : memref<64x128xf32, #tpu.memory_space<vmem>>, vector<8x128xf32>,
    %c8_i32_166 = arith.constant 8 : i32
    %c0_167 = arith.constant 0 : index
    %c0_168 = arith.constant 0 : index
    %c0_169 = arith.constant 0 : index
    %285 = vector.load %arg14[%c0_167, %c0_168, %c0_169] : memref<4x8x128xf32, #tpu.memory_space<vmem>>, vector<1x8x128xf32>
    %286 = vector.shape_cast %285 : vector<1x8x128xf32> to vector<8x128xf32>
    %287 = vector.shape_cast %282 : vector<8x128xf32> to vector<1x8x128xf32>
    tpu.vector_store %arg14[%c0_167, %c0_168, %c0_169], %287 {strides = array<i32>} : memref<4x8x128xf32, #tpu.memory_space<vmem>>, vector<1x8x128xf32>,
    %c1_170 = arith.constant 1 : index
    %c0_171 = arith.constant 0 : index
    %c0_172 = arith.constant 0 : index
    %288 = vector.load %arg14[%c1_170, %c0_171, %c0_172] : memref<4x8x128xf32, #tpu.memory_space<vmem>>, vector<1x8x128xf32>
    %289 = vector.shape_cast %288 : vector<1x8x128xf32> to vector<8x128xf32>
    %290 = vector.shape_cast %280 : vector<8x128xf32> to vector<1x8x128xf32>
    tpu.vector_store %arg14[%c1_170, %c0_171, %c0_172], %290 {strides = array<i32>} : memref<4x8x128xf32, #tpu.memory_space<vmem>>, vector<1x8x128xf32>,
    %c0_173 = arith.constant 0 : index
    %c0_174 = arith.constant 0 : index
    %291 = vector.load %arg13[%c0_173, %c0_174] : memref<64x128xf32, #tpu.memory_space<vmem>>, vector<64x128xf32>
    %c0_175 = arith.constant 0 : index
    %c0_176 = arith.constant 0 : index
    %292 = vector.load %arg6[%c0_175, %c0_176] : memref<128x128xf32, #tpu.memory_space<vmem>>, vector<128x128xf32>
    %cst_177 = arith.constant dense<0.000000e+00> : vector<64x128xf32>
    %293 = tpu.matmul %291, %292, %cst_177 {dimension_numbers = #tpu.dot_dimension_numbers<[1], [0], [0], [1], [0, 0, 1, 1], [], []>} : vector<64x128xf32>, vector<128x128xf32>, vector<64x128xf32> -> vector<64x128xf32>
    %c0_178 = arith.constant 0 : index
    %c0_179 = arith.constant 0 : index
    %294 = vector.load %arg8[%c0_178, %c0_179] : memref<1x128xf32, #tpu.memory_space<vmem>>, vector<1x128xf32>
    %295 = vector.broadcast %294 : vector<1x128xf32> to vector<64x128xf32>
    %296 = arith.addf %293, %295 : vector<64x128xf32>
    %c0_180 = arith.constant 0 : index
    %c0_181 = arith.constant 0 : index
    %297 = vector.load %arg12[%c0_180, %c0_181] : memref<64x128xf32, #tpu.memory_space<vmem>>, vector<64x128xf32>
    tpu.vector_store %arg12[%c0_180, %c0_181], %296 {strides = array<i32>} : memref<64x128xf32, #tpu.memory_space<vmem>>, vector<64x128xf32>,
    %c2_182 = arith.constant 2 : index
    %c0_183 = arith.constant 0 : index
    %c0_184 = arith.constant 0 : index
    %298 = vector.load %arg14[%c2_182, %c0_183, %c0_184] : memref<4x8x128xf32, #tpu.memory_space<vmem>>, vector<1x8x128xf32>
    %299 = vector.shape_cast %298 : vector<1x8x128xf32> to vector<8x128xf32>
    %c3_185 = arith.constant 3 : index
    %c0_186 = arith.constant 0 : index
    %c0_187 = arith.constant 0 : index
    %300 = vector.load %arg14[%c3_185, %c0_186, %c0_187] : memref<4x8x128xf32, #tpu.memory_space<vmem>>, vector<1x8x128xf32>
    %301 = vector.shape_cast %300 : vector<1x8x128xf32> to vector<8x128xf32>
    %c0_i32_188 = arith.constant 0 : i32
    %c8_i32_189 = arith.constant 8 : i32
    %302 = arith.muli %c0_i32_188, %c8_i32_189 : i32
    %303 = tpu.assume_multiple %302, 8 : i32
    %304 = arith.index_cast %303 : i32 to index
    %c0_190 = arith.constant 0 : index
    %305 = vector.load %arg12[%304, %c0_190] : memref<64x128xf32, #tpu.memory_space<vmem>>, vector<8x128xf32>
    %c0_191 = arith.constant 0 : index
    %c0_192 = arith.constant 0 : index
    %306 = vector.load %arg7[%c0_191, %c0_192] : memref<128x128xf32, #tpu.memory_space<vmem>>, vector<128x128xf32>
    %cst_193 = arith.constant dense<0.000000e+00> : vector<8x128xf32>
    %307 = tpu.matmul %299, %306, %cst_193 {dimension_numbers = #tpu.dot_dimension_numbers<[1], [0], [0], [1], [0, 0, 1, 1], [], []>} : vector<8x128xf32>, vector<128x128xf32>, vector<8x128xf32> -> vector<8x128xf32>
    %308 = arith.addf %305, %307 : vector<8x128xf32>
    %cst_194 = arith.constant 5.000000e-01 : f32
    %309 = vector.broadcast %cst_194 : f32 to vector<8x128xf32>
    %310 = arith.mulf %309, %308 : vector<8x128xf32>
    %311 = math.tanh %310 : vector<8x128xf32>
    %cst_195 = arith.constant 5.000000e-01 : f32
    %312 = vector.broadcast %cst_195 : f32 to vector<8x128xf32>
    %313 = arith.mulf %312, %311 : vector<8x128xf32>
    %cst_196 = arith.constant 5.000000e-01 : f32
    %314 = vector.broadcast %cst_196 : f32 to vector<8x128xf32>
    %315 = arith.addf %313, %314 : vector<8x128xf32>
    %316 = math.tanh %308 : vector<8x128xf32>
    %317 = arith.select %8, %316, %315 : vector<8x128xi1>, vector<8x128xf32>
    %c96_i32_197 = arith.constant 96 : i32
    %318 = tpu.dynamic_rotate %317 by %c96_i32_197 dim 1 : vector<8x128xf32>, i32 -> vector<8x128xf32>
    %c64_i32_198 = arith.constant 64 : i32
    %319 = tpu.dynamic_rotate %317 by %c64_i32_198 dim 1 : vector<8x128xf32>, i32 -> vector<8x128xf32>
    %c32_i32_199 = arith.constant 32 : i32
    %320 = tpu.dynamic_rotate %317 by %c32_i32_199 dim 1 : vector<8x128xf32>, i32 -> vector<8x128xf32>
    %321 = arith.mulf %318, %301 : vector<8x128xf32>
    %322 = arith.mulf %317, %319 : vector<8x128xf32>
    %323 = arith.addf %321, %322 : vector<8x128xf32>
    %324 = math.tanh %323 : vector<8x128xf32>
    %325 = arith.mulf %320, %324 : vector<8x128xf32>
    %c1_i32_200 = arith.constant 1 : i32
    %c8_i32_201 = arith.constant 8 : i32
    %326 = arith.muli %c1_i32_200, %c8_i32_201 : i32
    %327 = tpu.assume_multiple %326, 8 : i32
    %328 = arith.index_cast %327 : i32 to index
    %c0_202 = arith.constant 0 : index
    %329 = vector.load %arg12[%328, %c0_202] : memref<64x128xf32, #tpu.memory_space<vmem>>, vector<8x128xf32>
    %c0_203 = arith.constant 0 : index
    %c0_204 = arith.constant 0 : index
    %330 = vector.load %arg7[%c0_203, %c0_204] : memref<128x128xf32, #tpu.memory_space<vmem>>, vector<128x128xf32>
    %cst_205 = arith.constant dense<0.000000e+00> : vector<8x128xf32>
    %331 = tpu.matmul %325, %330, %cst_205 {dimension_numbers = #tpu.dot_dimension_numbers<[1], [0], [0], [1], [0, 0, 1, 1], [], []>} : vector<8x128xf32>, vector<128x128xf32>, vector<8x128xf32> -> vector<8x128xf32>
    %332 = arith.addf %329, %331 : vector<8x128xf32>
    %cst_206 = arith.constant 5.000000e-01 : f32
    %333 = vector.broadcast %cst_206 : f32 to vector<8x128xf32>
    %334 = arith.mulf %333, %332 : vector<8x128xf32>
    %335 = math.tanh %334 : vector<8x128xf32>
    %cst_207 = arith.constant 5.000000e-01 : f32
    %336 = vector.broadcast %cst_207 : f32 to vector<8x128xf32>
    %337 = arith.mulf %336, %335 : vector<8x128xf32>
    %cst_208 = arith.constant 5.000000e-01 : f32
    %338 = vector.broadcast %cst_208 : f32 to vector<8x128xf32>
    %339 = arith.addf %337, %338 : vector<8x128xf32>
    %340 = math.tanh %332 : vector<8x128xf32>
    %341 = arith.select %8, %340, %339 : vector<8x128xi1>, vector<8x128xf32>
    %c96_i32_209 = arith.constant 96 : i32
    %342 = tpu.dynamic_rotate %341 by %c96_i32_209 dim 1 : vector<8x128xf32>, i32 -> vector<8x128xf32>
    %c64_i32_210 = arith.constant 64 : i32
    %343 = tpu.dynamic_rotate %341 by %c64_i32_210 dim 1 : vector<8x128xf32>, i32 -> vector<8x128xf32>
    %c32_i32_211 = arith.constant 32 : i32
    %344 = tpu.dynamic_rotate %341 by %c32_i32_211 dim 1 : vector<8x128xf32>, i32 -> vector<8x128xf32>
    %345 = arith.mulf %342, %323 : vector<8x128xf32>
    %346 = arith.mulf %341, %343 : vector<8x128xf32>
    %347 = arith.addf %345, %346 : vector<8x128xf32>
    %348 = math.tanh %347 : vector<8x128xf32>
    %349 = arith.mulf %344, %348 : vector<8x128xf32>
    %c2_i32_212 = arith.constant 2 : i32
    %c8_i32_213 = arith.constant 8 : i32
    %350 = arith.muli %c2_i32_212, %c8_i32_213 : i32
    %351 = tpu.assume_multiple %350, 8 : i32
    %352 = arith.index_cast %351 : i32 to index
    %c0_214 = arith.constant 0 : index
    %353 = vector.load %arg12[%352, %c0_214] : memref<64x128xf32, #tpu.memory_space<vmem>>, vector<8x128xf32>
    %c0_215 = arith.constant 0 : index
    %c0_216 = arith.constant 0 : index
    %354 = vector.load %arg7[%c0_215, %c0_216] : memref<128x128xf32, #tpu.memory_space<vmem>>, vector<128x128xf32>
    %cst_217 = arith.constant dense<0.000000e+00> : vector<8x128xf32>
    %355 = tpu.matmul %349, %354, %cst_217 {dimension_numbers = #tpu.dot_dimension_numbers<[1], [0], [0], [1], [0, 0, 1, 1], [], []>} : vector<8x128xf32>, vector<128x128xf32>, vector<8x128xf32> -> vector<8x128xf32>
    %356 = arith.addf %353, %355 : vector<8x128xf32>
    %cst_218 = arith.constant 5.000000e-01 : f32
    %357 = vector.broadcast %cst_218 : f32 to vector<8x128xf32>
    %358 = arith.mulf %357, %356 : vector<8x128xf32>
    %359 = math.tanh %358 : vector<8x128xf32>
    %cst_219 = arith.constant 5.000000e-01 : f32
    %360 = vector.broadcast %cst_219 : f32 to vector<8x128xf32>
    %361 = arith.mulf %360, %359 : vector<8x128xf32>
    %cst_220 = arith.constant 5.000000e-01 : f32
    %362 = vector.broadcast %cst_220 : f32 to vector<8x128xf32>
    %363 = arith.addf %361, %362 : vector<8x128xf32>
    %364 = math.tanh %356 : vector<8x128xf32>
    %365 = arith.select %8, %364, %363 : vector<8x128xi1>, vector<8x128xf32>
    %c96_i32_221 = arith.constant 96 : i32
    %366 = tpu.dynamic_rotate %365 by %c96_i32_221 dim 1 : vector<8x128xf32>, i32 -> vector<8x128xf32>
    %c64_i32_222 = arith.constant 64 : i32
    %367 = tpu.dynamic_rotate %365 by %c64_i32_222 dim 1 : vector<8x128xf32>, i32 -> vector<8x128xf32>
    %c32_i32_223 = arith.constant 32 : i32
    %368 = tpu.dynamic_rotate %365 by %c32_i32_223 dim 1 : vector<8x128xf32>, i32 -> vector<8x128xf32>
    %369 = arith.mulf %366, %347 : vector<8x128xf32>
    %370 = arith.mulf %365, %367 : vector<8x128xf32>
    %371 = arith.addf %369, %370 : vector<8x128xf32>
    %372 = math.tanh %371 : vector<8x128xf32>
    %373 = arith.mulf %368, %372 : vector<8x128xf32>
    %c3_i32_224 = arith.constant 3 : i32
    %c8_i32_225 = arith.constant 8 : i32
    %374 = arith.muli %c3_i32_224, %c8_i32_225 : i32
    %375 = tpu.assume_multiple %374, 8 : i32
    %376 = arith.index_cast %375 : i32 to index
    %c0_226 = arith.constant 0 : index
    %377 = vector.load %arg12[%376, %c0_226] : memref<64x128xf32, #tpu.memory_space<vmem>>, vector<8x128xf32>
    %c0_227 = arith.constant 0 : index
    %c0_228 = arith.constant 0 : index
    %378 = vector.load %arg7[%c0_227, %c0_228] : memref<128x128xf32, #tpu.memory_space<vmem>>, vector<128x128xf32>
    %cst_229 = arith.constant dense<0.000000e+00> : vector<8x128xf32>
    %379 = tpu.matmul %373, %378, %cst_229 {dimension_numbers = #tpu.dot_dimension_numbers<[1], [0], [0], [1], [0, 0, 1, 1], [], []>} : vector<8x128xf32>, vector<128x128xf32>, vector<8x128xf32> -> vector<8x128xf32>
    %380 = arith.addf %377, %379 : vector<8x128xf32>
    %cst_230 = arith.constant 5.000000e-01 : f32
    %381 = vector.broadcast %cst_230 : f32 to vector<8x128xf32>
    %382 = arith.mulf %381, %380 : vector<8x128xf32>
    %383 = math.tanh %382 : vector<8x128xf32>
    %cst_231 = arith.constant 5.000000e-01 : f32
    %384 = vector.broadcast %cst_231 : f32 to vector<8x128xf32>
    %385 = arith.mulf %384, %383 : vector<8x128xf32>
    %cst_232 = arith.constant 5.000000e-01 : f32
    %386 = vector.broadcast %cst_232 : f32 to vector<8x128xf32>
    %387 = arith.addf %385, %386 : vector<8x128xf32>
    %388 = math.tanh %380 : vector<8x128xf32>
    %389 = arith.select %8, %388, %387 : vector<8x128xi1>, vector<8x128xf32>
    %c96_i32_233 = arith.constant 96 : i32
    %390 = tpu.dynamic_rotate %389 by %c96_i32_233 dim 1 : vector<8x128xf32>, i32 -> vector<8x128xf32>
    %c64_i32_234 = arith.constant 64 : i32
    %391 = tpu.dynamic_rotate %389 by %c64_i32_234 dim 1 : vector<8x128xf32>, i32 -> vector<8x128xf32>
    %c32_i32_235 = arith.constant 32 : i32
    %392 = tpu.dynamic_rotate %389 by %c32_i32_235 dim 1 : vector<8x128xf32>, i32 -> vector<8x128xf32>
    %393 = arith.mulf %390, %371 : vector<8x128xf32>
    %394 = arith.mulf %389, %391 : vector<8x128xf32>
    %395 = arith.addf %393, %394 : vector<8x128xf32>
    %396 = math.tanh %395 : vector<8x128xf32>
    %397 = arith.mulf %392, %396 : vector<8x128xf32>
    %c4_i32_236 = arith.constant 4 : i32
    %c8_i32_237 = arith.constant 8 : i32
    %398 = arith.muli %c4_i32_236, %c8_i32_237 : i32
    %399 = tpu.assume_multiple %398, 8 : i32
    %400 = arith.index_cast %399 : i32 to index
    %c0_238 = arith.constant 0 : index
    %401 = vector.load %arg12[%400, %c0_238] : memref<64x128xf32, #tpu.memory_space<vmem>>, vector<8x128xf32>
    %c0_239 = arith.constant 0 : index
    %c0_240 = arith.constant 0 : index
    %402 = vector.load %arg7[%c0_239, %c0_240] : memref<128x128xf32, #tpu.memory_space<vmem>>, vector<128x128xf32>
    %cst_241 = arith.constant dense<0.000000e+00> : vector<8x128xf32>
    %403 = tpu.matmul %397, %402, %cst_241 {dimension_numbers = #tpu.dot_dimension_numbers<[1], [0], [0], [1], [0, 0, 1, 1], [], []>} : vector<8x128xf32>, vector<128x128xf32>, vector<8x128xf32> -> vector<8x128xf32>
    %404 = arith.addf %401, %403 : vector<8x128xf32>
    %cst_242 = arith.constant 5.000000e-01 : f32
    %405 = vector.broadcast %cst_242 : f32 to vector<8x128xf32>
    %406 = arith.mulf %405, %404 : vector<8x128xf32>
    %407 = math.tanh %406 : vector<8x128xf32>
    %cst_243 = arith.constant 5.000000e-01 : f32
    %408 = vector.broadcast %cst_243 : f32 to vector<8x128xf32>
    %409 = arith.mulf %408, %407 : vector<8x128xf32>
    %cst_244 = arith.constant 5.000000e-01 : f32
    %410 = vector.broadcast %cst_244 : f32 to vector<8x128xf32>
    %411 = arith.addf %409, %410 : vector<8x128xf32>
    %412 = math.tanh %404 : vector<8x128xf32>
    %413 = arith.select %8, %412, %411 : vector<8x128xi1>, vector<8x128xf32>
    %c96_i32_245 = arith.constant 96 : i32
    %414 = tpu.dynamic_rotate %413 by %c96_i32_245 dim 1 : vector<8x128xf32>, i32 -> vector<8x128xf32>
    %c64_i32_246 = arith.constant 64 : i32
    %415 = tpu.dynamic_rotate %413 by %c64_i32_246 dim 1 : vector<8x128xf32>, i32 -> vector<8x128xf32>
    %c32_i32_247 = arith.constant 32 : i32
    %416 = tpu.dynamic_rotate %413 by %c32_i32_247 dim 1 : vector<8x128xf32>, i32 -> vector<8x128xf32>
    %417 = arith.mulf %414, %395 : vector<8x128xf32>
    %418 = arith.mulf %413, %415 : vector<8x128xf32>
    %419 = arith.addf %417, %418 : vector<8x128xf32>
    %420 = math.tanh %419 : vector<8x128xf32>
    %421 = arith.mulf %416, %420 : vector<8x128xf32>
    %c5_i32_248 = arith.constant 5 : i32
    %c8_i32_249 = arith.constant 8 : i32
    %422 = arith.muli %c5_i32_248, %c8_i32_249 : i32
    %423 = tpu.assume_multiple %422, 8 : i32
    %424 = arith.index_cast %423 : i32 to index
    %c0_250 = arith.constant 0 : index
    %425 = vector.load %arg12[%424, %c0_250] : memref<64x128xf32, #tpu.memory_space<vmem>>, vector<8x128xf32>
    %c0_251 = arith.constant 0 : index
    %c0_252 = arith.constant 0 : index
    %426 = vector.load %arg7[%c0_251, %c0_252] : memref<128x128xf32, #tpu.memory_space<vmem>>, vector<128x128xf32>
    %cst_253 = arith.constant dense<0.000000e+00> : vector<8x128xf32>
    %427 = tpu.matmul %421, %426, %cst_253 {dimension_numbers = #tpu.dot_dimension_numbers<[1], [0], [0], [1], [0, 0, 1, 1], [], []>} : vector<8x128xf32>, vector<128x128xf32>, vector<8x128xf32> -> vector<8x128xf32>
    %428 = arith.addf %425, %427 : vector<8x128xf32>
    %cst_254 = arith.constant 5.000000e-01 : f32
    %429 = vector.broadcast %cst_254 : f32 to vector<8x128xf32>
    %430 = arith.mulf %429, %428 : vector<8x128xf32>
    %431 = math.tanh %430 : vector<8x128xf32>
    %cst_255 = arith.constant 5.000000e-01 : f32
    %432 = vector.broadcast %cst_255 : f32 to vector<8x128xf32>
    %433 = arith.mulf %432, %431 : vector<8x128xf32>
    %cst_256 = arith.constant 5.000000e-01 : f32
    %434 = vector.broadcast %cst_256 : f32 to vector<8x128xf32>
    %435 = arith.addf %433, %434 : vector<8x128xf32>
    %436 = math.tanh %428 : vector<8x128xf32>
    %437 = arith.select %8, %436, %435 : vector<8x128xi1>, vector<8x128xf32>
    %c96_i32_257 = arith.constant 96 : i32
    %438 = tpu.dynamic_rotate %437 by %c96_i32_257 dim 1 : vector<8x128xf32>, i32 -> vector<8x128xf32>
    %c64_i32_258 = arith.constant 64 : i32
    %439 = tpu.dynamic_rotate %437 by %c64_i32_258 dim 1 : vector<8x128xf32>, i32 -> vector<8x128xf32>
    %c32_i32_259 = arith.constant 32 : i32
    %440 = tpu.dynamic_rotate %437 by %c32_i32_259 dim 1 : vector<8x128xf32>, i32 -> vector<8x128xf32>
    %441 = arith.mulf %438, %419 : vector<8x128xf32>
    %442 = arith.mulf %437, %439 : vector<8x128xf32>
    %443 = arith.addf %441, %442 : vector<8x128xf32>
    %444 = math.tanh %443 : vector<8x128xf32>
    %445 = arith.mulf %440, %444 : vector<8x128xf32>
    %c6_i32_260 = arith.constant 6 : i32
    %c8_i32_261 = arith.constant 8 : i32
    %446 = arith.muli %c6_i32_260, %c8_i32_261 : i32
    %447 = tpu.assume_multiple %446, 8 : i32
    %448 = arith.index_cast %447 : i32 to index
    %c0_262 = arith.constant 0 : index
    %449 = vector.load %arg12[%448, %c0_262] : memref<64x128xf32, #tpu.memory_space<vmem>>, vector<8x128xf32>
    %c0_263 = arith.constant 0 : index
    %c0_264 = arith.constant 0 : index
    %450 = vector.load %arg7[%c0_263, %c0_264] : memref<128x128xf32, #tpu.memory_space<vmem>>, vector<128x128xf32>
    %cst_265 = arith.constant dense<0.000000e+00> : vector<8x128xf32>
    %451 = tpu.matmul %445, %450, %cst_265 {dimension_numbers = #tpu.dot_dimension_numbers<[1], [0], [0], [1], [0, 0, 1, 1], [], []>} : vector<8x128xf32>, vector<128x128xf32>, vector<8x128xf32> -> vector<8x128xf32>
    %452 = arith.addf %449, %451 : vector<8x128xf32>
    %cst_266 = arith.constant 5.000000e-01 : f32
    %453 = vector.broadcast %cst_266 : f32 to vector<8x128xf32>
    %454 = arith.mulf %453, %452 : vector<8x128xf32>
    %455 = math.tanh %454 : vector<8x128xf32>
    %cst_267 = arith.constant 5.000000e-01 : f32
    %456 = vector.broadcast %cst_267 : f32 to vector<8x128xf32>
    %457 = arith.mulf %456, %455 : vector<8x128xf32>
    %cst_268 = arith.constant 5.000000e-01 : f32
    %458 = vector.broadcast %cst_268 : f32 to vector<8x128xf32>
    %459 = arith.addf %457, %458 : vector<8x128xf32>
    %460 = math.tanh %452 : vector<8x128xf32>
    %461 = arith.select %8, %460, %459 : vector<8x128xi1>, vector<8x128xf32>
    %c96_i32_269 = arith.constant 96 : i32
    %462 = tpu.dynamic_rotate %461 by %c96_i32_269 dim 1 : vector<8x128xf32>, i32 -> vector<8x128xf32>
    %c64_i32_270 = arith.constant 64 : i32
    %463 = tpu.dynamic_rotate %461 by %c64_i32_270 dim 1 : vector<8x128xf32>, i32 -> vector<8x128xf32>
    %c32_i32_271 = arith.constant 32 : i32
    %464 = tpu.dynamic_rotate %461 by %c32_i32_271 dim 1 : vector<8x128xf32>, i32 -> vector<8x128xf32>
    %465 = arith.mulf %462, %443 : vector<8x128xf32>
    %466 = arith.mulf %461, %463 : vector<8x128xf32>
    %467 = arith.addf %465, %466 : vector<8x128xf32>
    %468 = math.tanh %467 : vector<8x128xf32>
    %469 = arith.mulf %464, %468 : vector<8x128xf32>
    %c7_i32_272 = arith.constant 7 : i32
    %c8_i32_273 = arith.constant 8 : i32
    %470 = arith.muli %c7_i32_272, %c8_i32_273 : i32
    %471 = tpu.assume_multiple %470, 8 : i32
    %472 = arith.index_cast %471 : i32 to index
    %c0_274 = arith.constant 0 : index
    %473 = vector.load %arg12[%472, %c0_274] : memref<64x128xf32, #tpu.memory_space<vmem>>, vector<8x128xf32>
    %c0_275 = arith.constant 0 : index
    %c0_276 = arith.constant 0 : index
    %474 = vector.load %arg7[%c0_275, %c0_276] : memref<128x128xf32, #tpu.memory_space<vmem>>, vector<128x128xf32>
    %cst_277 = arith.constant dense<0.000000e+00> : vector<8x128xf32>
    %475 = tpu.matmul %469, %474, %cst_277 {dimension_numbers = #tpu.dot_dimension_numbers<[1], [0], [0], [1], [0, 0, 1, 1], [], []>} : vector<8x128xf32>, vector<128x128xf32>, vector<8x128xf32> -> vector<8x128xf32>
    %476 = arith.addf %473, %475 : vector<8x128xf32>
    %cst_278 = arith.constant 5.000000e-01 : f32
    %477 = vector.broadcast %cst_278 : f32 to vector<8x128xf32>
    %478 = arith.mulf %477, %476 : vector<8x128xf32>
    %479 = math.tanh %478 : vector<8x128xf32>
    %cst_279 = arith.constant 5.000000e-01 : f32
    %480 = vector.broadcast %cst_279 : f32 to vector<8x128xf32>
    %481 = arith.mulf %480, %479 : vector<8x128xf32>
    %cst_280 = arith.constant 5.000000e-01 : f32
    %482 = vector.broadcast %cst_280 : f32 to vector<8x128xf32>
    %483 = arith.addf %481, %482 : vector<8x128xf32>
    %484 = math.tanh %476 : vector<8x128xf32>
    %485 = arith.select %8, %484, %483 : vector<8x128xi1>, vector<8x128xf32>
    %c96_i32_281 = arith.constant 96 : i32
    %486 = tpu.dynamic_rotate %485 by %c96_i32_281 dim 1 : vector<8x128xf32>, i32 -> vector<8x128xf32>
    %c64_i32_282 = arith.constant 64 : i32
    %487 = tpu.dynamic_rotate %485 by %c64_i32_282 dim 1 : vector<8x128xf32>, i32 -> vector<8x128xf32>
    %c32_i32_283 = arith.constant 32 : i32
    %488 = tpu.dynamic_rotate %485 by %c32_i32_283 dim 1 : vector<8x128xf32>, i32 -> vector<8x128xf32>
    %489 = arith.mulf %486, %467 : vector<8x128xf32>
    %490 = arith.mulf %485, %487 : vector<8x128xf32>
    %491 = arith.addf %489, %490 : vector<8x128xf32>
    %492 = math.tanh %491 : vector<8x128xf32>
    %493 = arith.mulf %488, %492 : vector<8x128xf32>
    %c8_i32_284 = arith.constant 8 : i32
    %c2_285 = arith.constant 2 : index
    %c0_286 = arith.constant 0 : index
    %c0_287 = arith.constant 0 : index
    %494 = vector.load %arg14[%c2_285, %c0_286, %c0_287] : memref<4x8x128xf32, #tpu.memory_space<vmem>>, vector<1x8x128xf32>
    %495 = vector.shape_cast %494 : vector<1x8x128xf32> to vector<8x128xf32>
    %496 = vector.shape_cast %493 : vector<8x128xf32> to vector<1x8x128xf32>
    tpu.vector_store %arg14[%c2_285, %c0_286, %c0_287], %496 {strides = array<i32>} : memref<4x8x128xf32, #tpu.memory_space<vmem>>, vector<1x8x128xf32>,
    %c3_288 = arith.constant 3 : index
    %c0_289 = arith.constant 0 : index
    %c0_290 = arith.constant 0 : index
    %497 = vector.load %arg14[%c3_288, %c0_289, %c0_290] : memref<4x8x128xf32, #tpu.memory_space<vmem>>, vector<1x8x128xf32>
    %498 = vector.shape_cast %497 : vector<1x8x128xf32> to vector<8x128xf32>
    %499 = vector.shape_cast %491 : vector<8x128xf32> to vector<1x8x128xf32>
    tpu.vector_store %arg14[%c3_288, %c0_289, %c0_290], %499 {strides = array<i32>} : memref<4x8x128xf32, #tpu.memory_space<vmem>>, vector<1x8x128xf32>,
    %c0_i32_291 = arith.constant 0 : i32
    %500 = arith.cmpi eq, %arg1, %c0_i32_291 : i32
    %501 = arith.extui %500 : i1 to i32
    %c0_i32_292 = arith.constant 0 : i32
    %502 = arith.cmpi ne, %501, %c0_i32_292 : i32
    scf.if %502 {
      %c0_293 = arith.constant 0 : index
      %c0_294 = arith.constant 0 : index
      %503 = vector.load %arg9[%c0_293, %c0_294] : memref<128x128xf32, #tpu.memory_space<vmem>>, vector<128x128xf32>
      %cst_295 = arith.constant dense<0.000000e+00> : vector<8x128xf32>
      %504 = tpu.matmul %493, %503, %cst_295 {dimension_numbers = #tpu.dot_dimension_numbers<[1], [0], [0], [1], [0, 0, 1, 1], [], []>} : vector<8x128xf32>, vector<128x128xf32>, vector<8x128xf32> -> vector<8x128xf32>
      %c0_296 = arith.constant 0 : index
      %c0_297 = arith.constant 0 : index
      %505 = vector.load %arg10[%c0_296, %c0_297] : memref<1x128xf32, #tpu.memory_space<vmem>>, vector<1x128xf32>
      %506 = vector.broadcast %505 : vector<1x128xf32> to vector<8x128xf32>
      %507 = arith.addf %504, %506 : vector<8x128xf32>
      %c0_298 = arith.constant 0 : index
      %c0_299 = arith.constant 0 : index
      %508 = vector.load %arg11[%c0_298, %c0_299] : memref<8x128xf32, #tpu.memory_space<vmem>>, vector<8x128xf32>
      tpu.vector_store %arg11[%c0_298, %c0_299], %507 {strides = array<i32>} : memref<8x128xf32, #tpu.memory_space<vmem>>, vector<8x128xf32>,
    } else {
    }
    return
  }
  func.func @transform_0(%arg0: i32, %arg1: i32) -> (i32, i32, i32) {
    %c0_i32 = arith.constant 0 : i32
    %c0_i32_0 = arith.constant 0 : i32
    return %arg1, %arg0, %c0_i32 : i32, i32, i32
  }
  func.func @transform_1(%arg0: i32, %arg1: i32) -> (i32, i32) {
    %c0_i32 = arith.constant 0 : i32
    %c0_i32_0 = arith.constant 0 : i32
    %c0_i32_1 = arith.constant 0 : i32
    return %c0_i32, %c0_i32_0 : i32, i32
  }
  func.func @transform_2(%arg0: i32, %arg1: i32) -> (i32, i32) {
    %c0_i32 = arith.constant 0 : i32
    %c0_i32_0 = arith.constant 0 : i32
    %c0_i32_1 = arith.constant 0 : i32
    return %c0_i32, %c0_i32_0 : i32, i32
  }
  func.func @transform_3(%arg0: i32, %arg1: i32) -> (i32, i32) {
    %c0_i32 = arith.constant 0 : i32
    %c0_i32_0 = arith.constant 0 : i32
    %c0_i32_1 = arith.constant 0 : i32
    return %c0_i32, %c0_i32_0 : i32, i32
  }
  func.func @transform_4(%arg0: i32, %arg1: i32) -> (i32, i32) {
    %c0_i32 = arith.constant 0 : i32
    %c0_i32_0 = arith.constant 0 : i32
    %c0_i32_1 = arith.constant 0 : i32
    return %c0_i32, %c0_i32_0 : i32, i32
  }
  func.func @transform_5(%arg0: i32, %arg1: i32) -> (i32, i32) {
    %c0_i32 = arith.constant 0 : i32
    %c0_i32_0 = arith.constant 0 : i32
    %c0_i32_1 = arith.constant 0 : i32
    return %c0_i32, %c0_i32_0 : i32, i32
  }
  func.func @transform_6(%arg0: i32, %arg1: i32) -> (i32, i32) {
    %c0_i32 = arith.constant 0 : i32
    %c0_i32_0 = arith.constant 0 : i32
    %c0_i32_1 = arith.constant 0 : i32
    return %c0_i32, %c0_i32_0 : i32, i32
  }
  func.func @transform_7(%arg0: i32, %arg1: i32) -> (i32, i32) {
    %c0_i32 = arith.constant 0 : i32
    %c0_i32_0 = arith.constant 0 : i32
    %c0_i32_1 = arith.constant 0 : i32
    return %c0_i32, %c0_i32_0 : i32, i32
  }
  func.func @transform_8(%arg0: i32, %arg1: i32) -> (i32, i32) {
    %c0_i32 = arith.constant 0 : i32
    %c0_i32_0 = arith.constant 0 : i32
    %c0_i32_1 = arith.constant 0 : i32
    return %c0_i32, %c0_i32_0 : i32, i32
  }
  func.func @transform_9(%arg0: i32, %arg1: i32) -> (i32, i32) {
    %c0_i32 = arith.constant 0 : i32
    %c0_i32_0 = arith.constant 0 : i32
    return %arg0, %c0_i32 : i32, i32
  }
}

</mosaic_0001>

<llo_original>
// kernel: lstm_forward.1
$region0: #{lstm_forward.1}
  #allocation0 [shape = 'u32[]', space=smem, size = 0x4, offset = 0x4, fixed_abs, tag = 'smem constant byte address 0x4 - core index']
  #allocation1 [shape = 'u32[144,128]{1,0:T(1,128)}', space=vmem, size = 0x12000, scoped, tag = 'internal scratch']
  #allocation2 [shape = 'f32[64,128]{1,0:T(8,128)}', space=vmem, size = 0x8000, scoped, tag = 'scratch operand']
  #allocation3 [shape = 'f32[64,128]{1,0:T(8,128)}', space=vmem, size = 0x8000, scoped, tag = 'scratch operand']
  #allocation4 [shape = 'f32[4,8,128]{2,1,0:T(8,128)}', space=vmem, size = 0x4000, scoped, tag = 'scratch operand']
  %s0 = inlined_call_operand.vmem [shape: f32[8,8,8], index: 0, kind: input, shape index: {}]
  %s1 = inlined_call_operand.vmem [shape: f32[8,128], index: 1, kind: input, shape index: {}]
  %s2 = inlined_call_operand.vmem [shape: f32[128,128], index: 2, kind: input, shape index: {}]
  %s3 = inlined_call_operand.vmem [shape: f32[1,128], index: 3, kind: input, shape index: {}]
  %s4 = inlined_call_operand.vmem [shape: f32[128,128], index: 4, kind: input, shape index: {}]
  %s5 = inlined_call_operand.vmem [shape: f32[128,128], index: 5, kind: input, shape index: {}]
  %s6 = inlined_call_operand.vmem [shape: f32[1,128], index: 6, kind: input, shape index: {}]
  %s7 = inlined_call_operand.vmem [shape: f32[128,128], index: 7, kind: input, shape index: {}]
  %s8 = inlined_call_operand.vmem [shape: f32[1,128], index: 8, kind: input, shape index: {}]
  %s9 = inlined_call_operand.vmem [shape: f32[8,128], index: 9, kind: output, shape index: {}]
  %s10 = sld [smem:[#allocation0]]
  $region54: #{lstm_forward.1} parent=0
    _
  %s12 = ssub.s32 1, %s10
  %s13 = scalar_select 0, %s12, %s10
  // Predicated region
  $region2: #{lstm_forward.1} parent=0 // pred_check
    _
  $region3: #{lstm_forward.1} parent=0 // pred_check_branch
    %15 = sbr.rel (0) target = $region5
  $region4: #{lstm_forward.1} parent=0 // pred_region
    _
  $region5: #{lstm_forward.1} parent=0 // pred_fallthru
    _
  // Predicated region
  $region6: #{lstm_forward.1} parent=0 // pred_check
    _
  $region7: #{lstm_forward.1} parent=0 // pred_check_branch
    %17 = sbr.rel (0) target = $region9
  $region8: #{lstm_forward.1} parent=0 // pred_region
    _
  $region9: #{lstm_forward.1} parent=0 // pred_fallthru
    _
  // Predicated region
  $region10: #{lstm_forward.1} parent=0 // pred_check
    _
  $region11: #{lstm_forward.1} parent=0 // pred_check_branch
    %19 = sbr.rel (0) target = $region13
  $region12: #{lstm_forward.1} parent=0 // pred_region
    _
  $region13: #{lstm_forward.1} parent=0 // pred_fallthru
    _
  // Predicated region
  $region14: #{lstm_forward.1} parent=0 // pred_check
    _
  $region15: #{lstm_forward.1} parent=0 // pred_check_branch
    %21 = sbr.rel (0) target = $region17
  $region16: #{lstm_forward.1} parent=0 // pred_region
    _
  $region17: #{lstm_forward.1} parent=0 // pred_fallthru
    _
  // Predicated region
  $region18: #{lstm_forward.1} parent=0 // pred_check
    _
  $region19: #{lstm_forward.1} parent=0 // pred_check_branch
    %23 = sbr.rel (0) target = $region21
  $region20: #{lstm_forward.1} parent=0 // pred_region
    _
  $region21: #{lstm_forward.1} parent=0 // pred_fallthru
    _
  // Predicated region
  $region22: #{lstm_forward.1} parent=0 // pred_check
    _
  $region23: #{lstm_forward.1} parent=0 // pred_check_branch
    %25 = sbr.rel (0) target = $region25
  $region24: #{lstm_forward.1} parent=0 // pred_region
    _
  $region25: #{lstm_forward.1} parent=0 // pred_fallthru
    _
  // Predicated region
  $region26: #{lstm_forward.1} parent=0 // pred_check
    _
  $region27: #{lstm_forward.1} parent=0 // pred_check_branch
    %27 = sbr.rel (0) target = $region29
  $region28: #{lstm_forward.1} parent=0 // pred_region
    _
  $region29: #{lstm_forward.1} parent=0 // pred_fallthru
    _
  // Predicated region
  $region30: #{lstm_forward.1} parent=0 // pred_check
    _
  $region31: #{lstm_forward.1} parent=0 // pred_check_branch
    %29 = sbr.rel (0) target = $region33
  $region32: #{lstm_forward.1} parent=0 // pred_region
    _
  $region33: #{lstm_forward.1} parent=0 // pred_fallthru
    _
  // Predicated region
  $region34: #{lstm_forward.1} parent=0 // pred_check
    _
  $region35: #{lstm_forward.1} parent=0 // pred_check_branch
    %31 = sbr.rel (0) target = $region37
  $region36: #{lstm_forward.1} parent=0 // pred_region
    _
  $region37: #{lstm_forward.1} parent=0 // pred_fallthru
    _
  %p32 = scmp.eq.s32.totalorder 0, 0
  // Predicated region
  $region38: #{lstm_forward.1} parent=0 // pred_check
    %p33 = pneg %p32
  $region39: #{lstm_forward.1} parent=0 // pred_check_branch
    %35 = sbr.rel (%p33) target = $region41
  $region40: #{lstm_forward.1} parent=0 // pred_region
    %36 = vst [vmem:[#allocation4] sm:$0xff] 0.0
    %37 = vst [vmem:[#allocation4 + $0x8] sm:$0xff] 0.0
    %38 = vst [vmem:[#allocation4 + $0x10] sm:$0xff] 0.0
    %39 = vst [vmem:[#allocation4 + $0x18] sm:$0xff] 0.0
  $region41: #{lstm_forward.1} parent=0 // pred_fallthru
    _
  %v40 = vlaneseq
  %v41 = vand.u32 %v40, 127
  %vm42 = vcmp.ge.s32.totalorder %v41, 64
  %vm43 = vcmp.lt.s32.totalorder %v41, 96
  %vm44 = vmand %vm42, %vm43
  %v45 = vld [vmem:[%s0] sm:$0xff]
  %v46 = vld [vmem:[%s1] sm:$0xff]
  %v47 = vld [vmem:[%s3] sm:$0x1]
  %v49 = vlaneseq
  %v50 = vshrl.u32 %v49, 7
  %v51 = vsub.s32 0, %v50
  %v52 = vrot.slane %v47, %v51
  %vm54 = vcmask 64512
  %v56 = vsel %vm54, %v45, 0
  %58 = vmatprep.subr.mxu0 0.0
  %59 = vmatpush1.msra.mxu0 0.0
  %60 = vmatprep.subr.mxu0 0.0
  %61 = vmatpush1.msra.mxu0 0.0
  %62 = vmatprep.subr.mxu0 0.0
  %63 = vmatpush1.msra.mxu0 0.0
  %64 = vmatprep.subr.mxu0 0.0
  %65 = vmatpush1.msra.mxu0 0.0
  %66 = vmatprep.subr.mxu0 0.0
  %67 = vmatpush1.msra.mxu0 0.0
  %68 = vmatprep.subr.mxu0 0.0
  %69 = vmatpush1.msra.mxu0 0.0
  %70 = vmatprep.subr.mxu0 0.0
  %71 = vmatpush1.msra.mxu0 0.0
  %72 = vmatprep.subr.mxu0 0.0
  %73 = vmatpush1.msra.mxu0 0.0
  %74 = vmatprep.subr.mxu0 0.0
  %75 = vmatpush1.msra.mxu0 0.0
  %76 = vmatprep.subr.mxu0 0.0
  %77 = vmatpush1.msra.mxu0 0.0
  %78 = vmatprep.subr.mxu0 0.0
  %79 = vmatpush1.msra.mxu0 0.0
  %80 = vmatprep.subr.mxu0 0.0
  %81 = vmatpush1.msra.mxu0 0.0
  %82 = vmatprep.subr.mxu0 0.0
  %83 = vmatpush1.msra.mxu0 0.0
  %84 = vmatprep.subr.mxu0 0.0
  %85 = vmatpush1.msra.mxu0 0.0
  %86 = vmatprep.subr.mxu0 0.0
  %87 = vmatpush1.msra.mxu0 0.0
  %88 = vmatprep.subr.mxu0 0.0
  %89 = vmatpush1.msra.mxu0 %v46
  %90 = vmatprep.subr.mxu0 0.0
  %91 = vmatpush2.msra.mxu0 0.0
  %92 = vmatprep.subr.mxu0 0.0
  %93 = vmatpush2.msra.mxu0 0.0
  %94 = vmatprep.subr.mxu0 0.0
  %95 = vmatpush2.msra.mxu0 0.0
  %96 = vmatprep.subr.mxu0 0.0
  %97 = vmatpush2.msra.mxu0 0.0
  %98 = vmatprep.subr.mxu0 0.0
  %99 = vmatpush2.msra.mxu0 0.0
  %100 = vmatprep.subr.mxu0 0.0
  %101 = vmatpush2.msra.mxu0 0.0
  %102 = vmatprep.subr.mxu0 0.0
  %103 = vmatpush2.msra.mxu0 0.0
  %104 = vmatprep.subr.mxu0 0.0
  %105 = vmatpush2.msra.mxu0 0.0
  %106 = vmatprep.subr.mxu0 0.0
  %107 = vmatpush2.msra.mxu0 0.0
  %108 = vmatprep.subr.mxu0 0.0
  %109 = vmatpush2.msra.mxu0 0.0
  %110 = vmatprep.subr.mxu0 0.0
  %111 = vmatpush2.msra.mxu0 0.0
  %112 = vmatprep.subr.mxu0 0.0
  %113 = vmatpush2.msra.mxu0 0.0
  %114 = vmatprep.subr.mxu0 0.0
  %115 = vmatpush2.msra.mxu0 0.0
  %116 = vmatprep.subr.mxu0 0.0
  %117 = vmatpush2.msra.mxu0 0.0
  %118 = vmatprep.subr.mxu0 0.0
  %119 = vmatpush2.msra.mxu0 0.0
  %120 = vmatprep.subr.mxu0 0.0
  %121 = vmatpush2.msra.mxu0 0.0
  %122 = vmatprep.mubr.f32.mxu0 0.0
  %123 = vmatmul.mubr.f32.gmra.mxu0 %v56
  %v124 = vpop.f32.mrf.mxu0
  %v125 = vadd.f32 %v52, %v124
  %v126 = vpop.f32.mrf.mxu0
  %127 = vdwg.mxu0
  %128 = vst [vmem:[#allocation2] sm:$0xff] %v125
  %s129 = scalar_lea.vmem %s0, 8
  %v130 = vld [vmem:[%s129] sm:$0xff]
  %v131 = vld [vmem:[%s1] sm:$0xff]
  %v132 = vld [vmem:[%s3] sm:$0x1]
  %v134 = vlaneseq
  %v135 = vshrl.u32 %v134, 7
  %v136 = vsub.s32 0, %v135
  %v137 = vrot.slane %v132, %v136
  %v140 = vsel %vm54, %v130, 0
  %142 = vmatprep.subr.mxu0 0.0
  %143 = vmatpush1.msra.mxu0 0.0
  %144 = vmatprep.subr.mxu0 0.0
  %145 = vmatpush1.msra.mxu0 0.0
  %146 = vmatprep.subr.mxu0 0.0
  %147 = vmatpush1.msra.mxu0 0.0
  %148 = vmatprep.subr.mxu0 0.0
  %149 = vmatpush1.msra.mxu0 0.0
  %150 = vmatprep.subr.mxu0 0.0
  %151 = vmatpush1.msra.mxu0 0.0
  %152 = vmatprep.subr.mxu0 0.0
  %153 = vmatpush1.msra.mxu0 0.0
  %154 = vmatprep.subr.mxu0 0.0
  %155 = vmatpush1.msra.mxu0 0.0
  %156 = vmatprep.subr.mxu0 0.0
  %157 = vmatpush1.msra.mxu0 0.0
  %158 = vmatprep.subr.mxu0 0.0
  %159 = vmatpush1.msra.mxu0 0.0
  %160 = vmatprep.subr.mxu0 0.0
  %161 = vmatpush1.msra.mxu0 0.0
  %162 = vmatprep.subr.mxu0 0.0
  %163 = vmatpush1.msra.mxu0 0.0
  %164 = vmatprep.subr.mxu0 0.0
  %165 = vmatpush1.msra.mxu0 0.0
  %166 = vmatprep.subr.mxu0 0.0
  %167 = vmatpush1.msra.mxu0 0.0
  %168 = vmatprep.subr.mxu0 0.0
  %169 = vmatpush1.msra.mxu0 0.0
  %170 = vmatprep.subr.mxu0 0.0
  %171 = vmatpush1.msra.mxu0 0.0
  %172 = vmatprep.subr.mxu0 0.0
  %173 = vmatpush1.msra.mxu0 %v131
  %174 = vmatprep.subr.mxu0 0.0
  %175 = vmatpush2.msra.mxu0 0.0
  %176 = vmatprep.subr.mxu0 0.0
  %177 = vmatpush2.msra.mxu0 0.0
  %178 = vmatprep.subr.mxu0 0.0
  %179 = vmatpush2.msra.mxu0 0.0
  %180 = vmatprep.subr.mxu0 0.0
  %181 = vmatpush2.msra.mxu0 0.0
  %182 = vmatprep.subr.mxu0 0.0
  %183 = vmatpush2.msra.mxu0 0.0
  %184 = vmatprep.subr.mxu0 0.0
  %185 = vmatpush2.msra.mxu0 0.0
  %186 = vmatprep.subr.mxu0 0.0
  %187 = vmatpush2.msra.mxu0 0.0
  %188 = vmatprep.subr.mxu0 0.0
  %189 = vmatpush2.msra.mxu0 0.0
  %190 = vmatprep.subr.mxu0 0.0
  %191 = vmatpush2.msra.mxu0 0.0
  %192 = vmatprep.subr.mxu0 0.0
  %193 = vmatpush2.msra.mxu0 0.0
  %194 = vmatprep.subr.mxu0 0.0
  %195 = vmatpush2.msra.mxu0 0.0
  %196 = vmatprep.subr.mxu0 0.0
  %197 = vmatpush2.msra.mxu0 0.0
  %198 = vmatprep.subr.mxu0 0.0
  %199 = vmatpush2.msra.mxu0 0.0
  %200 = vmatprep.subr.mxu0 0.0
  %201 = vmatpush2.msra.mxu0 0.0
  %202 = vmatprep.subr.mxu0 0.0
  %203 = vmatpush2.msra.mxu0 0.0
  %204 = vmatprep.subr.mxu0 0.0
  %205 = vmatpush2.msra.mxu0 0.0
  %206 = vmatprep.mubr.f32.mxu0 0.0
  %207 = vmatmul.mubr.f32.gmra.mxu0 %v140
  %v208 = vpop.f32.mrf.mxu0
  %v209 = vadd.f32 %v137, %v208
  %v210 = vpop.f32.mrf.mxu0
  %211 = vdwg.mxu0
  %212 = vst [vmem:[#allocation2 + $0x8] sm:$0xff] %v209
  %s213 = scalar_lea.vmem %s0, 16
  %v214 = vld [vmem:[%s213] sm:$0xff]
  %v215 = vld [vmem:[%s1] sm:$0xff]
  %v216 = vld [vmem:[%s3] sm:$0x1]
  %v218 = vlaneseq
  %v219 = vshrl.u32 %v218, 7
  %v220 = vsub.s32 0, %v219
  %v221 = vrot.slane %v216, %v220
  %v224 = vsel %vm54, %v214, 0
  %226 = vmatprep.subr.mxu0 0.0
  %227 = vmatpush1.msra.mxu0 0.0
  %228 = vmatprep.subr.mxu0 0.0
  %229 = vmatpush1.msra.mxu0 0.0
  %230 = vmatprep.subr.mxu0 0.0
  %231 = vmatpush1.msra.mxu0 0.0
  %232 = vmatprep.subr.mxu0 0.0
  %233 = vmatpush1.msra.mxu0 0.0
  %234 = vmatprep.subr.mxu0 0.0
  %235 = vmatpush1.msra.mxu0 0.0
  %236 = vmatprep.subr.mxu0 0.0
  %237 = vmatpush1.msra.mxu0 0.0
  %238 = vmatprep.subr.mxu0 0.0
  %239 = vmatpush1.msra.mxu0 0.0
  %240 = vmatprep.subr.mxu0 0.0
  %241 = vmatpush1.msra.mxu0 0.0
  %242 = vmatprep.subr.mxu0 0.0
  %243 = vmatpush1.msra.mxu0 0.0
  %244 = vmatprep.subr.mxu0 0.0
  %245 = vmatpush1.msra.mxu0 0.0
  %246 = vmatprep.subr.mxu0 0.0
  %247 = vmatpush1.msra.mxu0 0.0
  %248 = vmatprep.subr.mxu0 0.0
  %249 = vmatpush1.msra.mxu0 0.0
  %250 = vmatprep.subr.mxu0 0.0
  %251 = vmatpush1.msra.mxu0 0.0
  %252 = vmatprep.subr.mxu0 0.0
  %253 = vmatpush1.msra.mxu0 0.0
  %254 = vmatprep.subr.mxu0 0.0
  %255 = vmatpush1.msra.mxu0 0.0
  %256 = vmatprep.subr.mxu0 0.0
  %257 = vmatpush1.msra.mxu0 %v215
  %258 = vmatprep.subr.mxu0 0.0
  %259 = vmatpush2.msra.mxu0 0.0
  %260 = vmatprep.subr.mxu0 0.0
  %261 = vmatpush2.msra.mxu0 0.0
  %262 = vmatprep.subr.mxu0 0.0
  %263 = vmatpush2.msra.mxu0 0.0
  %264 = vmatprep.subr.mxu0 0.0
  %265 = vmatpush2.msra.mxu0 0.0
  %266 = vmatprep.subr.mxu0 0.0
  %267 = vmatpush2.msra.mxu0 0.0
  %268 = vmatprep.subr.mxu0 0.0
  %269 = vmatpush2.msra.mxu0 0.0
  %270 = vmatprep.subr.mxu0 0.0
  %271 = vmatpush2.msra.mxu0 0.0
  %272 = vmatprep.subr.mxu0 0.0
  %273 = vmatpush2.msra.mxu0 0.0
  %274 = vmatprep.subr.mxu0 0.0
  %275 = vmatpush2.msra.mxu0 0.0
  %276 = vmatprep.subr.mxu0 0.0
  %277 = vmatpush2.msra.mxu0 0.0
  %278 = vmatprep.subr.mxu0 0.0
  %279 = vmatpush2.msra.mxu0 0.0
  %280 = vmatprep.subr.mxu0 0.0
  %281 = vmatpush2.msra.mxu0 0.0
  %282 = vmatprep.subr.mxu0 0.0
  %283 = vmatpush2.msra.mxu0 0.0
  %284 = vmatprep.subr.mxu0 0.0
  %285 = vmatpush2.msra.mxu0 0.0
  %286 = vmatprep.subr.mxu0 0.0
  %287 = vmatpush2.msra.mxu0 0.0
  %288 = vmatprep.subr.mxu0 0.0
  %289 = vmatpush2.msra.mxu0 0.0
  %290 = vmatprep.mubr.f32.mxu0 0.0
  %291 = vmatmul.mubr.f32.gmra.mxu0 %v224
  %v292 = vpop.f32.mrf.mxu0
  %v293 = vadd.f32 %v221, %v292
  %v294 = vpop.f32.mrf.mxu0
  %295 = vdwg.mxu0
  %296 = vst [vmem:[#allocation2 + $0x10] sm:$0xff] %v293
  %s297 = scalar_lea.vmem %s0, 24
  %v298 = vld [vmem:[%s297] sm:$0xff]
  %v299 = vld [vmem:[%s1] sm:$0xff]
  %v300 = vld [vmem:[%s3] sm:$0x1]
  %v302 = vlaneseq
  %v303 = vshrl.u32 %v302, 7
  %v304 = vsub.s32 0, %v303
  %v305 = vrot.slane %v300, %v304
  %v308 = vsel %vm54, %v298, 0
  %310 = vmatprep.subr.mxu0 0.0
  %311 = vmatpush1.msra.mxu0 0.0
  %312 = vmatprep.subr.mxu0 0.0
  %313 = vmatpush1.msra.mxu0 0.0
  %314 = vmatprep.subr.mxu0 0.0
  %315 = vmatpush1.msra.mxu0 0.0
  %316 = vmatprep.subr.mxu0 0.0
  %317 = vmatpush1.msra.mxu0 0.0
  %318 = vmatprep.subr.mxu0 0.0
  %319 = vmatpush1.msra.mxu0 0.0
  %320 = vmatprep.subr.mxu0 0.0
  %321 = vmatpush1.msra.mxu0 0.0
  %322 = vmatprep.subr.mxu0 0.0
  %323 = vmatpush1.msra.mxu0 0.0
  %324 = vmatprep.subr.mxu0 0.0
  %325 = vmatpush1.msra.mxu0 0.0
  %326 = vmatprep.subr.mxu0 0.0
  %327 = vmatpush1.msra.mxu0 0.0
  %328 = vmatprep.subr.mxu0 0.0
  %329 = vmatpush1.msra.mxu0 0.0
  %330 = vmatprep.subr.mxu0 0.0
  %331 = vmatpush1.msra.mxu0 0.0
  %332 = vmatprep.subr.mxu0 0.0
  %333 = vmatpush1.msra.mxu0 0.0
  %334 = vmatprep.subr.mxu0 0.0
  %335 = vmatpush1.msra.mxu0 0.0
  %336 = vmatprep.subr.mxu0 0.0
  %337 = vmatpush1.msra.mxu0 0.0
  %338 = vmatprep.subr.mxu0 0.0
  %339 = vmatpush1.msra.mxu0 0.0
  %340 = vmatprep.subr.mxu0 0.0
  %341 = vmatpush1.msra.mxu0 %v299
  %342 = vmatprep.subr.mxu0 0.0
  %343 = vmatpush2.msra.mxu0 0.0
  %344 = vmatprep.subr.mxu0 0.0
  %345 = vmatpush2.msra.mxu0 0.0
  %346 = vmatprep.subr.mxu0 0.0
  %347 = vmatpush2.msra.mxu0 0.0
  %348 = vmatprep.subr.mxu0 0.0
  %349 = vmatpush2.msra.mxu0 0.0
  %350 = vmatprep.subr.mxu0 0.0
  %351 = vmatpush2.msra.mxu0 0.0
  %352 = vmatprep.subr.mxu0 0.0
  %353 = vmatpush2.msra.mxu0 0.0
  %354 = vmatprep.subr.mxu0 0.0
  %355 = vmatpush2.msra.mxu0 0.0
  %356 = vmatprep.subr.mxu0 0.0
  %357 = vmatpush2.msra.mxu0 0.0
  %358 = vmatprep.subr.mxu0 0.0
  %359 = vmatpush2.msra.mxu0 0.0
  %360 = vmatprep.subr.mxu0 0.0
  %361 = vmatpush2.msra.mxu0 0.0
  %362 = vmatprep.subr.mxu0 0.0
  %363 = vmatpush2.msra.mxu0 0.0
  %364 = vmatprep.subr.mxu0 0.0
  %365 = vmatpush2.msra.mxu0 0.0
  %366 = vmatprep.subr.mxu0 0.0
  %367 = vmatpush2.msra.mxu0 0.0
  %368 = vmatprep.subr.mxu0 0.0
  %369 = vmatpush2.msra.mxu0 0.0
  %370 = vmatprep.subr.mxu0 0.0
  %371 = vmatpush2.msra.mxu0 0.0
  %372 = vmatprep.subr.mxu0 0.0
  %373 = vmatpush2.msra.mxu0 0.0
  %374 = vmatprep.mubr.f32.mxu0 0.0
  %375 = vmatmul.mubr.f32.gmra.mxu0 %v308
  %v376 = vpop.f32.mrf.mxu0
  %v377 = vadd.f32 %v305, %v376
  %v378 = vpop.f32.mrf.mxu0
  %379 = vdwg.mxu0
  %380 = vst [vmem:[#allocation2 + $0x18] sm:$0xff] %v377
  %s381 = scalar_lea.vmem %s0, 32
  %v382 = vld [vmem:[%s381] sm:$0xff]
  %v383 = vld [vmem:[%s1] sm:$0xff]
  %v384 = vld [vmem:[%s3] sm:$0x1]
  %v386 = vlaneseq
  %v387 = vshrl.u32 %v386, 7
  %v388 = vsub.s32 0, %v387
  %v389 = vrot.slane %v384, %v388
  %v392 = vsel %vm54, %v382, 0
  %394 = vmatprep.subr.mxu0 0.0
  %395 = vmatpush1.msra.mxu0 0.0
  %396 = vmatprep.subr.mxu0 0.0
  %397 = vmatpush1.msra.mxu0 0.0
  %398 = vmatprep.subr.mxu0 0.0
  %399 = vmatpush1.msra.mxu0 0.0
  %400 = vmatprep.subr.mxu0 0.0
  %401 = vmatpush1.msra.mxu0 0.0
  %402 = vmatprep.subr.mxu0 0.0
  %403 = vmatpush1.msra.mxu0 0.0
  %404 = vmatprep.subr.mxu0 0.0
  %405 = vmatpush1.msra.mxu0 0.0
  %406 = vmatprep.subr.mxu0 0.0
  %407 = vmatpush1.msra.mxu0 0.0
  %408 = vmatprep.subr.mxu0 0.0
  %409 = vmatpush1.msra.mxu0 0.0
  %410 = vmatprep.subr.mxu0 0.0
  %411 = vmatpush1.msra.mxu0 0.0
  %412 = vmatprep.subr.mxu0 0.0
  %413 = vmatpush1.msra.mxu0 0.0
  %414 = vmatprep.subr.mxu0 0.0
  %415 = vmatpush1.msra.mxu0 0.0
  %416 = vmatprep.subr.mxu0 0.0
  %417 = vmatpush1.msra.mxu0 0.0
  %418 = vmatprep.subr.mxu0 0.0
  %419 = vmatpush1.msra.mxu0 0.0
  %420 = vmatprep.subr.mxu0 0.0
  %421 = vmatpush1.msra.mxu0 0.0
  %422 = vmatprep.subr.mxu0 0.0
  %423 = vmatpush1.msra.mxu0 0.0
  %424 = vmatprep.subr.mxu0 0.0
  %425 = vmatpush1.msra.mxu0 %v383
  %426 = vmatprep.subr.mxu0 0.0
  %427 = vmatpush2.msra.mxu0 0.0
  %428 = vmatprep.subr.mxu0 0.0
  %429 = vmatpush2.msra.mxu0 0.0
  %430 = vmatprep.subr.mxu0 0.0
  %431 = vmatpush2.msra.mxu0 0.0
  %432 = vmatprep.subr.mxu0 0.0
  %433 = vmatpush2.msra.mxu0 0.0
  %434 = vmatprep.subr.mxu0 0.0
  %435 = vmatpush2.msra.mxu0 0.0
  %436 = vmatprep.subr.mxu0 0.0
  %437 = vmatpush2.msra.mxu0 0.0
  %438 = vmatprep.subr.mxu0 0.0
  %439 = vmatpush2.msra.mxu0 0.0
  %440 = vmatprep.subr.mxu0 0.0
  %441 = vmatpush2.msra.mxu0 0.0
  %442 = vmatprep.subr.mxu0 0.0
  %443 = vmatpush2.msra.mxu0 0.0
  %444 = vmatprep.subr.mxu0 0.0
  %445 = vmatpush2.msra.mxu0 0.0
  %446 = vmatprep.subr.mxu0 0.0
  %447 = vmatpush2.msra.mxu0 0.0
  %448 = vmatprep.subr.mxu0 0.0
  %449 = vmatpush2.msra.mxu0 0.0
  %450 = vmatprep.subr.mxu0 0.0
  %451 = vmatpush2.msra.mxu0 0.0
  %452 = vmatprep.subr.mxu0 0.0
  %453 = vmatpush2.msra.mxu0 0.0
  %454 = vmatprep.subr.mxu0 0.0
  %455 = vmatpush2.msra.mxu0 0.0
  %456 = vmatprep.subr.mxu0 0.0
  %457 = vmatpush2.msra.mxu0 0.0
  %458 = vmatprep.mubr.f32.mxu0 0.0
  %459 = vmatmul.mubr.f32.gmra.mxu0 %v392
  %v460 = vpop.f32.mrf.mxu0
  %v461 = vadd.f32 %v389, %v460
  %v462 = vpop.f32.mrf.mxu0
  %463 = vdwg.mxu0
  %464 = vst [vmem:[#allocation2 + $0x20] sm:$0xff] %v461
  %s465 = scalar_lea.vmem %s0, 40
  %v466 = vld [vmem:[%s465] sm:$0xff]
  %v467 = vld [vmem:[%s1] sm:$0xff]
  %v468 = vld [vmem:[%s3] sm:$0x1]
  %v470 = vlaneseq
  %v471 = vshrl.u32 %v470, 7
  %v472 = vsub.s32 0, %v471
  %v473 = vrot.slane %v468, %v472
  %v476 = vsel %vm54, %v466, 0
  %478 = vmatprep.subr.mxu0 0.0
  %479 = vmatpush1.msra.mxu0 0.0
  %480 = vmatprep.subr.mxu0 0.0
  %481 = vmatpush1.msra.mxu0 0.0
  %482 = vmatprep.subr.mxu0 0.0
  %483 = vmatpush1.msra.mxu0 0.0
  %484 = vmatprep.subr.mxu0 0.0
  %485 = vmatpush1.msra.mxu0 0.0
  %486 = vmatprep.subr.mxu0 0.0
  %487 = vmatpush1.msra.mxu0 0.0
  %488 = vmatprep.subr.mxu0 0.0
  %489 = vmatpush1.msra.mxu0 0.0
  %490 = vmatprep.subr.mxu0 0.0
  %491 = vmatpush1.msra.mxu0 0.0
  %492 = vmatprep.subr.mxu0 0.0
  %493 = vmatpush1.msra.mxu0 0.0
  %494 = vmatprep.subr.mxu0 0.0
  %495 = vmatpush1.msra.mxu0 0.0
  %496 = vmatprep.subr.mxu0 0.0
  %497 = vmatpush1.msra.mxu0 0.0
  %498 = vmatprep.subr.mxu0 0.0
  %499 = vmatpush1.msra.mxu0 0.0
  %500 = vmatprep.subr.mxu0 0.0
  %501 = vmatpush1.msra.mxu0 0.0
  %502 = vmatprep.subr.mxu0 0.0
  %503 = vmatpush1.msra.mxu0 0.0
  %504 = vmatprep.subr.mxu0 0.0
  %505 = vmatpush1.msra.mxu0 0.0
  %506 = vmatprep.subr.mxu0 0.0
  %507 = vmatpush1.msra.mxu0 0.0
  %508 = vmatprep.subr.mxu0 0.0
  %509 = vmatpush1.msra.mxu0 %v467
  %510 = vmatprep.subr.mxu0 0.0
  %511 = vmatpush2.msra.mxu0 0.0
  %512 = vmatprep.subr.mxu0 0.0
  %513 = vmatpush2.msra.mxu0 0.0
  %514 = vmatprep.subr.mxu0 0.0
  %515 = vmatpush2.msra.mxu0 0.0
  %516 = vmatprep.subr.mxu0 0.0
  %517 = vmatpush2.msra.mxu0 0.0
  %518 = vmatprep.subr.mxu0 0.0
  %519 = vmatpush2.msra.mxu0 0.0
  %520 = vmatprep.subr.mxu0 0.0
  %521 = vmatpush2.msra.mxu0 0.0
  %522 = vmatprep.subr.mxu0 0.0
  %523 = vmatpush2.msra.mxu0 0.0
  %524 = vmatprep.subr.mxu0 0.0
  %525 = vmatpush2.msra.mxu0 0.0
  %526 = vmatprep.subr.mxu0 0.0
  %527 = vmatpush2.msra.mxu0 0.0
  %528 = vmatprep.subr.mxu0 0.0
  %529 = vmatpush2.msra.mxu0 0.0
  %530 = vmatprep.subr.mxu0 0.0
  %531 = vmatpush2.msra.mxu0 0.0
  %532 = vmatprep.subr.mxu0 0.0
  %533 = vmatpush2.msra.mxu0 0.0
  %534 = vmatprep.subr.mxu0 0.0
  %535 = vmatpush2.msra.mxu0 0.0
  %536 = vmatprep.subr.mxu0 0.0
  %537 = vmatpush2.msra.mxu0 0.0
  %538 = vmatprep.subr.mxu0 0.0
  %539 = vmatpush2.msra.mxu0 0.0
  %540 = vmatprep.subr.mxu0 0.0
  %541 = vmatpush2.msra.mxu0 0.0
  %542 = vmatprep.mubr.f32.mxu0 0.0
  %543 = vmatmul.mubr.f32.gmra.mxu0 %v476
  %v544 = vpop.f32.mrf.mxu0
  %v545 = vadd.f32 %v473, %v544
  %v546 = vpop.f32.mrf.mxu0
  %547 = vdwg.mxu0
  %548 = vst [vmem:[#allocation2 + $0x28] sm:$0xff] %v545
  %s549 = scalar_lea.vmem %s0, 48
  %v550 = vld [vmem:[%s549] sm:$0xff]
  %v551 = vld [vmem:[%s1] sm:$0xff]
  %v552 = vld [vmem:[%s3] sm:$0x1]
  %v554 = vlaneseq
  %v555 = vshrl.u32 %v554, 7
  %v556 = vsub.s32 0, %v555
  %v557 = vrot.slane %v552, %v556
  %v560 = vsel %vm54, %v550, 0
  %562 = vmatprep.subr.mxu0 0.0
  %563 = vmatpush1.msra.mxu0 0.0
  %564 = vmatprep.subr.mxu0 0.0
  %565 = vmatpush1.msra.mxu0 0.0
  %566 = vmatprep.subr.mxu0 0.0
  %567 = vmatpush1.msra.mxu0 0.0
  %568 = vmatprep.subr.mxu0 0.0
  %569 = vmatpush1.msra.mxu0 0.0
  %570 = vmatprep.subr.mxu0 0.0
  %571 = vmatpush1.msra.mxu0 0.0
  %572 = vmatprep.subr.mxu0 0.0
  %573 = vmatpush1.msra.mxu0 0.0
  %574 = vmatprep.subr.mxu0 0.0
  %575 = vmatpush1.msra.mxu0 0.0
  %576 = vmatprep.subr.mxu0 0.0
  %577 = vmatpush1.msra.mxu0 0.0
  %578 = vmatprep.subr.mxu0 0.0
  %579 = vmatpush1.msra.mxu0 0.0
  %580 = vmatprep.subr.mxu0 0.0
  %581 = vmatpush1.msra.mxu0 0.0
  %582 = vmatprep.subr.mxu0 0.0
  %583 = vmatpush1.msra.mxu0 0.0
  %584 = vmatprep.subr.mxu0 0.0
  %585 = vmatpush1.msra.mxu0 0.0
  %586 = vmatprep.subr.mxu0 0.0
  %587 = vmatpush1.msra.mxu0 0.0
  %588 = vmatprep.subr.mxu0 0.0
  %589 = vmatpush1.msra.mxu0 0.0
  %590 = vmatprep.subr.mxu0 0.0
  %591 = vmatpush1.msra.mxu0 0.0
  %592 = vmatprep.subr.mxu0 0.0
  %593 = vmatpush1.msra.mxu0 %v551
  %594 = vmatprep.subr.mxu0 0.0
  %595 = vmatpush2.msra.mxu0 0.0
  %596 = vmatprep.subr.mxu0 0.0
  %597 = vmatpush2.msra.mxu0 0.0
  %598 = vmatprep.subr.mxu0 0.0
  %599 = vmatpush2.msra.mxu0 0.0
  %600 = vmatprep.subr.mxu0 0.0
  %601 = vmatpush2.msra.mxu0 0.0
  %602 = vmatprep.subr.mxu0 0.0
  %603 = vmatpush2.msra.mxu0 0.0
  %604 = vmatprep.subr.mxu0 0.0
  %605 = vmatpush2.msra.mxu0 0.0
  %606 = vmatprep.subr.mxu0 0.0
  %607 = vmatpush2.msra.mxu0 0.0
  %608 = vmatprep.subr.mxu0 0.0
  %609 = vmatpush2.msra.mxu0 0.0
  %610 = vmatprep.subr.mxu0 0.0
  %611 = vmatpush2.msra.mxu0 0.0
  %612 = vmatprep.subr.mxu0 0.0
  %613 = vmatpush2.msra.mxu0 0.0
  %614 = vmatprep.subr.mxu0 0.0
  %615 = vmatpush2.msra.mxu0 0.0
  %616 = vmatprep.subr.mxu0 0.0
  %617 = vmatpush2.msra.mxu0 0.0
  %618 = vmatprep.subr.mxu0 0.0
  %619 = vmatpush2.msra.mxu0 0.0
  %620 = vmatprep.subr.mxu0 0.0
  %621 = vmatpush2.msra.mxu0 0.0
  %622 = vmatprep.subr.mxu0 0.0
  %623 = vmatpush2.msra.mxu0 0.0
  %624 = vmatprep.subr.mxu0 0.0
  %625 = vmatpush2.msra.mxu0 0.0
  %626 = vmatprep.mubr.f32.mxu0 0.0
  %627 = vmatmul.mubr.f32.gmra.mxu0 %v560
  %v628 = vpop.f32.mrf.mxu0
  %v629 = vadd.f32 %v557, %v628
  %v630 = vpop.f32.mrf.mxu0
  %631 = vdwg.mxu0
  %632 = vst [vmem:[#allocation2 + $0x30] sm:$0xff] %v629
  %s633 = scalar_lea.vmem %s0, 56
  %v634 = vld [vmem:[%s633] sm:$0xff]
  %v635 = vld [vmem:[%s1] sm:$0xff]
  %v636 = vld [vmem:[%s3] sm:$0x1]
  %v638 = vlaneseq
  %v639 = vshrl.u32 %v638, 7
  %v640 = vsub.s32 0, %v639
  %v641 = vrot.slane %v636, %v640
  %v644 = vsel %vm54, %v634, 0
  %646 = vmatprep.subr.mxu0 0.0
  %647 = vmatpush1.msra.mxu0 0.0
  %648 = vmatprep.subr.mxu0 0.0
  %649 = vmatpush1.msra.mxu0 0.0
  %650 = vmatprep.subr.mxu0 0.0
  %651 = vmatpush1.msra.mxu0 0.0
  %652 = vmatprep.subr.mxu0 0.0
  %653 = vmatpush1.msra.mxu0 0.0
  %654 = vmatprep.subr.mxu0 0.0
  %655 = vmatpush1.msra.mxu0 0.0
  %656 = vmatprep.subr.mxu0 0.0
  %657 = vmatpush1.msra.mxu0 0.0
  %658 = vmatprep.subr.mxu0 0.0
  %659 = vmatpush1.msra.mxu0 0.0
  %660 = vmatprep.subr.mxu0 0.0
  %661 = vmatpush1.msra.mxu0 0.0
  %662 = vmatprep.subr.mxu0 0.0
  %663 = vmatpush1.msra.mxu0 0.0
  %664 = vmatprep.subr.mxu0 0.0
  %665 = vmatpush1.msra.mxu0 0.0
  %666 = vmatprep.subr.mxu0 0.0
  %667 = vmatpush1.msra.mxu0 0.0
  %668 = vmatprep.subr.mxu0 0.0
  %669 = vmatpush1.msra.mxu0 0.0
  %670 = vmatprep.subr.mxu0 0.0
  %671 = vmatpush1.msra.mxu0 0.0
  %672 = vmatprep.subr.mxu0 0.0
  %673 = vmatpush1.msra.mxu0 0.0
  %674 = vmatprep.subr.mxu0 0.0
  %675 = vmatpush1.msra.mxu0 0.0
  %676 = vmatprep.subr.mxu0 0.0
  %677 = vmatpush1.msra.mxu0 %v635
  %678 = vmatprep.subr.mxu0 0.0
  %679 = vmatpush2.msra.mxu0 0.0
  %680 = vmatprep.subr.mxu0 0.0
  %681 = vmatpush2.msra.mxu0 0.0
  %682 = vmatprep.subr.mxu0 0.0
  %683 = vmatpush2.msra.mxu0 0.0
  %684 = vmatprep.subr.mxu0 0.0
  %685 = vmatpush2.msra.mxu0 0.0
  %686 = vmatprep.subr.mxu0 0.0
  %687 = vmatpush2.msra.mxu0 0.0
  %688 = vmatprep.subr.mxu0 0.0
  %689 = vmatpush2.msra.mxu0 0.0
  %690 = vmatprep.subr.mxu0 0.0
  %691 = vmatpush2.msra.mxu0 0.0
  %692 = vmatprep.subr.mxu0 0.0
  %693 = vmatpush2.msra.mxu0 0.0
  %694 = vmatprep.subr.mxu0 0.0
  %695 = vmatpush2.msra.mxu0 0.0
  %696 = vmatprep.subr.mxu0 0.0
  %697 = vmatpush2.msra.mxu0 0.0
  %698 = vmatprep.subr.mxu0 0.0
  %699 = vmatpush2.msra.mxu0 0.0
  %700 = vmatprep.subr.mxu0 0.0
  %701 = vmatpush2.msra.mxu0 0.0
  %702 = vmatprep.subr.mxu0 0.0
  %703 = vmatpush2.msra.mxu0 0.0
  %704 = vmatprep.subr.mxu0 0.0
  %705 = vmatpush2.msra.mxu0 0.0
  %706 = vmatprep.subr.mxu0 0.0
  %707 = vmatpush2.msra.mxu0 0.0
  %708 = vmatprep.subr.mxu0 0.0
  %709 = vmatpush2.msra.mxu0 0.0
  %710 = vmatprep.mubr.f32.mxu0 0.0
  %711 = vmatmul.mubr.f32.gmra.mxu0 %v644
  %v712 = vpop.f32.mrf.mxu0
  %v713 = vadd.f32 %v641, %v712
  %v714 = vpop.f32.mrf.mxu0
  %715 = vdwg.mxu0
  %716 = vst [vmem:[#allocation2 + $0x38] sm:$0xff] %v713
  %v717 = vld [vmem:[#allocation4] sm:$0xff]
  %s718 = scalar_lea.vmem [#allocation4], 8
  %v719 = vld [vmem:[%s718] sm:$0xff]
  %v720 = vld [vmem:[#allocation2] sm:$0xff]
  %v721 = vld [vmem:[%s2] sm:$0xff]
  %v722 = vld [vmem:[%s2 + $0x8] sm:$0xff]
  %v723 = vld [vmem:[%s2 + $0x10] sm:$0xff]
  %v724 = vld [vmem:[%s2 + $0x18] sm:$0xff]
  %v725 = vld [vmem:[%s2 + $0x20] sm:$0xff]
  %v726 = vld [vmem:[%s2 + $0x28] sm:$0xff]
  %v727 = vld [vmem:[%s2 + $0x30] sm:$0xff]
  %v728 = vld [vmem:[%s2 + $0x38] sm:$0xff]
  %v729 = vld [vmem:[%s2 + $0x40] sm:$0xff]
  %v730 = vld [vmem:[%s2 + $0x48] sm:$0xff]
  %v731 = vld [vmem:[%s2 + $0x50] sm:$0xff]
  %v732 = vld [vmem:[%s2 + $0x58] sm:$0xff]
  %v733 = vld [vmem:[%s2 + $0x60] sm:$0xff]
  %v734 = vld [vmem:[%s2 + $0x68] sm:$0xff]
  %v735 = vld [vmem:[%s2 + $0x70] sm:$0xff]
  %v736 = vld [vmem:[%s2 + $0x78] sm:$0xff]
  %737 = vmatprep.subr.mxu0 0.0
  %738 = vmatpush1.msra.mxu0 %v736
  %739 = vmatprep.subr.mxu0 0.0
  %740 = vmatpush1.msra.mxu0 %v735
  %741 = vmatprep.subr.mxu0 0.0
  %742 = vmatpush1.msra.mxu0 %v734
  %743 = vmatprep.subr.mxu0 0.0
  %744 = vmatpush1.msra.mxu0 %v733
  %745 = vmatprep.subr.mxu0 0.0
  %746 = vmatpush1.msra.mxu0 %v732
  %747 = vmatprep.subr.mxu0 0.0
  %748 = vmatpush1.msra.mxu0 %v731
  %749 = vmatprep.subr.mxu0 0.0
  %750 = vmatpush1.msra.mxu0 %v730
  %751 = vmatprep.subr.mxu0 0.0
  %752 = vmatpush1.msra.mxu0 %v729
  %753 = vmatprep.subr.mxu0 0.0
  %754 = vmatpush1.msra.mxu0 %v728
  %755 = vmatprep.subr.mxu0 0.0
  %756 = vmatpush1.msra.mxu0 %v727
  %757 = vmatprep.subr.mxu0 0.0
  %758 = vmatpush1.msra.mxu0 %v726
  %759 = vmatprep.subr.mxu0 0.0
  %760 = vmatpush1.msra.mxu0 %v725
  %761 = vmatprep.subr.mxu0 0.0
  %762 = vmatpush1.msra.mxu0 %v724
  %763 = vmatprep.subr.mxu0 0.0
  %764 = vmatpush1.msra.mxu0 %v723
  %765 = vmatprep.subr.mxu0 0.0
  %766 = vmatpush1.msra.mxu0 %v722
  %767 = vmatprep.subr.mxu0 0.0
  %768 = vmatpush1.msra.mxu0 %v721
  %769 = vmatprep.subr.mxu0 0.0
  %770 = vmatpush2.msra.mxu0 0.0
  %771 = vmatprep.subr.mxu0 0.0
  %772 = vmatpush2.msra.mxu0 0.0
  %773 = vmatprep.subr.mxu0 0.0
  %774 = vmatpush2.msra.mxu0 0.0
  %775 = vmatprep.subr.mxu0 0.0
  %776 = vmatpush2.msra.mxu0 0.0
  %777 = vmatprep.subr.mxu0 0.0
  %778 = vmatpush2.msra.mxu0 0.0
  %779 = vmatprep.subr.mxu0 0.0
  %780 = vmatpush2.msra.mxu0 0.0
  %781 = vmatprep.subr.mxu0 0.0
  %782 = vmatpush2.msra.mxu0 0.0
  %783 = vmatprep.subr.mxu0 0.0
  %784 = vmatpush2.msra.mxu0 0.0
  %785 = vmatprep.subr.mxu0 0.0
  %786 = vmatpush2.msra.mxu0 0.0
  %787 = vmatprep.subr.mxu0 0.0
  %788 = vmatpush2.msra.mxu0 0.0
  %789 = vmatprep.subr.mxu0 0.0
  %790 = vmatpush2.msra.mxu0 0.0
  %791 = vmatprep.subr.mxu0 0.0
  %792 = vmatpush2.msra.mxu0 0.0
  %793 = vmatprep.subr.mxu0 0.0
  %794 = vmatpush2.msra.mxu0 0.0
  %795 = vmatprep.subr.mxu0 0.0
  %796 = vmatpush2.msra.mxu0 0.0
  %797 = vmatprep.subr.mxu0 0.0
  %798 = vmatpush2.msra.mxu0 0.0
  %799 = vmatprep.subr.mxu0 0.0
  %800 = vmatpush2.msra.mxu0 0.0
  %801 = vmatprep.mubr.f32.mxu0 0.0
  %802 = vmatmul.mubr.f32.gmra.mxu0 %v717
  %v803 = vpop.f32.mrf.mxu0
  %v804 = vadd.f32 0.0, %v803
  %v805 = vpop.f32.mrf.mxu0
  %806 = vdwg.mxu0
  %v807 = vadd.f32 %v720, %v804
  %v808 = vmul.f32 %v807, 0.5
  %v809 = vtanh.pop %v808
  %v810 = vmul.f32 %v809, 0.5
  %v811 = vadd.f32 %v810, 0.5
  %v812 = vtanh.pop %v807
  %v813 = vsel %vm44, %v812, %v811
  %814 = vrot.lane.b32.xlu0 %v813, 96
  %v815 = vpop.permute.xlu0 %814
  %816 = vrot.lane.b32.xlu0 %v813, 64
  %v817 = vpop.permute.xlu0 %816
  %818 = vrot.lane.b32.xlu0 %v813, 32
  %v819 = vpop.permute.xlu0 %818
  %v820 = vmul.f32 %v815, %v719
  %v821 = vmul.f32 %v813, %v817
  %v822 = vadd.f32 %v820, %v821
  %v823 = vtanh.pop %v822
  %v824 = vmul.f32 %v819, %v823
  %825 = vst [vmem:[#allocation3] sm:$0xff] %v824
  %s826 = scalar_lea.vmem [#allocation2], 8
  %v827 = vld [vmem:[%s826] sm:$0xff]
  %v828 = vld [vmem:[%s2] sm:$0xff]
  %v829 = vld [vmem:[%s2 + $0x8] sm:$0xff]
  %v830 = vld [vmem:[%s2 + $0x10] sm:$0xff]
  %v831 = vld [vmem:[%s2 + $0x18] sm:$0xff]
  %v832 = vld [vmem:[%s2 + $0x20] sm:$0xff]
  %v833 = vld [vmem:[%s2 + $0x28] sm:$0xff]
  %v834 = vld [vmem:[%s2 + $0x30] sm:$0xff]
  %v835 = vld [vmem:[%s2 + $0x38] sm:$0xff]
  %v836 = vld [vmem:[%s2 + $0x40] sm:$0xff]
  %v837 = vld [vmem:[%s2 + $0x48] sm:$0xff]
  %v838 = vld [vmem:[%s2 + $0x50] sm:$0xff]
  %v839 = vld [vmem:[%s2 + $0x58] sm:$0xff]
  %v840 = vld [vmem:[%s2 + $0x60] sm:$0xff]
  %v841 = vld [vmem:[%s2 + $0x68] sm:$0xff]
  %v842 = vld [vmem:[%s2 + $0x70] sm:$0xff]
  %v843 = vld [vmem:[%s2 + $0x78] sm:$0xff]
  %844 = vmatprep.subr.mxu0 0.0
  %845 = vmatpush1.msra.mxu0 %v843
  %846 = vmatprep.subr.mxu0 0.0
  %847 = vmatpush1.msra.mxu0 %v842
  %848 = vmatprep.subr.mxu0 0.0
  %849 = vmatpush1.msra.mxu0 %v841
  %850 = vmatprep.subr.mxu0 0.0
  %851 = vmatpush1.msra.mxu0 %v840
  %852 = vmatprep.subr.mxu0 0.0
  %853 = vmatpush1.msra.mxu0 %v839
  %854 = vmatprep.subr.mxu0 0.0
  %855 = vmatpush1.msra.mxu0 %v838
  %856 = vmatprep.subr.mxu0 0.0
  %857 = vmatpush1.msra.mxu0 %v837
  %858 = vmatprep.subr.mxu0 0.0
  %859 = vmatpush1.msra.mxu0 %v836
  %860 = vmatprep.subr.mxu0 0.0
  %861 = vmatpush1.msra.mxu0 %v835
  %862 = vmatprep.subr.mxu0 0.0
  %863 = vmatpush1.msra.mxu0 %v834
  %864 = vmatprep.subr.mxu0 0.0
  %865 = vmatpush1.msra.mxu0 %v833
  %866 = vmatprep.subr.mxu0 0.0
  %867 = vmatpush1.msra.mxu0 %v832
  %868 = vmatprep.subr.mxu0 0.0
  %869 = vmatpush1.msra.mxu0 %v831
  %870 = vmatprep.subr.mxu0 0.0
  %871 = vmatpush1.msra.mxu0 %v830
  %872 = vmatprep.subr.mxu0 0.0
  %873 = vmatpush1.msra.mxu0 %v829
  %874 = vmatprep.subr.mxu0 0.0
  %875 = vmatpush1.msra.mxu0 %v828
  %876 = vmatprep.subr.mxu0 0.0
  %877 = vmatpush2.msra.mxu0 0.0
  %878 = vmatprep.subr.mxu0 0.0
  %879 = vmatpush2.msra.mxu0 0.0
  %880 = vmatprep.subr.mxu0 0.0
  %881 = vmatpush2.msra.mxu0 0.0
  %882 = vmatprep.subr.mxu0 0.0
  %883 = vmatpush2.msra.mxu0 0.0
  %884 = vmatprep.subr.mxu0 0.0
  %885 = vmatpush2.msra.mxu0 0.0
  %886 = vmatprep.subr.mxu0 0.0
  %887 = vmatpush2.msra.mxu0 0.0
  %888 = vmatprep.subr.mxu0 0.0
  %889 = vmatpush2.msra.mxu0 0.0
  %890 = vmatprep.subr.mxu0 0.0
  %891 = vmatpush2.msra.mxu0 0.0
  %892 = vmatprep.subr.mxu0 0.0
  %893 = vmatpush2.msra.mxu0 0.0
  %894 = vmatprep.subr.mxu0 0.0
  %895 = vmatpush2.msra.mxu0 0.0
  %896 = vmatprep.subr.mxu0 0.0
  %897 = vmatpush2.msra.mxu0 0.0
  %898 = vmatprep.subr.mxu0 0.0
  %899 = vmatpush2.msra.mxu0 0.0
  %900 = vmatprep.subr.mxu0 0.0
  %901 = vmatpush2.msra.mxu0 0.0
  %902 = vmatprep.subr.mxu0 0.0
  %903 = vmatpush2.msra.mxu0 0.0
  %904 = vmatprep.subr.mxu0 0.0
  %905 = vmatpush2.msra.mxu0 0.0
  %906 = vmatprep.subr.mxu0 0.0
  %907 = vmatpush2.msra.mxu0 0.0
  %908 = vmatprep.mubr.f32.mxu0 0.0
  %909 = vmatmul.mubr.f32.gmra.mxu0 %v824
  %v910 = vpop.f32.mrf.mxu0
  %v911 = vadd.f32 0.0, %v910
  %v912 = vpop.f32.mrf.mxu0
  %913 = vdwg.mxu0
  %v914 = vadd.f32 %v827, %v911
  %v915 = vmul.f32 %v914, 0.5
  %v916 = vtanh.pop %v915
  %v917 = vmul.f32 %v916, 0.5
  %v918 = vadd.f32 %v917, 0.5
  %v919 = vtanh.pop %v914
  %v920 = vsel %vm44, %v919, %v918
  %921 = vrot.lane.b32.xlu0 %v920, 96
  %v922 = vpop.permute.xlu0 %921
  %923 = vrot.lane.b32.xlu0 %v920, 64
  %v924 = vpop.permute.xlu0 %923
  %925 = vrot.lane.b32.xlu0 %v920, 32
  %v926 = vpop.permute.xlu0 %925
  %v927 = vmul.f32 %v922, %v822
  %v928 = vmul.f32 %v920, %v924
  %v929 = vadd.f32 %v927, %v928
  %v930 = vtanh.pop %v929
  %v931 = vmul.f32 %v926, %v930
  %s932 = scalar_lea.vmem [#allocation3], 8
  %933 = vst [vmem:[%s932] sm:$0xff] %v931
  %s934 = scalar_lea.vmem [#allocation2], 16
  %v935 = vld [vmem:[%s934] sm:$0xff]
  %v936 = vld [vmem:[%s2] sm:$0xff]
  %v937 = vld [vmem:[%s2 + $0x8] sm:$0xff]
  %v938 = vld [vmem:[%s2 + $0x10] sm:$0xff]
  %v939 = vld [vmem:[%s2 + $0x18] sm:$0xff]
  %v940 = vld [vmem:[%s2 + $0x20] sm:$0xff]
  %v941 = vld [vmem:[%s2 + $0x28] sm:$0xff]
  %v942 = vld [vmem:[%s2 + $0x30] sm:$0xff]
  %v943 = vld [vmem:[%s2 + $0x38] sm:$0xff]
  %v944 = vld [vmem:[%s2 + $0x40] sm:$0xff]
  %v945 = vld [vmem:[%s2 + $0x48] sm:$0xff]
  %v946 = vld [vmem:[%s2 + $0x50] sm:$0xff]
  %v947 = vld [vmem:[%s2 + $0x58] sm:$0xff]
  %v948 = vld [vmem:[%s2 + $0x60] sm:$0xff]
  %v949 = vld [vmem:[%s2 + $0x68] sm:$0xff]
  %v950 = vld [vmem:[%s2 + $0x70] sm:$0xff]
  %v951 = vld [vmem:[%s2 + $0x78] sm:$0xff]
  %952 = vmatprep.subr.mxu0 0.0
  %953 = vmatpush1.msra.mxu0 %v951
  %954 = vmatprep.subr.mxu0 0.0
  %955 = vmatpush1.msra.mxu0 %v950
  %956 = vmatprep.subr.mxu0 0.0
  %957 = vmatpush1.msra.mxu0 %v949
  %958 = vmatprep.subr.mxu0 0.0
  %959 = vmatpush1.msra.mxu0 %v948
  %960 = vmatprep.subr.mxu0 0.0
  %961 = vmatpush1.msra.mxu0 %v947
  %962 = vmatprep.subr.mxu0 0.0
  %963 = vmatpush1.msra.mxu0 %v946
  %964 = vmatprep.subr.mxu0 0.0
  %965 = vmatpush1.msra.mxu0 %v945
  %966 = vmatprep.subr.mxu0 0.0
  %967 = vmatpush1.msra.mxu0 %v944
  %968 = vmatprep.subr.mxu0 0.0
  %969 = vmatpush1.msra.mxu0 %v943
  %970 = vmatprep.subr.mxu0 0.0
  %971 = vmatpush1.msra.mxu0 %v942
  %972 = vmatprep.subr.mxu0 0.0
  %973 = vmatpush1.msra.mxu0 %v941
  %974 = vmatprep.subr.mxu0 0.0
  %975 = vmatpush1.msra.mxu0 %v940
  %976 = vmatprep.subr.mxu0 0.0
  %977 = vmatpush1.msra.mxu0 %v939
  %978 = vmatprep.subr.mxu0 0.0
  %979 = vmatpush1.msra.mxu0 %v938
  %980 = vmatprep.subr.mxu0 0.0
  %981 = vmatpush1.msra.mxu0 %v937
  %982 = vmatprep.subr.mxu0 0.0
  %983 = vmatpush1.msra.mxu0 %v936
  %984 = vmatprep.subr.mxu0 0.0
  %985 = vmatpush2.msra.mxu0 0.0
  %986 = vmatprep.subr.mxu0 0.0
  %987 = vmatpush2.msra.mxu0 0.0
  %988 = vmatprep.subr.mxu0 0.0
  %989 = vmatpush2.msra.mxu0 0.0
  %990 = vmatprep.subr.mxu0 0.0
  %991 = vmatpush2.msra.mxu0 0.0
  %992 = vmatprep.subr.mxu0 0.0
  %993 = vmatpush2.msra.mxu0 0.0
  %994 = vmatprep.subr.mxu0 0.0
  %995 = vmatpush2.msra.mxu0 0.0
  %996 = vmatprep.subr.mxu0 0.0
  %997 = vmatpush2.msra.mxu0 0.0
  %998 = vmatprep.subr.mxu0 0.0
  %999 = vmatpush2.msra.mxu0 0.0
  %1000 = vmatprep.subr.mxu0 0.0
  %1001 = vmatpush2.msra.mxu0 0.0
  %1002 = vmatprep.subr.mxu0 0.0
  %1003 = vmatpush2.msra.mxu0 0.0
  %1004 = vmatprep.subr.mxu0 0.0
  %1005 = vmatpush2.msra.mxu0 0.0
  %1006 = vmatprep.subr.mxu0 0.0
  %1007 = vmatpush2.msra.mxu0 0.0
  %1008 = vmatprep.subr.mxu0 0.0
  %1009 = vmatpush2.msra.mxu0 0.0
  %1010 = vmatprep.subr.mxu0 0.0
  %1011 = vmatpush2.msra.mxu0 0.0
  %1012 = vmatprep.subr.mxu0 0.0
  %1013 = vmatpush2.msra.mxu0 0.0
  %1014 = vmatprep.subr.mxu0 0.0
  %1015 = vmatpush2.msra.mxu0 0.0
  %1016 = vmatprep.mubr.f32.mxu0 0.0
  %1017 = vmatmul.mubr.f32.gmra.mxu0 %v931
  %v1018 = vpop.f32.mrf.mxu0
  %v1019 = vadd.f32 0.0, %v1018
  %v1020 = vpop.f32.mrf.mxu0
  %1021 = vdwg.mxu0
  %v1022 = vadd.f32 %v935, %v1019
  %v1023 = vmul.f32 %v1022, 0.5
  %v1024 = vtanh.pop %v1023
  %v1025 = vmul.f32 %v1024, 0.5
  %v1026 = vadd.f32 %v1025, 0.5
  %v1027 = vtanh.pop %v1022
  %v1028 = vsel %vm44, %v1027, %v1026
  %1029 = vrot.lane.b32.xlu0 %v1028, 96
  %v1030 = vpop.permute.xlu0 %1029
  %1031 = vrot.lane.b32.xlu0 %v1028, 64
  %v1032 = vpop.permute.xlu0 %1031
  %1033 = vrot.lane.b32.xlu0 %v1028, 32
  %v1034 = vpop.permute.xlu0 %1033
  %v1035 = vmul.f32 %v1030, %v929
  %v1036 = vmul.f32 %v1028, %v1032
  %v1037 = vadd.f32 %v1035, %v1036
  %v1038 = vtanh.pop %v1037
  %v1039 = vmul.f32 %v1034, %v1038
  %s1040 = scalar_lea.vmem [#allocation3], 16
  %1041 = vst [vmem:[%s1040] sm:$0xff] %v1039
  %s1042 = scalar_lea.vmem [#allocation2], 24
  %v1043 = vld [vmem:[%s1042] sm:$0xff]
  %v1044 = vld [vmem:[%s2] sm:$0xff]
  %v1045 = vld [vmem:[%s2 + $0x8] sm:$0xff]
  %v1046 = vld [vmem:[%s2 + $0x10] sm:$0xff]
  %v1047 = vld [vmem:[%s2 + $0x18] sm:$0xff]
  %v1048 = vld [vmem:[%s2 + $0x20] sm:$0xff]
  %v1049 = vld [vmem:[%s2 + $0x28] sm:$0xff]
  %v1050 = vld [vmem:[%s2 + $0x30] sm:$0xff]
  %v1051 = vld [vmem:[%s2 + $0x38] sm:$0xff]
  %v1052 = vld [vmem:[%s2 + $0x40] sm:$0xff]
  %v1053 = vld [vmem:[%s2 + $0x48] sm:$0xff]
  %v1054 = vld [vmem:[%s2 + $0x50] sm:$0xff]
  %v1055 = vld [vmem:[%s2 + $0x58] sm:$0xff]
  %v1056 = vld [vmem:[%s2 + $0x60] sm:$0xff]
  %v1057 = vld [vmem:[%s2 + $0x68] sm:$0xff]
  %v1058 = vld [vmem:[%s2 + $0x70] sm:$0xff]
  %v1059 = vld [vmem:[%s2 + $0x78] sm:$0xff]
  %1060 = vmatprep.subr.mxu0 0.0
  %1061 = vmatpush1.msra.mxu0 %v1059
  %1062 = vmatprep.subr.mxu0 0.0
  %1063 = vmatpush1.msra.mxu0 %v1058
  %1064 = vmatprep.subr.mxu0 0.0
  %1065 = vmatpush1.msra.mxu0 %v1057
  %1066 = vmatprep.subr.mxu0 0.0
  %1067 = vmatpush1.msra.mxu0 %v1056
  %1068 = vmatprep.subr.mxu0 0.0
  %1069 = vmatpush1.msra.mxu0 %v1055
  %1070 = vmatprep.subr.mxu0 0.0
  %1071 = vmatpush1.msra.mxu0 %v1054
  %1072 = vmatprep.subr.mxu0 0.0
  %1073 = vmatpush1.msra.mxu0 %v1053
  %1074 = vmatprep.subr.mxu0 0.0
  %1075 = vmatpush1.msra.mxu0 %v1052
  %1076 = vmatprep.subr.mxu0 0.0
  %1077 = vmatpush1.msra.mxu0 %v1051
  %1078 = vmatprep.subr.mxu0 0.0
  %1079 = vmatpush1.msra.mxu0 %v1050
  %1080 = vmatprep.subr.mxu0 0.0
  %1081 = vmatpush1.msra.mxu0 %v1049
  %1082 = vmatprep.subr.mxu0 0.0
  %1083 = vmatpush1.msra.mxu0 %v1048
  %1084 = vmatprep.subr.mxu0 0.0
  %1085 = vmatpush1.msra.mxu0 %v1047
  %1086 = vmatprep.subr.mxu0 0.0
  %1087 = vmatpush1.msra.mxu0 %v1046
  %1088 = vmatprep.subr.mxu0 0.0
  %1089 = vmatpush1.msra.mxu0 %v1045
  %1090 = vmatprep.subr.mxu0 0.0
  %1091 = vmatpush1.msra.mxu0 %v1044
  %1092 = vmatprep.subr.mxu0 0.0
  %1093 = vmatpush2.msra.mxu0 0.0
  %1094 = vmatprep.subr.mxu0 0.0
  %1095 = vmatpush2.msra.mxu0 0.0
  %1096 = vmatprep.subr.mxu0 0.0
  %1097 = vmatpush2.msra.mxu0 0.0
  %1098 = vmatprep.subr.mxu0 0.0
  %1099 = vmatpush2.msra.mxu0 0.0
  %1100 = vmatprep.subr.mxu0 0.0
  %1101 = vmatpush2.msra.mxu0 0.0
  %1102 = vmatprep.subr.mxu0 0.0
  %1103 = vmatpush2.msra.mxu0 0.0
  %1104 = vmatprep.subr.mxu0 0.0
  %1105 = vmatpush2.msra.mxu0 0.0
  %1106 = vmatprep.subr.mxu0 0.0
  %1107 = vmatpush2.msra.mxu0 0.0
  %1108 = vmatprep.subr.mxu0 0.0
  %1109 = vmatpush2.msra.mxu0 0.0
  %1110 = vmatprep.subr.mxu0 0.0
  %1111 = vmatpush2.msra.mxu0 0.0
  %1112 = vmatprep.subr.mxu0 0.0
  %1113 = vmatpush2.msra.mxu0 0.0
  %1114 = vmatprep.subr.mxu0 0.0
  %1115 = vmatpush2.msra.mxu0 0.0
  %1116 = vmatprep.subr.mxu0 0.0
  %1117 = vmatpush2.msra.mxu0 0.0
  %1118 = vmatprep.subr.mxu0 0.0
  %1119 = vmatpush2.msra.mxu0 0.0
  %1120 = vmatprep.subr.mxu0 0.0
  %1121 = vmatpush2.msra.mxu0 0.0
  %1122 = vmatprep.subr.mxu0 0.0
  %1123 = vmatpush2.msra.mxu0 0.0
  %1124 = vmatprep.mubr.f32.mxu0 0.0
  %1125 = vmatmul.mubr.f32.gmra.mxu0 %v1039
  %v1126 = vpop.f32.mrf.mxu0
  %v1127 = vadd.f32 0.0, %v1126
  %v1128 = vpop.f32.mrf.mxu0
  %1129 = vdwg.mxu0
  %v1130 = vadd.f32 %v1043, %v1127
  %v1131 = vmul.f32 %v1130, 0.5
  %v1132 = vtanh.pop %v1131
  %v1133 = vmul.f32 %v1132, 0.5
  %v1134 = vadd.f32 %v1133, 0.5
  %v1135 = vtanh.pop %v1130
  %v1136 = vsel %vm44, %v1135, %v1134
  %1137 = vrot.lane.b32.xlu0 %v1136, 96
  %v1138 = vpop.permute.xlu0 %1137
  %1139 = vrot.lane.b32.xlu0 %v1136, 64
  %v1140 = vpop.permute.xlu0 %1139
  %1141 = vrot.lane.b32.xlu0 %v1136, 32
  %v1142 = vpop.permute.xlu0 %1141
  %v1143 = vmul.f32 %v1138, %v1037
  %v1144 = vmul.f32 %v1136, %v1140
  %v1145 = vadd.f32 %v1143, %v1144
  %v1146 = vtanh.pop %v1145
  %v1147 = vmul.f32 %v1142, %v1146
  %s1148 = scalar_lea.vmem [#allocation3], 24
  %1149 = vst [vmem:[%s1148] sm:$0xff] %v1147
  %s1150 = scalar_lea.vmem [#allocation2], 32
  %v1151 = vld [vmem:[%s1150] sm:$0xff]
  %v1152 = vld [vmem:[%s2] sm:$0xff]
  %v1153 = vld [vmem:[%s2 + $0x8] sm:$0xff]
  %v1154 = vld [vmem:[%s2 + $0x10] sm:$0xff]
  %v1155 = vld [vmem:[%s2 + $0x18] sm:$0xff]
  %v1156 = vld [vmem:[%s2 + $0x20] sm:$0xff]
  %v1157 = vld [vmem:[%s2 + $0x28] sm:$0xff]
  %v1158 = vld [vmem:[%s2 + $0x30] sm:$0xff]
  %v1159 = vld [vmem:[%s2 + $0x38] sm:$0xff]
  %v1160 = vld [vmem:[%s2 + $0x40] sm:$0xff]
  %v1161 = vld [vmem:[%s2 + $0x48] sm:$0xff]
  %v1162 = vld [vmem:[%s2 + $0x50] sm:$0xff]
  %v1163 = vld [vmem:[%s2 + $0x58] sm:$0xff]
  %v1164 = vld [vmem:[%s2 + $0x60] sm:$0xff]
  %v1165 = vld [vmem:[%s2 + $0x68] sm:$0xff]
  %v1166 = vld [vmem:[%s2 + $0x70] sm:$0xff]
  %v1167 = vld [vmem:[%s2 + $0x78] sm:$0xff]
  %1168 = vmatprep.subr.mxu0 0.0
  %1169 = vmatpush1.msra.mxu0 %v1167
  %1170 = vmatprep.subr.mxu0 0.0
  %1171 = vmatpush1.msra.mxu0 %v1166
  %1172 = vmatprep.subr.mxu0 0.0
  %1173 = vmatpush1.msra.mxu0 %v1165
  %1174 = vmatprep.subr.mxu0 0.0
  %1175 = vmatpush1.msra.mxu0 %v1164
  %1176 = vmatprep.subr.mxu0 0.0
  %1177 = vmatpush1.msra.mxu0 %v1163
  %1178 = vmatprep.subr.mxu0 0.0
  %1179 = vmatpush1.msra.mxu0 %v1162
  %1180 = vmatprep.subr.mxu0 0.0
  %1181 = vmatpush1.msra.mxu0 %v1161
  %1182 = vmatprep.subr.mxu0 0.0
  %1183 = vmatpush1.msra.mxu0 %v1160
  %1184 = vmatprep.subr.mxu0 0.0
  %1185 = vmatpush1.msra.mxu0 %v1159
  %1186 = vmatprep.subr.mxu0 0.0
  %1187 = vmatpush1.msra.mxu0 %v1158
  %1188 = vmatprep.subr.mxu0 0.0
  %1189 = vmatpush1.msra.mxu0 %v1157
  %1190 = vmatprep.subr.mxu0 0.0
  %1191 = vmatpush1.msra.mxu0 %v1156
  %1192 = vmatprep.subr.mxu0 0.0
  %1193 = vmatpush1.msra.mxu0 %v1155
  %1194 = vmatprep.subr.mxu0 0.0
  %1195 = vmatpush1.msra.mxu0 %v1154
  %1196 = vmatprep.subr.mxu0 0.0
  %1197 = vmatpush1.msra.mxu0 %v1153
  %1198 = vmatprep.subr.mxu0 0.0
  %1199 = vmatpush1.msra.mxu0 %v1152
  %1200 = vmatprep.subr.mxu0 0.0
  %1201 = vmatpush2.msra.mxu0 0.0
  %1202 = vmatprep.subr.mxu0 0.0
  %1203 = vmatpush2.msra.mxu0 0.0
  %1204 = vmatprep.subr.mxu0 0.0
  %1205 = vmatpush2.msra.mxu0 0.0
  %1206 = vmatprep.subr.mxu0 0.0
  %1207 = vmatpush2.msra.mxu0 0.0
  %1208 = vmatprep.subr.mxu0 0.0
  %1209 = vmatpush2.msra.mxu0 0.0
  %1210 = vmatprep.subr.mxu0 0.0
  %1211 = vmatpush2.msra.mxu0 0.0
  %1212 = vmatprep.subr.mxu0 0.0
  %1213 = vmatpush2.msra.mxu0 0.0
  %1214 = vmatprep.subr.mxu0 0.0
  %1215 = vmatpush2.msra.mxu0 0.0
  %1216 = vmatprep.subr.mxu0 0.0
  %1217 = vmatpush2.msra.mxu0 0.0
  %1218 = vmatprep.subr.mxu0 0.0
  %1219 = vmatpush2.msra.mxu0 0.0
  %1220 = vmatprep.subr.mxu0 0.0
  %1221 = vmatpush2.msra.mxu0 0.0
  %1222 = vmatprep.subr.mxu0 0.0
  %1223 = vmatpush2.msra.mxu0 0.0
  %1224 = vmatprep.subr.mxu0 0.0
  %1225 = vmatpush2.msra.mxu0 0.0
  %1226 = vmatprep.subr.mxu0 0.0
  %1227 = vmatpush2.msra.mxu0 0.0
  %1228 = vmatprep.subr.mxu0 0.0
  %1229 = vmatpush2.msra.mxu0 0.0
  %1230 = vmatprep.subr.mxu0 0.0
  %1231 = vmatpush2.msra.mxu0 0.0
  %1232 = vmatprep.mubr.f32.mxu0 0.0
  %1233 = vmatmul.mubr.f32.gmra.mxu0 %v1147
  %v1234 = vpop.f32.mrf.mxu0
  %v1235 = vadd.f32 0.0, %v1234
  %v1236 = vpop.f32.mrf.mxu0
  %1237 = vdwg.mxu0
  %v1238 = vadd.f32 %v1151, %v1235
  %v1239 = vmul.f32 %v1238, 0.5
  %v1240 = vtanh.pop %v1239
  %v1241 = vmul.f32 %v1240, 0.5
  %v1242 = vadd.f32 %v1241, 0.5
  %v1243 = vtanh.pop %v1238
  %v1244 = vsel %vm44, %v1243, %v1242
  %1245 = vrot.lane.b32.xlu0 %v1244, 96
  %v1246 = vpop.permute.xlu0 %1245
  %1247 = vrot.lane.b32.xlu0 %v1244, 64
  %v1248 = vpop.permute.xlu0 %1247
  %1249 = vrot.lane.b32.xlu0 %v1244, 32
  %v1250 = vpop.permute.xlu0 %1249
  %v1251 = vmul.f32 %v1246, %v1145
  %v1252 = vmul.f32 %v1244, %v1248
  %v1253 = vadd.f32 %v1251, %v1252
  %v1254 = vtanh.pop %v1253
  %v1255 = vmul.f32 %v1250, %v1254
  %s1256 = scalar_lea.vmem [#allocation3], 32
  %1257 = vst [vmem:[%s1256] sm:$0xff] %v1255
  %s1258 = scalar_lea.vmem [#allocation2], 40
  %v1259 = vld [vmem:[%s1258] sm:$0xff]
  %v1260 = vld [vmem:[%s2] sm:$0xff]
  %v1261 = vld [vmem:[%s2 + $0x8] sm:$0xff]
  %v1262 = vld [vmem:[%s2 + $0x10] sm:$0xff]
  %v1263 = vld [vmem:[%s2 + $0x18] sm:$0xff]
  %v1264 = vld [vmem:[%s2 + $0x20] sm:$0xff]
  %v1265 = vld [vmem:[%s2 + $0x28] sm:$0xff]
  %v1266 = vld [vmem:[%s2 + $0x30] sm:$0xff]
  %v1267 = vld [vmem:[%s2 + $0x38] sm:$0xff]
  %v1268 = vld [vmem:[%s2 + $0x40] sm:$0xff]
  %v1269 = vld [vmem:[%s2 + $0x48] sm:$0xff]
  %v1270 = vld [vmem:[%s2 + $0x50] sm:$0xff]
  %v1271 = vld [vmem:[%s2 + $0x58] sm:$0xff]
  %v1272 = vld [vmem:[%s2 + $0x60] sm:$0xff]
  %v1273 = vld [vmem:[%s2 + $0x68] sm:$0xff]
  %v1274 = vld [vmem:[%s2 + $0x70] sm:$0xff]
  %v1275 = vld [vmem:[%s2 + $0x78] sm:$0xff]
  %1276 = vmatprep.subr.mxu0 0.0
  %1277 = vmatpush1.msra.mxu0 %v1275
  %1278 = vmatprep.subr.mxu0 0.0
  %1279 = vmatpush1.msra.mxu0 %v1274
  %1280 = vmatprep.subr.mxu0 0.0
  %1281 = vmatpush1.msra.mxu0 %v1273
  %1282 = vmatprep.subr.mxu0 0.0
  %1283 = vmatpush1.msra.mxu0 %v1272
  %1284 = vmatprep.subr.mxu0 0.0
  %1285 = vmatpush1.msra.mxu0 %v1271
  %1286 = vmatprep.subr.mxu0 0.0
  %1287 = vmatpush1.msra.mxu0 %v1270
  %1288 = vmatprep.subr.mxu0 0.0
  %1289 = vmatpush1.msra.mxu0 %v1269
  %1290 = vmatprep.subr.mxu0 0.0
  %1291 = vmatpush1.msra.mxu0 %v1268
  %1292 = vmatprep.subr.mxu0 0.0
  %1293 = vmatpush1.msra.mxu0 %v1267
  %1294 = vmatprep.subr.mxu0 0.0
  %1295 = vmatpush1.msra.mxu0 %v1266
  %1296 = vmatprep.subr.mxu0 0.0
  %1297 = vmatpush1.msra.mxu0 %v1265
  %1298 = vmatprep.subr.mxu0 0.0
  %1299 = vmatpush1.msra.mxu0 %v1264
  %1300 = vmatprep.subr.mxu0 0.0
  %1301 = vmatpush1.msra.mxu0 %v1263
  %1302 = vmatprep.subr.mxu0 0.0
  %1303 = vmatpush1.msra.mxu0 %v1262
  %1304 = vmatprep.subr.mxu0 0.0
  %1305 = vmatpush1.msra.mxu0 %v1261
  %1306 = vmatprep.subr.mxu0 0.0
  %1307 = vmatpush1.msra.mxu0 %v1260
  %1308 = vmatprep.subr.mxu0 0.0
  %1309 = vmatpush2.msra.mxu0 0.0
  %1310 = vmatprep.subr.mxu0 0.0
  %1311 = vmatpush2.msra.mxu0 0.0
  %1312 = vmatprep.subr.mxu0 0.0
  %1313 = vmatpush2.msra.mxu0 0.0
  %1314 = vmatprep.subr.mxu0 0.0
  %1315 = vmatpush2.msra.mxu0 0.0
  %1316 = vmatprep.subr.mxu0 0.0
  %1317 = vmatpush2.msra.mxu0 0.0
  %1318 = vmatprep.subr.mxu0 0.0
  %1319 = vmatpush2.msra.mxu0 0.0
  %1320 = vmatprep.subr.mxu0 0.0
  %1321 = vmatpush2.msra.mxu0 0.0
  %1322 = vmatprep.subr.mxu0 0.0
  %1323 = vmatpush2.msra.mxu0 0.0
  %1324 = vmatprep.subr.mxu0 0.0
  %1325 = vmatpush2.msra.mxu0 0.0
  %1326 = vmatprep.subr.mxu0 0.0
  %1327 = vmatpush2.msra.mxu0 0.0
  %1328 = vmatprep.subr.mxu0 0.0
  %1329 = vmatpush2.msra.mxu0 0.0
  %1330 = vmatprep.subr.mxu0 0.0
  %1331 = vmatpush2.msra.mxu0 0.0
  %1332 = vmatprep.subr.mxu0 0.0
  %1333 = vmatpush2.msra.mxu0 0.0
  %1334 = vmatprep.subr.mxu0 0.0
  %1335 = vmatpush2.msra.mxu0 0.0
  %1336 = vmatprep.subr.mxu0 0.0
  %1337 = vmatpush2.msra.mxu0 0.0
  %1338 = vmatprep.subr.mxu0 0.0
  %1339 = vmatpush2.msra.mxu0 0.0
  %1340 = vmatprep.mubr.f32.mxu0 0.0
  %1341 = vmatmul.mubr.f32.gmra.mxu0 %v1255
  %v1342 = vpop.f32.mrf.mxu0
  %v1343 = vadd.f32 0.0, %v1342
  %v1344 = vpop.f32.mrf.mxu0
  %1345 = vdwg.mxu0
  %v1346 = vadd.f32 %v1259, %v1343
  %v1347 = vmul.f32 %v1346, 0.5
  %v1348 = vtanh.pop %v1347
  %v1349 = vmul.f32 %v1348, 0.5
  %v1350 = vadd.f32 %v1349, 0.5
  %v1351 = vtanh.pop %v1346
  %v1352 = vsel %vm44, %v1351, %v1350
  %1353 = vrot.lane.b32.xlu0 %v1352, 96
  %v1354 = vpop.permute.xlu0 %1353
  %1355 = vrot.lane.b32.xlu0 %v1352, 64
  %v1356 = vpop.permute.xlu0 %1355
  %1357 = vrot.lane.b32.xlu0 %v1352, 32
  %v1358 = vpop.permute.xlu0 %1357
  %v1359 = vmul.f32 %v1354, %v1253
  %v1360 = vmul.f32 %v1352, %v1356
  %v1361 = vadd.f32 %v1359, %v1360
  %v1362 = vtanh.pop %v1361
  %v1363 = vmul.f32 %v1358, %v1362
  %s1364 = scalar_lea.vmem [#allocation3], 40
  %1365 = vst [vmem:[%s1364] sm:$0xff] %v1363
  %s1366 = scalar_lea.vmem [#allocation2], 48
  %v1367 = vld [vmem:[%s1366] sm:$0xff]
  %v1368 = vld [vmem:[%s2] sm:$0xff]
  %v1369 = vld [vmem:[%s2 + $0x8] sm:$0xff]
  %v1370 = vld [vmem:[%s2 + $0x10] sm:$0xff]
  %v1371 = vld [vmem:[%s2 + $0x18] sm:$0xff]
  %v1372 = vld [vmem:[%s2 + $0x20] sm:$0xff]
  %v1373 = vld [vmem:[%s2 + $0x28] sm:$0xff]
  %v1374 = vld [vmem:[%s2 + $0x30] sm:$0xff]
  %v1375 = vld [vmem:[%s2 + $0x38] sm:$0xff]
  %v1376 = vld [vmem:[%s2 + $0x40] sm:$0xff]
  %v1377 = vld [vmem:[%s2 + $0x48] sm:$0xff]
  %v1378 = vld [vmem:[%s2 + $0x50] sm:$0xff]
  %v1379 = vld [vmem:[%s2 + $0x58] sm:$0xff]
  %v1380 = vld [vmem:[%s2 + $0x60] sm:$0xff]
  %v1381 = vld [vmem:[%s2 + $0x68] sm:$0xff]
  %v1382 = vld [vmem:[%s2 + $0x70] sm:$0xff]
  %v1383 = vld [vmem:[%s2 + $0x78] sm:$0xff]
  %1384 = vmatprep.subr.mxu0 0.0
  %1385 = vmatpush1.msra.mxu0 %v1383
  %1386 = vmatprep.subr.mxu0 0.0
  %1387 = vmatpush1.msra.mxu0 %v1382
  %1388 = vmatprep.subr.mxu0 0.0
  %1389 = vmatpush1.msra.mxu0 %v1381
  %1390 = vmatprep.subr.mxu0 0.0
  %1391 = vmatpush1.msra.mxu0 %v1380
  %1392 = vmatprep.subr.mxu0 0.0
  %1393 = vmatpush1.msra.mxu0 %v1379
  %1394 = vmatprep.subr.mxu0 0.0
  %1395 = vmatpush1.msra.mxu0 %v1378
  %1396 = vmatprep.subr.mxu0 0.0
  %1397 = vmatpush1.msra.mxu0 %v1377
  %1398 = vmatprep.subr.mxu0 0.0
  %1399 = vmatpush1.msra.mxu0 %v1376
  %1400 = vmatprep.subr.mxu0 0.0
  %1401 = vmatpush1.msra.mxu0 %v1375
  %1402 = vmatprep.subr.mxu0 0.0
  %1403 = vmatpush1.msra.mxu0 %v1374
  %1404 = vmatprep.subr.mxu0 0.0
  %1405 = vmatpush1.msra.mxu0 %v1373
  %1406 = vmatprep.subr.mxu0 0.0
  %1407 = vmatpush1.msra.mxu0 %v1372
  %1408 = vmatprep.subr.mxu0 0.0
  %1409 = vmatpush1.msra.mxu0 %v1371
  %1410 = vmatprep.subr.mxu0 0.0
  %1411 = vmatpush1.msra.mxu0 %v1370
  %1412 = vmatprep.subr.mxu0 0.0
  %1413 = vmatpush1.msra.mxu0 %v1369
  %1414 = vmatprep.subr.mxu0 0.0
  %1415 = vmatpush1.msra.mxu0 %v1368
  %1416 = vmatprep.subr.mxu0 0.0
  %1417 = vmatpush2.msra.mxu0 0.0
  %1418 = vmatprep.subr.mxu0 0.0
  %1419 = vmatpush2.msra.mxu0 0.0
  %1420 = vmatprep.subr.mxu0 0.0
  %1421 = vmatpush2.msra.mxu0 0.0
  %1422 = vmatprep.subr.mxu0 0.0
  %1423 = vmatpush2.msra.mxu0 0.0
  %1424 = vmatprep.subr.mxu0 0.0
  %1425 = vmatpush2.msra.mxu0 0.0
  %1426 = vmatprep.subr.mxu0 0.0
  %1427 = vmatpush2.msra.mxu0 0.0
  %1428 = vmatprep.subr.mxu0 0.0
  %1429 = vmatpush2.msra.mxu0 0.0
  %1430 = vmatprep.subr.mxu0 0.0
  %1431 = vmatpush2.msra.mxu0 0.0
  %1432 = vmatprep.subr.mxu0 0.0
  %1433 = vmatpush2.msra.mxu0 0.0
  %1434 = vmatprep.subr.mxu0 0.0
  %1435 = vmatpush2.msra.mxu0 0.0
  %1436 = vmatprep.subr.mxu0 0.0
  %1437 = vmatpush2.msra.mxu0 0.0
  %1438 = vmatprep.subr.mxu0 0.0
  %1439 = vmatpush2.msra.mxu0 0.0
  %1440 = vmatprep.subr.mxu0 0.0
  %1441 = vmatpush2.msra.mxu0 0.0
  %1442 = vmatprep.subr.mxu0 0.0
  %1443 = vmatpush2.msra.mxu0 0.0
  %1444 = vmatprep.subr.mxu0 0.0
  %1445 = vmatpush2.msra.mxu0 0.0
  %1446 = vmatprep.subr.mxu0 0.0
  %1447 = vmatpush2.msra.mxu0 0.0
  %1448 = vmatprep.mubr.f32.mxu0 0.0
  %1449 = vmatmul.mubr.f32.gmra.mxu0 %v1363
  %v1450 = vpop.f32.mrf.mxu0
  %v1451 = vadd.f32 0.0, %v1450
  %v1452 = vpop.f32.mrf.mxu0
  %1453 = vdwg.mxu0
  %v1454 = vadd.f32 %v1367, %v1451
  %v1455 = vmul.f32 %v1454, 0.5
  %v1456 = vtanh.pop %v1455
  %v1457 = vmul.f32 %v1456, 0.5
  %v1458 = vadd.f32 %v1457, 0.5
  %v1459 = vtanh.pop %v1454
  %v1460 = vsel %vm44, %v1459, %v1458
  %1461 = vrot.lane.b32.xlu0 %v1460, 96
  %v1462 = vpop.permute.xlu0 %1461
  %1463 = vrot.lane.b32.xlu0 %v1460, 64
  %v1464 = vpop.permute.xlu0 %1463
  %1465 = vrot.lane.b32.xlu0 %v1460, 32
  %v1466 = vpop.permute.xlu0 %1465
  %v1467 = vmul.f32 %v1462, %v1361
  %v1468 = vmul.f32 %v1460, %v1464
  %v1469 = vadd.f32 %v1467, %v1468
  %v1470 = vtanh.pop %v1469
  %v1471 = vmul.f32 %v1466, %v1470
  %s1472 = scalar_lea.vmem [#allocation3], 48
  %1473 = vst [vmem:[%s1472] sm:$0xff] %v1471
  %s1474 = scalar_lea.vmem [#allocation2], 56
  %v1475 = vld [vmem:[%s1474] sm:$0xff]
  %v1476 = vld [vmem:[%s2] sm:$0xff]
  %v1477 = vld [vmem:[%s2 + $0x8] sm:$0xff]
  %v1478 = vld [vmem:[%s2 + $0x10] sm:$0xff]
  %v1479 = vld [vmem:[%s2 + $0x18] sm:$0xff]
  %v1480 = vld [vmem:[%s2 + $0x20] sm:$0xff]
  %v1481 = vld [vmem:[%s2 + $0x28] sm:$0xff]
  %v1482 = vld [vmem:[%s2 + $0x30] sm:$0xff]
  %v1483 = vld [vmem:[%s2 + $0x38] sm:$0xff]
  %v1484 = vld [vmem:[%s2 + $0x40] sm:$0xff]
  %v1485 = vld [vmem:[%s2 + $0x48] sm:$0xff]
  %v1486 = vld [vmem:[%s2 + $0x50] sm:$0xff]
  %v1487 = vld [vmem:[%s2 + $0x58] sm:$0xff]
  %v1488 = vld [vmem:[%s2 + $0x60] sm:$0xff]
  %v1489 = vld [vmem:[%s2 + $0x68] sm:$0xff]
  %v1490 = vld [vmem:[%s2 + $0x70] sm:$0xff]
  %v1491 = vld [vmem:[%s2 + $0x78] sm:$0xff]
  %1492 = vmatprep.subr.mxu0 0.0
  %1493 = vmatpush1.msra.mxu0 %v1491
  %1494 = vmatprep.subr.mxu0 0.0
  %1495 = vmatpush1.msra.mxu0 %v1490
  %1496 = vmatprep.subr.mxu0 0.0
  %1497 = vmatpush1.msra.mxu0 %v1489
  %1498 = vmatprep.subr.mxu0 0.0
  %1499 = vmatpush1.msra.mxu0 %v1488
  %1500 = vmatprep.subr.mxu0 0.0
  %1501 = vmatpush1.msra.mxu0 %v1487
  %1502 = vmatprep.subr.mxu0 0.0
  %1503 = vmatpush1.msra.mxu0 %v1486
  %1504 = vmatprep.subr.mxu0 0.0
  %1505 = vmatpush1.msra.mxu0 %v1485
  %1506 = vmatprep.subr.mxu0 0.0
  %1507 = vmatpush1.msra.mxu0 %v1484
  %1508 = vmatprep.subr.mxu0 0.0
  %1509 = vmatpush1.msra.mxu0 %v1483
  %1510 = vmatprep.subr.mxu0 0.0
  %1511 = vmatpush1.msra.mxu0 %v1482
  %1512 = vmatprep.subr.mxu0 0.0
  %1513 = vmatpush1.msra.mxu0 %v1481
  %1514 = vmatprep.subr.mxu0 0.0
  %1515 = vmatpush1.msra.mxu0 %v1480
  %1516 = vmatprep.subr.mxu0 0.0
  %1517 = vmatpush1.msra.mxu0 %v1479
  %1518 = vmatprep.subr.mxu0 0.0
  %1519 = vmatpush1.msra.mxu0 %v1478
  %1520 = vmatprep.subr.mxu0 0.0
  %1521 = vmatpush1.msra.mxu0 %v1477
  %1522 = vmatprep.subr.mxu0 0.0
  %1523 = vmatpush1.msra.mxu0 %v1476
  %1524 = vmatprep.subr.mxu0 0.0
  %1525 = vmatpush2.msra.mxu0 0.0
  %1526 = vmatprep.subr.mxu0 0.0
  %1527 = vmatpush2.msra.mxu0 0.0
  %1528 = vmatprep.subr.mxu0 0.0
  %1529 = vmatpush2.msra.mxu0 0.0
  %1530 = vmatprep.subr.mxu0 0.0
  %1531 = vmatpush2.msra.mxu0 0.0
  %1532 = vmatprep.subr.mxu0 0.0
  %1533 = vmatpush2.msra.mxu0 0.0
  %1534 = vmatprep.subr.mxu0 0.0
  %1535 = vmatpush2.msra.mxu0 0.0
  %1536 = vmatprep.subr.mxu0 0.0
  %1537 = vmatpush2.msra.mxu0 0.0
  %1538 = vmatprep.subr.mxu0 0.0
  %1539 = vmatpush2.msra.mxu0 0.0
  %1540 = vmatprep.subr.mxu0 0.0
  %1541 = vmatpush2.msra.mxu0 0.0
  %1542 = vmatprep.subr.mxu0 0.0
  %1543 = vmatpush2.msra.mxu0 0.0
  %1544 = vmatprep.subr.mxu0 0.0
  %1545 = vmatpush2.msra.mxu0 0.0
  %1546 = vmatprep.subr.mxu0 0.0
  %1547 = vmatpush2.msra.mxu0 0.0
  %1548 = vmatprep.subr.mxu0 0.0
  %1549 = vmatpush2.msra.mxu0 0.0
  %1550 = vmatprep.subr.mxu0 0.0
  %1551 = vmatpush2.msra.mxu0 0.0
  %1552 = vmatprep.subr.mxu0 0.0
  %1553 = vmatpush2.msra.mxu0 0.0
  %1554 = vmatprep.subr.mxu0 0.0
  %1555 = vmatpush2.msra.mxu0 0.0
  %1556 = vmatprep.mubr.f32.mxu0 0.0
  %1557 = vmatmul.mubr.f32.gmra.mxu0 %v1471
  %v1558 = vpop.f32.mrf.mxu0
  %v1559 = vadd.f32 0.0, %v1558
  %v1560 = vpop.f32.mrf.mxu0
  %1561 = vdwg.mxu0
  %v1562 = vadd.f32 %v1475, %v1559
  %v1563 = vmul.f32 %v1562, 0.5
  %v1564 = vtanh.pop %v1563
  %v1565 = vmul.f32 %v1564, 0.5
  %v1566 = vadd.f32 %v1565, 0.5
  %v1567 = vtanh.pop %v1562
  %v1568 = vsel %vm44, %v1567, %v1566
  %1569 = vrot.lane.b32.xlu0 %v1568, 96
  %v1570 = vpop.permute.xlu0 %1569
  %1571 = vrot.lane.b32.xlu0 %v1568, 64
  %v1572 = vpop.permute.xlu0 %1571
  %1573 = vrot.lane.b32.xlu0 %v1568, 32
  %v1574 = vpop.permute.xlu0 %1573
  %v1575 = vmul.f32 %v1570, %v1469
  %v1576 = vmul.f32 %v1568, %v1572
  %v1577 = vadd.f32 %v1575, %v1576
  %v1578 = vtanh.pop %v1577
  %v1579 = vmul.f32 %v1574, %v1578
  %s1580 = scalar_lea.vmem [#allocation3], 56
  %1581 = vst [vmem:[%s1580] sm:$0xff] %v1579
  %1582 = vst [vmem:[#allocation4] sm:$0xff] %v1579
  %1583 = vst [vmem:[%s718] sm:$0xff] %v1577
  %v1584 = vld [vmem:[#allocation3] sm:$0xff]
  %v1585 = vld [vmem:[#allocation3 + $0x8] sm:$0xff]
  %v1586 = vld [vmem:[#allocation3 + $0x10] sm:$0xff]
  %v1587 = vld [vmem:[#allocation3 + $0x18] sm:$0xff]
  %v1588 = vld [vmem:[#allocation3 + $0x20] sm:$0xff]
  %v1589 = vld [vmem:[#allocation3 + $0x28] sm:$0xff]
  %v1590 = vld [vmem:[#allocation3 + $0x30] sm:$0xff]
  %v1591 = vld [vmem:[#allocation3 + $0x38] sm:$0xff]
  %v1592 = vld [vmem:[%s4] sm:$0xff]
  %v1593 = vld [vmem:[%s4 + $0x8] sm:$0xff]
  %v1594 = vld [vmem:[%s4 + $0x10] sm:$0xff]
  %v1595 = vld [vmem:[%s4 + $0x18] sm:$0xff]
  %v1596 = vld [vmem:[%s4 + $0x20] sm:$0xff]
  %v1597 = vld [vmem:[%s4 + $0x28] sm:$0xff]
  %v1598 = vld [vmem:[%s4 + $0x30] sm:$0xff]
  %v1599 = vld [vmem:[%s4 + $0x38] sm:$0xff]
  %v1600 = vld [vmem:[%s4 + $0x40] sm:$0xff]
  %v1601 = vld [vmem:[%s4 + $0x48] sm:$0xff]
  %v1602 = vld [vmem:[%s4 + $0x50] sm:$0xff]
  %v1603 = vld [vmem:[%s4 + $0x58] sm:$0xff]
  %v1604 = vld [vmem:[%s4 + $0x60] sm:$0xff]
  %v1605 = vld [vmem:[%s4 + $0x68] sm:$0xff]
  %v1606 = vld [vmem:[%s4 + $0x70] sm:$0xff]
  %v1607 = vld [vmem:[%s4 + $0x78] sm:$0xff]
  %v1608 = vld [vmem:[%s6] sm:$0x1]
  %v1610 = vlaneseq
  %v1611 = vshrl.u32 %v1610, 7
  %v1612 = vsub.s32 0, %v1611
  %v1613 = vrot.slane %v1608, %v1612
  %1615 = vmatprep.subr.mxu0 0.0
  %1616 = vmatpush1.msra.mxu0 %v1607
  %1617 = vmatprep.subr.mxu0 0.0
  %1618 = vmatpush1.msra.mxu0 %v1606
  %1619 = vmatprep.subr.mxu0 0.0
  %1620 = vmatpush1.msra.mxu0 %v1605
  %1621 = vmatprep.subr.mxu0 0.0
  %1622 = vmatpush1.msra.mxu0 %v1604
  %1623 = vmatprep.subr.mxu0 0.0
  %1624 = vmatpush1.msra.mxu0 %v1603
  %1625 = vmatprep.subr.mxu0 0.0
  %1626 = vmatpush1.msra.mxu0 %v1602
  %1627 = vmatprep.subr.mxu0 0.0
  %1628 = vmatpush1.msra.mxu0 %v1601
  %1629 = vmatprep.subr.mxu0 0.0
  %1630 = vmatpush1.msra.mxu0 %v1600
  %1631 = vmatprep.subr.mxu0 0.0
  %1632 = vmatpush1.msra.mxu0 %v1599
  %1633 = vmatprep.subr.mxu0 0.0
  %1634 = vmatpush1.msra.mxu0 %v1598
  %1635 = vmatprep.subr.mxu0 0.0
  %1636 = vmatpush1.msra.mxu0 %v1597
  %1637 = vmatprep.subr.mxu0 0.0
  %1638 = vmatpush1.msra.mxu0 %v1596
  %1639 = vmatprep.subr.mxu0 0.0
  %1640 = vmatpush1.msra.mxu0 %v1595
  %1641 = vmatprep.subr.mxu0 0.0
  %1642 = vmatpush1.msra.mxu0 %v1594
  %1643 = vmatprep.subr.mxu0 0.0
  %1644 = vmatpush1.msra.mxu0 %v1593
  %1645 = vmatprep.subr.mxu0 0.0
  %1646 = vmatpush1.msra.mxu0 %v1592
  %1647 = vmatprep.subr.mxu0 0.0
  %1648 = vmatpush2.msra.mxu0 0.0
  %1649 = vmatprep.subr.mxu0 0.0
  %1650 = vmatpush2.msra.mxu0 0.0
  %1651 = vmatprep.subr.mxu0 0.0
  %1652 = vmatpush2.msra.mxu0 0.0
  %1653 = vmatprep.subr.mxu0 0.0
  %1654 = vmatpush2.msra.mxu0 0.0
  %1655 = vmatprep.subr.mxu0 0.0
  %1656 = vmatpush2.msra.mxu0 0.0
  %1657 = vmatprep.subr.mxu0 0.0
  %1658 = vmatpush2.msra.mxu0 0.0
  %1659 = vmatprep.subr.mxu0 0.0
  %1660 = vmatpush2.msra.mxu0 0.0
  %1661 = vmatprep.subr.mxu0 0.0
  %1662 = vmatpush2.msra.mxu0 0.0
  %1663 = vmatprep.subr.mxu0 0.0
  %1664 = vmatpush2.msra.mxu0 0.0
  %1665 = vmatprep.subr.mxu0 0.0
  %1666 = vmatpush2.msra.mxu0 0.0
  %1667 = vmatprep.subr.mxu0 0.0
  %1668 = vmatpush2.msra.mxu0 0.0
  %1669 = vmatprep.subr.mxu0 0.0
  %1670 = vmatpush2.msra.mxu0 0.0
  %1671 = vmatprep.subr.mxu0 0.0
  %1672 = vmatpush2.msra.mxu0 0.0
  %1673 = vmatprep.subr.mxu0 0.0
  %1674 = vmatpush2.msra.mxu0 0.0
  %1675 = vmatprep.subr.mxu0 0.0
  %1676 = vmatpush2.msra.mxu0 0.0
  %1677 = vmatprep.subr.mxu0 0.0
  %1678 = vmatpush2.msra.mxu0 0.0
  %1679 = vmatprep.mubr.f32.mxu0 0.0
  %1680 = vmatmul.mubr.f32.gmra.mxu0 %v1584
  %v1681 = vpop.f32.mrf.mxu0
  %v1682 = vadd.f32 %v1613, %v1681
  %v1683 = vpop.f32.mrf.mxu0
  %1684 = vmatprep.mubr.f32.mxu0 0.0
  %1685 = vmatmul.mubr.f32.gmra.mxu0 %v1585
  %v1686 = vpop.f32.mrf.mxu0
  %v1687 = vadd.f32 %v1613, %v1686
  %v1688 = vpop.f32.mrf.mxu0
  %1689 = vmatprep.mubr.f32.mxu0 0.0
  %1690 = vmatmul.mubr.f32.gmra.mxu0 %v1586
  %v1691 = vpop.f32.mrf.mxu0
  %v1692 = vadd.f32 %v1613, %v1691
  %v1693 = vpop.f32.mrf.mxu0
  %1694 = vmatprep.mubr.f32.mxu0 0.0
  %1695 = vmatmul.mubr.f32.gmra.mxu0 %v1587
  %v1696 = vpop.f32.mrf.mxu0
  %v1697 = vadd.f32 %v1613, %v1696
  %v1698 = vpop.f32.mrf.mxu0
  %1699 = vmatprep.mubr.f32.mxu0 0.0
  %1700 = vmatmul.mubr.f32.gmra.mxu0 %v1588
  %v1701 = vpop.f32.mrf.mxu0
  %v1702 = vadd.f32 %v1613, %v1701
  %v1703 = vpop.f32.mrf.mxu0
  %1704 = vmatprep.mubr.f32.mxu0 0.0
  %1705 = vmatmul.mubr.f32.gmra.mxu0 %v1589
  %v1706 = vpop.f32.mrf.mxu0
  %v1707 = vadd.f32 %v1613, %v1706
  %v1708 = vpop.f32.mrf.mxu0
  %1709 = vmatprep.mubr.f32.mxu0 0.0
  %1710 = vmatmul.mubr.f32.gmra.mxu0 %v1590
  %v1711 = vpop.f32.mrf.mxu0
  %v1712 = vadd.f32 %v1613, %v1711
  %v1713 = vpop.f32.mrf.mxu0
  %1714 = vmatprep.mubr.f32.mxu0 0.0
  %1715 = vmatmul.mubr.f32.gmra.mxu0 %v1591
  %v1716 = vpop.f32.mrf.mxu0
  %v1717 = vadd.f32 %v1613, %v1716
  %v1718 = vpop.f32.mrf.mxu0
  %1719 = vdwg.mxu0
  %1720 = vst [vmem:[#allocation2] sm:$0xff] %v1682
  %1721 = vst [vmem:[#allocation2 + $0x8] sm:$0xff] %v1687
  %1722 = vst [vmem:[#allocation2 + $0x10] sm:$0xff] %v1692
  %1723 = vst [vmem:[#allocation2 + $0x18] sm:$0xff] %v1697
  %1724 = vst [vmem:[#allocation2 + $0x20] sm:$0xff] %v1702
  %1725 = vst [vmem:[#allocation2 + $0x28] sm:$0xff] %v1707
  %1726 = vst [vmem:[#allocation2 + $0x30] sm:$0xff] %v1712
  %1727 = vst [vmem:[#allocation2 + $0x38] sm:$0xff] %v1717
  %s1728 = scalar_lea.vmem [#allocation4], 16
  %v1729 = vld [vmem:[%s1728] sm:$0xff]
  %s1730 = scalar_lea.vmem [#allocation4], 24
  %v1731 = vld [vmem:[%s1730] sm:$0xff]
  %v1732 = vld [vmem:[#allocation2] sm:$0xff]
  %v1733 = vld [vmem:[%s5] sm:$0xff]
  %v1734 = vld [vmem:[%s5 + $0x8] sm:$0xff]
  %v1735 = vld [vmem:[%s5 + $0x10] sm:$0xff]
  %v1736 = vld [vmem:[%s5 + $0x18] sm:$0xff]
  %v1737 = vld [vmem:[%s5 + $0x20] sm:$0xff]
  %v1738 = vld [vmem:[%s5 + $0x28] sm:$0xff]
  %v1739 = vld [vmem:[%s5 + $0x30] sm:$0xff]
  %v1740 = vld [vmem:[%s5 + $0x38] sm:$0xff]
  %v1741 = vld [vmem:[%s5 + $0x40] sm:$0xff]
  %v1742 = vld [vmem:[%s5 + $0x48] sm:$0xff]
  %v1743 = vld [vmem:[%s5 + $0x50] sm:$0xff]
  %v1744 = vld [vmem:[%s5 + $0x58] sm:$0xff]
  %v1745 = vld [vmem:[%s5 + $0x60] sm:$0xff]
  %v1746 = vld [vmem:[%s5 + $0x68] sm:$0xff]
  %v1747 = vld [vmem:[%s5 + $0x70] sm:$0xff]
  %v1748 = vld [vmem:[%s5 + $0x78] sm:$0xff]
  %1749 = vmatprep.subr.mxu0 0.0
  %1750 = vmatpush1.msra.mxu0 %v1748
  %1751 = vmatprep.subr.mxu0 0.0
  %1752 = vmatpush1.msra.mxu0 %v1747
  %1753 = vmatprep.subr.mxu0 0.0
  %1754 = vmatpush1.msra.mxu0 %v1746
  %1755 = vmatprep.subr.mxu0 0.0
  %1756 = vmatpush1.msra.mxu0 %v1745
  %1757 = vmatprep.subr.mxu0 0.0
  %1758 = vmatpush1.msra.mxu0 %v1744
  %1759 = vmatprep.subr.mxu0 0.0
  %1760 = vmatpush1.msra.mxu0 %v1743
  %1761 = vmatprep.subr.mxu0 0.0
  %1762 = vmatpush1.msra.mxu0 %v1742
  %1763 = vmatprep.subr.mxu0 0.0
  %1764 = vmatpush1.msra.mxu0 %v1741
  %1765 = vmatprep.subr.mxu0 0.0
  %1766 = vmatpush1.msra.mxu0 %v1740
  %1767 = vmatprep.subr.mxu0 0.0
  %1768 = vmatpush1.msra.mxu0 %v1739
  %1769 = vmatprep.subr.mxu0 0.0
  %1770 = vmatpush1.msra.mxu0 %v1738
  %1771 = vmatprep.subr.mxu0 0.0
  %1772 = vmatpush1.msra.mxu0 %v1737
  %1773 = vmatprep.subr.mxu0 0.0
  %1774 = vmatpush1.msra.mxu0 %v1736
  %1775 = vmatprep.subr.mxu0 0.0
  %1776 = vmatpush1.msra.mxu0 %v1735
  %1777 = vmatprep.subr.mxu0 0.0
  %1778 = vmatpush1.msra.mxu0 %v1734
  %1779 = vmatprep.subr.mxu0 0.0
  %1780 = vmatpush1.msra.mxu0 %v1733
  %1781 = vmatprep.subr.mxu0 0.0
  %1782 = vmatpush2.msra.mxu0 0.0
  %1783 = vmatprep.subr.mxu0 0.0
  %1784 = vmatpush2.msra.mxu0 0.0
  %1785 = vmatprep.subr.mxu0 0.0
  %1786 = vmatpush2.msra.mxu0 0.0
  %1787 = vmatprep.subr.mxu0 0.0
  %1788 = vmatpush2.msra.mxu0 0.0
  %1789 = vmatprep.subr.mxu0 0.0
  %1790 = vmatpush2.msra.mxu0 0.0
  %1791 = vmatprep.subr.mxu0 0.0
  %1792 = vmatpush2.msra.mxu0 0.0
  %1793 = vmatprep.subr.mxu0 0.0
  %1794 = vmatpush2.msra.mxu0 0.0
  %1795 = vmatprep.subr.mxu0 0.0
  %1796 = vmatpush2.msra.mxu0 0.0
  %1797 = vmatprep.subr.mxu0 0.0
  %1798 = vmatpush2.msra.mxu0 0.0
  %1799 = vmatprep.subr.mxu0 0.0
  %1800 = vmatpush2.msra.mxu0 0.0
  %1801 = vmatprep.subr.mxu0 0.0
  %1802 = vmatpush2.msra.mxu0 0.0
  %1803 = vmatprep.subr.mxu0 0.0
  %1804 = vmatpush2.msra.mxu0 0.0
  %1805 = vmatprep.subr.mxu0 0.0
  %1806 = vmatpush2.msra.mxu0 0.0
  %1807 = vmatprep.subr.mxu0 0.0
  %1808 = vmatpush2.msra.mxu0 0.0
  %1809 = vmatprep.subr.mxu0 0.0
  %1810 = vmatpush2.msra.mxu0 0.0
  %1811 = vmatprep.subr.mxu0 0.0
  %1812 = vmatpush2.msra.mxu0 0.0
  %1813 = vmatprep.mubr.f32.mxu0 0.0
  %1814 = vmatmul.mubr.f32.gmra.mxu0 %v1729
  %v1815 = vpop.f32.mrf.mxu0
  %v1816 = vadd.f32 0.0, %v1815
  %v1817 = vpop.f32.mrf.mxu0
  %1818 = vdwg.mxu0
  %v1819 = vadd.f32 %v1732, %v1816
  %v1820 = vmul.f32 %v1819, 0.5
  %v1821 = vtanh.pop %v1820
  %v1822 = vmul.f32 %v1821, 0.5
  %v1823 = vadd.f32 %v1822, 0.5
  %v1824 = vtanh.pop %v1819
  %v1825 = vsel %vm44, %v1824, %v1823
  %1826 = vrot.lane.b32.xlu0 %v1825, 96
  %v1827 = vpop.permute.xlu0 %1826
  %1828 = vrot.lane.b32.xlu0 %v1825, 64
  %v1829 = vpop.permute.xlu0 %1828
  %1830 = vrot.lane.b32.xlu0 %v1825, 32
  %v1831 = vpop.permute.xlu0 %1830
  %v1832 = vmul.f32 %v1827, %v1731
  %v1833 = vmul.f32 %v1825, %v1829
  %v1834 = vadd.f32 %v1832, %v1833
  %v1835 = vtanh.pop %v1834
  %v1836 = vmul.f32 %v1831, %v1835
  %v1837 = vld [vmem:[%s826] sm:$0xff]
  %1838 = vmatprep.subr.mxu0 0.0
  %1839 = vmatpush1.msra.mxu0 %v1748
  %1840 = vmatprep.subr.mxu0 0.0
  %1841 = vmatpush1.msra.mxu0 %v1747
  %1842 = vmatprep.subr.mxu0 0.0
  %1843 = vmatpush1.msra.mxu0 %v1746
  %1844 = vmatprep.subr.mxu0 0.0
  %1845 = vmatpush1.msra.mxu0 %v1745
  %1846 = vmatprep.subr.mxu0 0.0
  %1847 = vmatpush1.msra.mxu0 %v1744
  %1848 = vmatprep.subr.mxu0 0.0
  %1849 = vmatpush1.msra.mxu0 %v1743
  %1850 = vmatprep.subr.mxu0 0.0
  %1851 = vmatpush1.msra.mxu0 %v1742
  %1852 = vmatprep.subr.mxu0 0.0
  %1853 = vmatpush1.msra.mxu0 %v1741
  %1854 = vmatprep.subr.mxu0 0.0
  %1855 = vmatpush1.msra.mxu0 %v1740
  %1856 = vmatprep.subr.mxu0 0.0
  %1857 = vmatpush1.msra.mxu0 %v1739
  %1858 = vmatprep.subr.mxu0 0.0
  %1859 = vmatpush1.msra.mxu0 %v1738
  %1860 = vmatprep.subr.mxu0 0.0
  %1861 = vmatpush1.msra.mxu0 %v1737
  %1862 = vmatprep.subr.mxu0 0.0
  %1863 = vmatpush1.msra.mxu0 %v1736
  %1864 = vmatprep.subr.mxu0 0.0
  %1865 = vmatpush1.msra.mxu0 %v1735
  %1866 = vmatprep.subr.mxu0 0.0
  %1867 = vmatpush1.msra.mxu0 %v1734
  %1868 = vmatprep.subr.mxu0 0.0
  %1869 = vmatpush1.msra.mxu0 %v1733
  %1870 = vmatprep.subr.mxu0 0.0
  %1871 = vmatpush2.msra.mxu0 0.0
  %1872 = vmatprep.subr.mxu0 0.0
  %1873 = vmatpush2.msra.mxu0 0.0
  %1874 = vmatprep.subr.mxu0 0.0
  %1875 = vmatpush2.msra.mxu0 0.0
  %1876 = vmatprep.subr.mxu0 0.0
  %1877 = vmatpush2.msra.mxu0 0.0
  %1878 = vmatprep.subr.mxu0 0.0
  %1879 = vmatpush2.msra.mxu0 0.0
  %1880 = vmatprep.subr.mxu0 0.0
  %1881 = vmatpush2.msra.mxu0 0.0
  %1882 = vmatprep.subr.mxu0 0.0
  %1883 = vmatpush2.msra.mxu0 0.0
  %1884 = vmatprep.subr.mxu0 0.0
  %1885 = vmatpush2.msra.mxu0 0.0
  %1886 = vmatprep.subr.mxu0 0.0
  %1887 = vmatpush2.msra.mxu0 0.0
  %1888 = vmatprep.subr.mxu0 0.0
  %1889 = vmatpush2.msra.mxu0 0.0
  %1890 = vmatprep.subr.mxu0 0.0
  %1891 = vmatpush2.msra.mxu0 0.0
  %1892 = vmatprep.subr.mxu0 0.0
  %1893 = vmatpush2.msra.mxu0 0.0
  %1894 = vmatprep.subr.mxu0 0.0
  %1895 = vmatpush2.msra.mxu0 0.0
  %1896 = vmatprep.subr.mxu0 0.0
  %1897 = vmatpush2.msra.mxu0 0.0
  %1898 = vmatprep.subr.mxu0 0.0
  %1899 = vmatpush2.msra.mxu0 0.0
  %1900 = vmatprep.subr.mxu0 0.0
  %1901 = vmatpush2.msra.mxu0 0.0
  %1902 = vmatprep.mubr.f32.mxu0 0.0
  %1903 = vmatmul.mubr.f32.gmra.mxu0 %v1836
  %v1904 = vpop.f32.mrf.mxu0
  %v1905 = vadd.f32 0.0, %v1904
  %v1906 = vpop.f32.mrf.mxu0
  %1907 = vdwg.mxu0
  %v1908 = vadd.f32 %v1837, %v1905
  %v1909 = vmul.f32 %v1908, 0.5
  %v1910 = vtanh.pop %v1909
  %v1911 = vmul.f32 %v1910, 0.5
  %v1912 = vadd.f32 %v1911, 0.5
  %v1913 = vtanh.pop %v1908
  %v1914 = vsel %vm44, %v1913, %v1912
  %1915 = vrot.lane.b32.xlu0 %v1914, 96
  %v1916 = vpop.permute.xlu0 %1915
  %1917 = vrot.lane.b32.xlu0 %v1914, 64
  %v1918 = vpop.permute.xlu0 %1917
  %1919 = vrot.lane.b32.xlu0 %v1914, 32
  %v1920 = vpop.permute.xlu0 %1919
  %v1921 = vmul.f32 %v1916, %v1834
  %v1922 = vmul.f32 %v1914, %v1918
  %v1923 = vadd.f32 %v1921, %v1922
  %v1924 = vtanh.pop %v1923
  %v1925 = vmul.f32 %v1920, %v1924
  %v1926 = vld [vmem:[%s934] sm:$0xff]
  %1927 = vmatprep.subr.mxu0 0.0
  %1928 = vmatpush1.msra.mxu0 %v1748
  %1929 = vmatprep.subr.mxu0 0.0
  %1930 = vmatpush1.msra.mxu0 %v1747
  %1931 = vmatprep.subr.mxu0 0.0
  %1932 = vmatpush1.msra.mxu0 %v1746
  %1933 = vmatprep.subr.mxu0 0.0
  %1934 = vmatpush1.msra.mxu0 %v1745
  %1935 = vmatprep.subr.mxu0 0.0
  %1936 = vmatpush1.msra.mxu0 %v1744
  %1937 = vmatprep.subr.mxu0 0.0
  %1938 = vmatpush1.msra.mxu0 %v1743
  %1939 = vmatprep.subr.mxu0 0.0
  %1940 = vmatpush1.msra.mxu0 %v1742
  %1941 = vmatprep.subr.mxu0 0.0
  %1942 = vmatpush1.msra.mxu0 %v1741
  %1943 = vmatprep.subr.mxu0 0.0
  %1944 = vmatpush1.msra.mxu0 %v1740
  %1945 = vmatprep.subr.mxu0 0.0
  %1946 = vmatpush1.msra.mxu0 %v1739
  %1947 = vmatprep.subr.mxu0 0.0
  %1948 = vmatpush1.msra.mxu0 %v1738
  %1949 = vmatprep.subr.mxu0 0.0
  %1950 = vmatpush1.msra.mxu0 %v1737
  %1951 = vmatprep.subr.mxu0 0.0
  %1952 = vmatpush1.msra.mxu0 %v1736
  %1953 = vmatprep.subr.mxu0 0.0
  %1954 = vmatpush1.msra.mxu0 %v1735
  %1955 = vmatprep.subr.mxu0 0.0
  %1956 = vmatpush1.msra.mxu0 %v1734
  %1957 = vmatprep.subr.mxu0 0.0
  %1958 = vmatpush1.msra.mxu0 %v1733
  %1959 = vmatprep.subr.mxu0 0.0
  %1960 = vmatpush2.msra.mxu0 0.0
  %1961 = vmatprep.subr.mxu0 0.0
  %1962 = vmatpush2.msra.mxu0 0.0
  %1963 = vmatprep.subr.mxu0 0.0
  %1964 = vmatpush2.msra.mxu0 0.0
  %1965 = vmatprep.subr.mxu0 0.0
  %1966 = vmatpush2.msra.mxu0 0.0
  %1967 = vmatprep.subr.mxu0 0.0
  %1968 = vmatpush2.msra.mxu0 0.0
  %1969 = vmatprep.subr.mxu0 0.0
  %1970 = vmatpush2.msra.mxu0 0.0
  %1971 = vmatprep.subr.mxu0 0.0
  %1972 = vmatpush2.msra.mxu0 0.0
  %1973 = vmatprep.subr.mxu0 0.0
  %1974 = vmatpush2.msra.mxu0 0.0
  %1975 = vmatprep.subr.mxu0 0.0
  %1976 = vmatpush2.msra.mxu0 0.0
  %1977 = vmatprep.subr.mxu0 0.0
  %1978 = vmatpush2.msra.mxu0 0.0
  %1979 = vmatprep.subr.mxu0 0.0
  %1980 = vmatpush2.msra.mxu0 0.0
  %1981 = vmatprep.subr.mxu0 0.0
  %1982 = vmatpush2.msra.mxu0 0.0
  %1983 = vmatprep.subr.mxu0 0.0
  %1984 = vmatpush2.msra.mxu0 0.0
  %1985 = vmatprep.subr.mxu0 0.0
  %1986 = vmatpush2.msra.mxu0 0.0
  %1987 = vmatprep.subr.mxu0 0.0
  %1988 = vmatpush2.msra.mxu0 0.0
  %1989 = vmatprep.subr.mxu0 0.0
  %1990 = vmatpush2.msra.mxu0 0.0
  %1991 = vmatprep.mubr.f32.mxu0 0.0
  %1992 = vmatmul.mubr.f32.gmra.mxu0 %v1925
  %v1993 = vpop.f32.mrf.mxu0
  %v1994 = vadd.f32 0.0, %v1993
  %v1995 = vpop.f32.mrf.mxu0
  %1996 = vdwg.mxu0
  %v1997 = vadd.f32 %v1926, %v1994
  %v1998 = vmul.f32 %v1997, 0.5
  %v1999 = vtanh.pop %v1998
  %v2000 = vmul.f32 %v1999, 0.5
  %v2001 = vadd.f32 %v2000, 0.5
  %v2002 = vtanh.pop %v1997
  %v2003 = vsel %vm44, %v2002, %v2001
  %2004 = vrot.lane.b32.xlu0 %v2003, 96
  %v2005 = vpop.permute.xlu0 %2004
  %2006 = vrot.lane.b32.xlu0 %v2003, 64
  %v2007 = vpop.permute.xlu0 %2006
  %2008 = vrot.lane.b32.xlu0 %v2003, 32
  %v2009 = vpop.permute.xlu0 %2008
  %v2010 = vmul.f32 %v2005, %v1923
  %v2011 = vmul.f32 %v2003, %v2007
  %v2012 = vadd.f32 %v2010, %v2011
  %v2013 = vtanh.pop %v2012
  %v2014 = vmul.f32 %v2009, %v2013
  %v2015 = vld [vmem:[%s1042] sm:$0xff]
  %2016 = vmatprep.subr.mxu0 0.0
  %2017 = vmatpush1.msra.mxu0 %v1748
  %2018 = vmatprep.subr.mxu0 0.0
  %2019 = vmatpush1.msra.mxu0 %v1747
  %2020 = vmatprep.subr.mxu0 0.0
  %2021 = vmatpush1.msra.mxu0 %v1746
  %2022 = vmatprep.subr.mxu0 0.0
  %2023 = vmatpush1.msra.mxu0 %v1745
  %2024 = vmatprep.subr.mxu0 0.0
  %2025 = vmatpush1.msra.mxu0 %v1744
  %2026 = vmatprep.subr.mxu0 0.0
  %2027 = vmatpush1.msra.mxu0 %v1743
  %2028 = vmatprep.subr.mxu0 0.0
  %2029 = vmatpush1.msra.mxu0 %v1742
  %2030 = vmatprep.subr.mxu0 0.0
  %2031 = vmatpush1.msra.mxu0 %v1741
  %2032 = vmatprep.subr.mxu0 0.0
  %2033 = vmatpush1.msra.mxu0 %v1740
  %2034 = vmatprep.subr.mxu0 0.0
  %2035 = vmatpush1.msra.mxu0 %v1739
  %2036 = vmatprep.subr.mxu0 0.0
  %2037 = vmatpush1.msra.mxu0 %v1738
  %2038 = vmatprep.subr.mxu0 0.0
  %2039 = vmatpush1.msra.mxu0 %v1737
  %2040 = vmatprep.subr.mxu0 0.0
  %2041 = vmatpush1.msra.mxu0 %v1736
  %2042 = vmatprep.subr.mxu0 0.0
  %2043 = vmatpush1.msra.mxu0 %v1735
  %2044 = vmatprep.subr.mxu0 0.0
  %2045 = vmatpush1.msra.mxu0 %v1734
  %2046 = vmatprep.subr.mxu0 0.0
  %2047 = vmatpush1.msra.mxu0 %v1733
  %2048 = vmatprep.subr.mxu0 0.0
  %2049 = vmatpush2.msra.mxu0 0.0
  %2050 = vmatprep.subr.mxu0 0.0
  %2051 = vmatpush2.msra.mxu0 0.0
  %2052 = vmatprep.subr.mxu0 0.0
  %2053 = vmatpush2.msra.mxu0 0.0
  %2054 = vmatprep.subr.mxu0 0.0
  %2055 = vmatpush2.msra.mxu0 0.0
  %2056 = vmatprep.subr.mxu0 0.0
  %2057 = vmatpush2.msra.mxu0 0.0
  %2058 = vmatprep.subr.mxu0 0.0
  %2059 = vmatpush2.msra.mxu0 0.0
  %2060 = vmatprep.subr.mxu0 0.0
  %2061 = vmatpush2.msra.mxu0 0.0
  %2062 = vmatprep.subr.mxu0 0.0
  %2063 = vmatpush2.msra.mxu0 0.0
  %2064 = vmatprep.subr.mxu0 0.0
  %2065 = vmatpush2.msra.mxu0 0.0
  %2066 = vmatprep.subr.mxu0 0.0
  %2067 = vmatpush2.msra.mxu0 0.0
  %2068 = vmatprep.subr.mxu0 0.0
  %2069 = vmatpush2.msra.mxu0 0.0
  %2070 = vmatprep.subr.mxu0 0.0
  %2071 = vmatpush2.msra.mxu0 0.0
  %2072 = vmatprep.subr.mxu0 0.0
  %2073 = vmatpush2.msra.mxu0 0.0
  %2074 = vmatprep.subr.mxu0 0.0
  %2075 = vmatpush2.msra.mxu0 0.0
  %2076 = vmatprep.subr.mxu0 0.0
  %2077 = vmatpush2.msra.mxu0 0.0
  %2078 = vmatprep.subr.mxu0 0.0
  %2079 = vmatpush2.msra.mxu0 0.0
  %2080 = vmatprep.mubr.f32.mxu0 0.0
  %2081 = vmatmul.mubr.f32.gmra.mxu0 %v2014
  %v2082 = vpop.f32.mrf.mxu0
  %v2083 = vadd.f32 0.0, %v2082
  %v2084 = vpop.f32.mrf.mxu0
  %2085 = vdwg.mxu0
  %v2086 = vadd.f32 %v2015, %v2083
  %v2087 = vmul.f32 %v2086, 0.5
  %v2088 = vtanh.pop %v2087
  %v2089 = vmul.f32 %v2088, 0.5
  %v2090 = vadd.f32 %v2089, 0.5
  %v2091 = vtanh.pop %v2086
  %v2092 = vsel %vm44, %v2091, %v2090
  %2093 = vrot.lane.b32.xlu0 %v2092, 96
  %v2094 = vpop.permute.xlu0 %2093
  %2095 = vrot.lane.b32.xlu0 %v2092, 64
  %v2096 = vpop.permute.xlu0 %2095
  %2097 = vrot.lane.b32.xlu0 %v2092, 32
  %v2098 = vpop.permute.xlu0 %2097
  %v2099 = vmul.f32 %v2094, %v2012
  %v2100 = vmul.f32 %v2092, %v2096
  %v2101 = vadd.f32 %v2099, %v2100
  %v2102 = vtanh.pop %v2101
  %v2103 = vmul.f32 %v2098, %v2102
  %v2104 = vld [vmem:[%s1150] sm:$0xff]
  %2105 = vmatprep.subr.mxu0 0.0
  %2106 = vmatpush1.msra.mxu0 %v1748
  %2107 = vmatprep.subr.mxu0 0.0
  %2108 = vmatpush1.msra.mxu0 %v1747
  %2109 = vmatprep.subr.mxu0 0.0
  %2110 = vmatpush1.msra.mxu0 %v1746
  %2111 = vmatprep.subr.mxu0 0.0
  %2112 = vmatpush1.msra.mxu0 %v1745
  %2113 = vmatprep.subr.mxu0 0.0
  %2114 = vmatpush1.msra.mxu0 %v1744
  %2115 = vmatprep.subr.mxu0 0.0
  %2116 = vmatpush1.msra.mxu0 %v1743
  %2117 = vmatprep.subr.mxu0 0.0
  %2118 = vmatpush1.msra.mxu0 %v1742
  %2119 = vmatprep.subr.mxu0 0.0
  %2120 = vmatpush1.msra.mxu0 %v1741
  %2121 = vmatprep.subr.mxu0 0.0
  %2122 = vmatpush1.msra.mxu0 %v1740
  %2123 = vmatprep.subr.mxu0 0.0
  %2124 = vmatpush1.msra.mxu0 %v1739
  %2125 = vmatprep.subr.mxu0 0.0
  %2126 = vmatpush1.msra.mxu0 %v1738
  %2127 = vmatprep.subr.mxu0 0.0
  %2128 = vmatpush1.msra.mxu0 %v1737
  %2129 = vmatprep.subr.mxu0 0.0
  %2130 = vmatpush1.msra.mxu0 %v1736
  %2131 = vmatprep.subr.mxu0 0.0
  %2132 = vmatpush1.msra.mxu0 %v1735
  %2133 = vmatprep.subr.mxu0 0.0
  %2134 = vmatpush1.msra.mxu0 %v1734
  %2135 = vmatprep.subr.mxu0 0.0
  %2136 = vmatpush1.msra.mxu0 %v1733
  %2137 = vmatprep.subr.mxu0 0.0
  %2138 = vmatpush2.msra.mxu0 0.0
  %2139 = vmatprep.subr.mxu0 0.0
  %2140 = vmatpush2.msra.mxu0 0.0
  %2141 = vmatprep.subr.mxu0 0.0
  %2142 = vmatpush2.msra.mxu0 0.0
  %2143 = vmatprep.subr.mxu0 0.0
  %2144 = vmatpush2.msra.mxu0 0.0
  %2145 = vmatprep.subr.mxu0 0.0
  %2146 = vmatpush2.msra.mxu0 0.0
  %2147 = vmatprep.subr.mxu0 0.0
  %2148 = vmatpush2.msra.mxu0 0.0
  %2149 = vmatprep.subr.mxu0 0.0
  %2150 = vmatpush2.msra.mxu0 0.0
  %2151 = vmatprep.subr.mxu0 0.0
  %2152 = vmatpush2.msra.mxu0 0.0
  %2153 = vmatprep.subr.mxu0 0.0
  %2154 = vmatpush2.msra.mxu0 0.0
  %2155 = vmatprep.subr.mxu0 0.0
  %2156 = vmatpush2.msra.mxu0 0.0
  %2157 = vmatprep.subr.mxu0 0.0
  %2158 = vmatpush2.msra.mxu0 0.0
  %2159 = vmatprep.subr.mxu0 0.0
  %2160 = vmatpush2.msra.mxu0 0.0
  %2161 = vmatprep.subr.mxu0 0.0
  %2162 = vmatpush2.msra.mxu0 0.0
  %2163 = vmatprep.subr.mxu0 0.0
  %2164 = vmatpush2.msra.mxu0 0.0
  %2165 = vmatprep.subr.mxu0 0.0
  %2166 = vmatpush2.msra.mxu0 0.0
  %2167 = vmatprep.subr.mxu0 0.0
  %2168 = vmatpush2.msra.mxu0 0.0
  %2169 = vmatprep.mubr.f32.mxu0 0.0
  %2170 = vmatmul.mubr.f32.gmra.mxu0 %v2103
  %v2171 = vpop.f32.mrf.mxu0
  %v2172 = vadd.f32 0.0, %v2171
  %v2173 = vpop.f32.mrf.mxu0
  %2174 = vdwg.mxu0
  %v2175 = vadd.f32 %v2104, %v2172
  %v2176 = vmul.f32 %v2175, 0.5
  %v2177 = vtanh.pop %v2176
  %v2178 = vmul.f32 %v2177, 0.5
  %v2179 = vadd.f32 %v2178, 0.5
  %v2180 = vtanh.pop %v2175
  %v2181 = vsel %vm44, %v2180, %v2179
  %2182 = vrot.lane.b32.xlu0 %v2181, 96
  %v2183 = vpop.permute.xlu0 %2182
  %2184 = vrot.lane.b32.xlu0 %v2181, 64
  %v2185 = vpop.permute.xlu0 %2184
  %2186 = vrot.lane.b32.xlu0 %v2181, 32
  %v2187 = vpop.permute.xlu0 %2186
  %v2188 = vmul.f32 %v2183, %v2101
  %v2189 = vmul.f32 %v2181, %v2185
  %v2190 = vadd.f32 %v2188, %v2189
  %v2191 = vtanh.pop %v2190
  %v2192 = vmul.f32 %v2187, %v2191
  %v2193 = vld [vmem:[%s1258] sm:$0xff]
  %2194 = vmatprep.subr.mxu0 0.0
  %2195 = vmatpush1.msra.mxu0 %v1748
  %2196 = vmatprep.subr.mxu0 0.0
  %2197 = vmatpush1.msra.mxu0 %v1747
  %2198 = vmatprep.subr.mxu0 0.0
  %2199 = vmatpush1.msra.mxu0 %v1746
  %2200 = vmatprep.subr.mxu0 0.0
  %2201 = vmatpush1.msra.mxu0 %v1745
  %2202 = vmatprep.subr.mxu0 0.0
  %2203 = vmatpush1.msra.mxu0 %v1744
  %2204 = vmatprep.subr.mxu0 0.0
  %2205 = vmatpush1.msra.mxu0 %v1743
  %2206 = vmatprep.subr.mxu0 0.0
  %2207 = vmatpush1.msra.mxu0 %v1742
  %2208 = vmatprep.subr.mxu0 0.0
  %2209 = vmatpush1.msra.mxu0 %v1741
  %2210 = vmatprep.subr.mxu0 0.0
  %2211 = vmatpush1.msra.mxu0 %v1740
  %2212 = vmatprep.subr.mxu0 0.0
  %2213 = vmatpush1.msra.mxu0 %v1739
  %2214 = vmatprep.subr.mxu0 0.0
  %2215 = vmatpush1.msra.mxu0 %v1738
  %2216 = vmatprep.subr.mxu0 0.0
  %2217 = vmatpush1.msra.mxu0 %v1737
  %2218 = vmatprep.subr.mxu0 0.0
  %2219 = vmatpush1.msra.mxu0 %v1736
  %2220 = vmatprep.subr.mxu0 0.0
  %2221 = vmatpush1.msra.mxu0 %v1735
  %2222 = vmatprep.subr.mxu0 0.0
  %2223 = vmatpush1.msra.mxu0 %v1734
  %2224 = vmatprep.subr.mxu0 0.0
  %2225 = vmatpush1.msra.mxu0 %v1733
  %2226 = vmatprep.subr.mxu0 0.0
  %2227 = vmatpush2.msra.mxu0 0.0
  %2228 = vmatprep.subr.mxu0 0.0
  %2229 = vmatpush2.msra.mxu0 0.0
  %2230 = vmatprep.subr.mxu0 0.0
  %2231 = vmatpush2.msra.mxu0 0.0
  %2232 = vmatprep.subr.mxu0 0.0
  %2233 = vmatpush2.msra.mxu0 0.0
  %2234 = vmatprep.subr.mxu0 0.0
  %2235 = vmatpush2.msra.mxu0 0.0
  %2236 = vmatprep.subr.mxu0 0.0
  %2237 = vmatpush2.msra.mxu0 0.0
  %2238 = vmatprep.subr.mxu0 0.0
  %2239 = vmatpush2.msra.mxu0 0.0
  %2240 = vmatprep.subr.mxu0 0.0
  %2241 = vmatpush2.msra.mxu0 0.0
  %2242 = vmatprep.subr.mxu0 0.0
  %2243 = vmatpush2.msra.mxu0 0.0
  %2244 = vmatprep.subr.mxu0 0.0
  %2245 = vmatpush2.msra.mxu0 0.0
  %2246 = vmatprep.subr.mxu0 0.0
  %2247 = vmatpush2.msra.mxu0 0.0
  %2248 = vmatprep.subr.mxu0 0.0
  %2249 = vmatpush2.msra.mxu0 0.0
  %2250 = vmatprep.subr.mxu0 0.0
  %2251 = vmatpush2.msra.mxu0 0.0
  %2252 = vmatprep.subr.mxu0 0.0
  %2253 = vmatpush2.msra.mxu0 0.0
  %2254 = vmatprep.subr.mxu0 0.0
  %2255 = vmatpush2.msra.mxu0 0.0
  %2256 = vmatprep.subr.mxu0 0.0
  %2257 = vmatpush2.msra.mxu0 0.0
  %2258 = vmatprep.mubr.f32.mxu0 0.0
  %2259 = vmatmul.mubr.f32.gmra.mxu0 %v2192
  %v2260 = vpop.f32.mrf.mxu0
  %v2261 = vadd.f32 0.0, %v2260
  %v2262 = vpop.f32.mrf.mxu0
  %2263 = vdwg.mxu0
  %v2264 = vadd.f32 %v2193, %v2261
  %v2265 = vmul.f32 %v2264, 0.5
  %v2266 = vtanh.pop %v2265
  %v2267 = vmul.f32 %v2266, 0.5
  %v2268 = vadd.f32 %v2267, 0.5
  %v2269 = vtanh.pop %v2264
  %v2270 = vsel %vm44, %v2269, %v2268
  %2271 = vrot.lane.b32.xlu0 %v2270, 96
  %v2272 = vpop.permute.xlu0 %2271
  %2273 = vrot.lane.b32.xlu0 %v2270, 64
  %v2274 = vpop.permute.xlu0 %2273
  %2275 = vrot.lane.b32.xlu0 %v2270, 32
  %v2276 = vpop.permute.xlu0 %2275
  %v2277 = vmul.f32 %v2272, %v2190
  %v2278 = vmul.f32 %v2270, %v2274
  %v2279 = vadd.f32 %v2277, %v2278
  %v2280 = vtanh.pop %v2279
  %v2281 = vmul.f32 %v2276, %v2280
  %v2282 = vld [vmem:[%s1366] sm:$0xff]
  %2283 = vmatprep.subr.mxu0 0.0
  %2284 = vmatpush1.msra.mxu0 %v1748
  %2285 = vmatprep.subr.mxu0 0.0
  %2286 = vmatpush1.msra.mxu0 %v1747
  %2287 = vmatprep.subr.mxu0 0.0
  %2288 = vmatpush1.msra.mxu0 %v1746
  %2289 = vmatprep.subr.mxu0 0.0
  %2290 = vmatpush1.msra.mxu0 %v1745
  %2291 = vmatprep.subr.mxu0 0.0
  %2292 = vmatpush1.msra.mxu0 %v1744
  %2293 = vmatprep.subr.mxu0 0.0
  %2294 = vmatpush1.msra.mxu0 %v1743
  %2295 = vmatprep.subr.mxu0 0.0
  %2296 = vmatpush1.msra.mxu0 %v1742
  %2297 = vmatprep.subr.mxu0 0.0
  %2298 = vmatpush1.msra.mxu0 %v1741
  %2299 = vmatprep.subr.mxu0 0.0
  %2300 = vmatpush1.msra.mxu0 %v1740
  %2301 = vmatprep.subr.mxu0 0.0
  %2302 = vmatpush1.msra.mxu0 %v1739
  %2303 = vmatprep.subr.mxu0 0.0
  %2304 = vmatpush1.msra.mxu0 %v1738
  %2305 = vmatprep.subr.mxu0 0.0
  %2306 = vmatpush1.msra.mxu0 %v1737
  %2307 = vmatprep.subr.mxu0 0.0
  %2308 = vmatpush1.msra.mxu0 %v1736
  %2309 = vmatprep.subr.mxu0 0.0
  %2310 = vmatpush1.msra.mxu0 %v1735
  %2311 = vmatprep.subr.mxu0 0.0
  %2312 = vmatpush1.msra.mxu0 %v1734
  %2313 = vmatprep.subr.mxu0 0.0
  %2314 = vmatpush1.msra.mxu0 %v1733
  %2315 = vmatprep.subr.mxu0 0.0
  %2316 = vmatpush2.msra.mxu0 0.0
  %2317 = vmatprep.subr.mxu0 0.0
  %2318 = vmatpush2.msra.mxu0 0.0
  %2319 = vmatprep.subr.mxu0 0.0
  %2320 = vmatpush2.msra.mxu0 0.0
  %2321 = vmatprep.subr.mxu0 0.0
  %2322 = vmatpush2.msra.mxu0 0.0
  %2323 = vmatprep.subr.mxu0 0.0
  %2324 = vmatpush2.msra.mxu0 0.0
  %2325 = vmatprep.subr.mxu0 0.0
  %2326 = vmatpush2.msra.mxu0 0.0
  %2327 = vmatprep.subr.mxu0 0.0
  %2328 = vmatpush2.msra.mxu0 0.0
  %2329 = vmatprep.subr.mxu0 0.0
  %2330 = vmatpush2.msra.mxu0 0.0
  %2331 = vmatprep.subr.mxu0 0.0
  %2332 = vmatpush2.msra.mxu0 0.0
  %2333 = vmatprep.subr.mxu0 0.0
  %2334 = vmatpush2.msra.mxu0 0.0
  %2335 = vmatprep.subr.mxu0 0.0
  %2336 = vmatpush2.msra.mxu0 0.0
  %2337 = vmatprep.subr.mxu0 0.0
  %2338 = vmatpush2.msra.mxu0 0.0
  %2339 = vmatprep.subr.mxu0 0.0
  %2340 = vmatpush2.msra.mxu0 0.0
  %2341 = vmatprep.subr.mxu0 0.0
  %2342 = vmatpush2.msra.mxu0 0.0
  %2343 = vmatprep.subr.mxu0 0.0
  %2344 = vmatpush2.msra.mxu0 0.0
  %2345 = vmatprep.subr.mxu0 0.0
  %2346 = vmatpush2.msra.mxu0 0.0
  %2347 = vmatprep.mubr.f32.mxu0 0.0
  %2348 = vmatmul.mubr.f32.gmra.mxu0 %v2281
  %v2349 = vpop.f32.mrf.mxu0
  %v2350 = vadd.f32 0.0, %v2349
  %v2351 = vpop.f32.mrf.mxu0
  %2352 = vdwg.mxu0
  %v2353 = vadd.f32 %v2282, %v2350
  %v2354 = vmul.f32 %v2353, 0.5
  %v2355 = vtanh.pop %v2354
  %v2356 = vmul.f32 %v2355, 0.5
  %v2357 = vadd.f32 %v2356, 0.5
  %v2358 = vtanh.pop %v2353
  %v2359 = vsel %vm44, %v2358, %v2357
  %2360 = vrot.lane.b32.xlu0 %v2359, 96
  %v2361 = vpop.permute.xlu0 %2360
  %2362 = vrot.lane.b32.xlu0 %v2359, 64
  %v2363 = vpop.permute.xlu0 %2362
  %2364 = vrot.lane.b32.xlu0 %v2359, 32
  %v2365 = vpop.permute.xlu0 %2364
  %v2366 = vmul.f32 %v2361, %v2279
  %v2367 = vmul.f32 %v2359, %v2363
  %v2368 = vadd.f32 %v2366, %v2367
  %v2369 = vtanh.pop %v2368
  %v2370 = vmul.f32 %v2365, %v2369
  %v2371 = vld [vmem:[%s1474] sm:$0xff]
  %2372 = vmatprep.subr.mxu0 0.0
  %2373 = vmatpush1.msra.mxu0 %v1748
  %2374 = vmatprep.subr.mxu0 0.0
  %2375 = vmatpush1.msra.mxu0 %v1747
  %2376 = vmatprep.subr.mxu0 0.0
  %2377 = vmatpush1.msra.mxu0 %v1746
  %2378 = vmatprep.subr.mxu0 0.0
  %2379 = vmatpush1.msra.mxu0 %v1745
  %2380 = vmatprep.subr.mxu0 0.0
  %2381 = vmatpush1.msra.mxu0 %v1744
  %2382 = vmatprep.subr.mxu0 0.0
  %2383 = vmatpush1.msra.mxu0 %v1743
  %2384 = vmatprep.subr.mxu0 0.0
  %2385 = vmatpush1.msra.mxu0 %v1742
  %2386 = vmatprep.subr.mxu0 0.0
  %2387 = vmatpush1.msra.mxu0 %v1741
  %2388 = vmatprep.subr.mxu0 0.0
  %2389 = vmatpush1.msra.mxu0 %v1740
  %2390 = vmatprep.subr.mxu0 0.0
  %2391 = vmatpush1.msra.mxu0 %v1739
  %2392 = vmatprep.subr.mxu0 0.0
  %2393 = vmatpush1.msra.mxu0 %v1738
  %2394 = vmatprep.subr.mxu0 0.0
  %2395 = vmatpush1.msra.mxu0 %v1737
  %2396 = vmatprep.subr.mxu0 0.0
  %2397 = vmatpush1.msra.mxu0 %v1736
  %2398 = vmatprep.subr.mxu0 0.0
  %2399 = vmatpush1.msra.mxu0 %v1735
  %2400 = vmatprep.subr.mxu0 0.0
  %2401 = vmatpush1.msra.mxu0 %v1734
  %2402 = vmatprep.subr.mxu0 0.0
  %2403 = vmatpush1.msra.mxu0 %v1733
  %2404 = vmatprep.subr.mxu0 0.0
  %2405 = vmatpush2.msra.mxu0 0.0
  %2406 = vmatprep.subr.mxu0 0.0
  %2407 = vmatpush2.msra.mxu0 0.0
  %2408 = vmatprep.subr.mxu0 0.0
  %2409 = vmatpush2.msra.mxu0 0.0
  %2410 = vmatprep.subr.mxu0 0.0
  %2411 = vmatpush2.msra.mxu0 0.0
  %2412 = vmatprep.subr.mxu0 0.0
  %2413 = vmatpush2.msra.mxu0 0.0
  %2414 = vmatprep.subr.mxu0 0.0
  %2415 = vmatpush2.msra.mxu0 0.0
  %2416 = vmatprep.subr.mxu0 0.0
  %2417 = vmatpush2.msra.mxu0 0.0
  %2418 = vmatprep.subr.mxu0 0.0
  %2419 = vmatpush2.msra.mxu0 0.0
  %2420 = vmatprep.subr.mxu0 0.0
  %2421 = vmatpush2.msra.mxu0 0.0
  %2422 = vmatprep.subr.mxu0 0.0
  %2423 = vmatpush2.msra.mxu0 0.0
  %2424 = vmatprep.subr.mxu0 0.0
  %2425 = vmatpush2.msra.mxu0 0.0
  %2426 = vmatprep.subr.mxu0 0.0
  %2427 = vmatpush2.msra.mxu0 0.0
  %2428 = vmatprep.subr.mxu0 0.0
  %2429 = vmatpush2.msra.mxu0 0.0
  %2430 = vmatprep.subr.mxu0 0.0
  %2431 = vmatpush2.msra.mxu0 0.0
  %2432 = vmatprep.subr.mxu0 0.0
  %2433 = vmatpush2.msra.mxu0 0.0
  %2434 = vmatprep.subr.mxu0 0.0
  %2435 = vmatpush2.msra.mxu0 0.0
  %2436 = vmatprep.mubr.f32.mxu0 0.0
  %2437 = vmatmul.mubr.f32.gmra.mxu0 %v2370
  %v2438 = vpop.f32.mrf.mxu0
  %v2439 = vadd.f32 0.0, %v2438
  %v2440 = vpop.f32.mrf.mxu0
  %2441 = vdwg.mxu0
  %v2442 = vadd.f32 %v2371, %v2439
  %v2443 = vmul.f32 %v2442, 0.5
  %v2444 = vtanh.pop %v2443
  %v2445 = vmul.f32 %v2444, 0.5
  %v2446 = vadd.f32 %v2445, 0.5
  %v2447 = vtanh.pop %v2442
  %v2448 = vsel %vm44, %v2447, %v2446
  %2449 = vrot.lane.b32.xlu0 %v2448, 96
  %v2450 = vpop.permute.xlu0 %2449
  %2451 = vrot.lane.b32.xlu0 %v2448, 64
  %v2452 = vpop.permute.xlu0 %2451
  %2453 = vrot.lane.b32.xlu0 %v2448, 32
  %v2454 = vpop.permute.xlu0 %2453
  %v2455 = vmul.f32 %v2450, %v2368
  %v2456 = vmul.f32 %v2448, %v2452
  %v2457 = vadd.f32 %v2455, %v2456
  %v2458 = vtanh.pop %v2457
  %v2459 = vmul.f32 %v2454, %v2458
  %2460 = vst [vmem:[%s1728] sm:$0xff] %v2459
  %2461 = vst [vmem:[%s1730] sm:$0xff] %v2457
  // Predicated region
  $region42: #{lstm_forward.1} parent=0 // pred_check
    %p2462 = pneg %p32
  $region43: #{lstm_forward.1} parent=0 // pred_check_branch
    %2464 = sbr.rel (%p2462) target = $region45
  $region44: #{lstm_forward.1} parent=0 // pred_region
    %v2465 = vld [vmem:[%s7] sm:$0xff]
    %v2466 = vld [vmem:[%s7 + $0x8] sm:$0xff]
    %v2467 = vld [vmem:[%s7 + $0x10] sm:$0xff]
    %v2468 = vld [vmem:[%s7 + $0x18] sm:$0xff]
    %v2469 = vld [vmem:[%s7 + $0x20] sm:$0xff]
    %v2470 = vld [vmem:[%s7 + $0x28] sm:$0xff]
    %v2471 = vld [vmem:[%s7 + $0x30] sm:$0xff]
    %v2472 = vld [vmem:[%s7 + $0x38] sm:$0xff]
    %v2473 = vld [vmem:[%s7 + $0x40] sm:$0xff]
    %v2474 = vld [vmem:[%s7 + $0x48] sm:$0xff]
    %v2475 = vld [vmem:[%s7 + $0x50] sm:$0xff]
    %v2476 = vld [vmem:[%s7 + $0x58] sm:$0xff]
    %v2477 = vld [vmem:[%s7 + $0x60] sm:$0xff]
    %v2478 = vld [vmem:[%s7 + $0x68] sm:$0xff]
    %v2479 = vld [vmem:[%s7 + $0x70] sm:$0xff]
    %v2480 = vld [vmem:[%s7 + $0x78] sm:$0xff]
    %v2481 = vld [vmem:[%s8] sm:$0x1]
    %v2483 = vlaneseq
    %v2484 = vshrl.u32 %v2483, 7
    %v2485 = vsub.s32 0, %v2484
    %v2486 = vrot.slane %v2481, %v2485
    %2488 = vmatprep.subr.mxu0 0.0
    %2489 = vmatpush1.msra.mxu0 %v2480
    %2490 = vmatprep.subr.mxu0 0.0
    %2491 = vmatpush1.msra.mxu0 %v2479
    %2492 = vmatprep.subr.mxu0 0.0
    %2493 = vmatpush1.msra.mxu0 %v2478
    %2494 = vmatprep.subr.mxu0 0.0
    %2495 = vmatpush1.msra.mxu0 %v2477
    %2496 = vmatprep.subr.mxu0 0.0
    %2497 = vmatpush1.msra.mxu0 %v2476
    %2498 = vmatprep.subr.mxu0 0.0
    %2499 = vmatpush1.msra.mxu0 %v2475
    %2500 = vmatprep.subr.mxu0 0.0
    %2501 = vmatpush1.msra.mxu0 %v2474
    %2502 = vmatprep.subr.mxu0 0.0
    %2503 = vmatpush1.msra.mxu0 %v2473
    %2504 = vmatprep.subr.mxu0 0.0
    %2505 = vmatpush1.msra.mxu0 %v2472
    %2506 = vmatprep.subr.mxu0 0.0
    %2507 = vmatpush1.msra.mxu0 %v2471
    %2508 = vmatprep.subr.mxu0 0.0
    %2509 = vmatpush1.msra.mxu0 %v2470
    %2510 = vmatprep.subr.mxu0 0.0
    %2511 = vmatpush1.msra.mxu0 %v2469
    %2512 = vmatprep.subr.mxu0 0.0
    %2513 = vmatpush1.msra.mxu0 %v2468
    %2514 = vmatprep.subr.mxu0 0.0
    %2515 = vmatpush1.msra.mxu0 %v2467
    %2516 = vmatprep.subr.mxu0 0.0
    %2517 = vmatpush1.msra.mxu0 %v2466
    %2518 = vmatprep.subr.mxu0 0.0
    %2519 = vmatpush1.msra.mxu0 %v2465
    %2520 = vmatprep.subr.mxu0 0.0
    %2521 = vmatpush2.msra.mxu0 0.0
    %2522 = vmatprep.subr.mxu0 0.0
    %2523 = vmatpush2.msra.mxu0 0.0
    %2524 = vmatprep.subr.mxu0 0.0
    %2525 = vmatpush2.msra.mxu0 0.0
    %2526 = vmatprep.subr.mxu0 0.0
    %2527 = vmatpush2.msra.mxu0 0.0
    %2528 = vmatprep.subr.mxu0 0.0
    %2529 = vmatpush2.msra.mxu0 0.0
    %2530 = vmatprep.subr.mxu0 0.0
    %2531 = vmatpush2.msra.mxu0 0.0
    %2532 = vmatprep.subr.mxu0 0.0
    %2533 = vmatpush2.msra.mxu0 0.0
    %2534 = vmatprep.subr.mxu0 0.0
    %2535 = vmatpush2.msra.mxu0 0.0
    %2536 = vmatprep.subr.mxu0 0.0
    %2537 = vmatpush2.msra.mxu0 0.0
    %2538 = vmatprep.subr.mxu0 0.0
    %2539 = vmatpush2.msra.mxu0 0.0
    %2540 = vmatprep.subr.mxu0 0.0
    %2541 = vmatpush2.msra.mxu0 0.0
    %2542 = vmatprep.subr.mxu0 0.0
    %2543 = vmatpush2.msra.mxu0 0.0
    %2544 = vmatprep.subr.mxu0 0.0
    %2545 = vmatpush2.msra.mxu0 0.0
    %2546 = vmatprep.subr.mxu0 0.0
    %2547 = vmatpush2.msra.mxu0 0.0
    %2548 = vmatprep.subr.mxu0 0.0
    %2549 = vmatpush2.msra.mxu0 0.0
    %2550 = vmatprep.subr.mxu0 0.0
    %2551 = vmatpush2.msra.mxu0 0.0
    %2552 = vmatprep.mubr.f32.mxu0 0.0
    %2553 = vmatmul.mubr.f32.gmra.mxu0 %v2459
    %v2554 = vpop.f32.mrf.mxu0
    %v2555 = vadd.f32 %v2486, %v2554
    %v2556 = vpop.f32.mrf.mxu0
    %2557 = vdwg.mxu0
    %2558 = vst [vmem:[%s9] sm:$0xff] %v2555
  $region45: #{lstm_forward.1} parent=0 // pred_fallthru
    _
  // Predicated region
  $region46: #{lstm_forward.1} parent=0 // pred_check
    _
  $region47: #{lstm_forward.1} parent=0 // pred_check_branch
    %2560 = sbr.rel (0) target = $region49
  $region48: #{lstm_forward.1} parent=0 // pred_region
    _
  $region49: #{lstm_forward.1} parent=0 // pred_fallthru
    _
  // Predicated region
  $region50: #{lstm_forward.1} parent=0 // pred_check
    _
  $region51: #{lstm_forward.1} parent=0 // pred_check_branch
    %2562 = sbr.rel (0) target = $region53
  $region52: #{lstm_forward.1} parent=0 // pred_region
    _
  $region53: #{lstm_forward.1} parent=0 // pred_fallthru
    _

</llo_original>
